<compile_context>
chip_gen: v5e
topology: v5e:2x2
jax: 0.10.0
libtpu: 0.0.40
codegen_flags: <defaults>
</compile_context>

<pallas_src>
import functools

import jax
import jax.numpy as jnp
from jax.experimental import pallas as pl
from jax.experimental.pallas import tpu as pltpu

SOS_TOKEN = 1  # StartSentence_token


# ---------------------------------------------------------------------------
# Host-side weight packing / padding helpers
# ---------------------------------------------------------------------------
def _round_up(x, m):
    return ((x + m - 1) // m) * m


def _pad2(a, rows, cols):
    """Zero-pad a 2D array to (rows, cols)."""
    out = jnp.zeros((rows, cols), a.dtype)
    return out.at[: a.shape[0], : a.shape[1]].set(a)


def _pack_gru(wih_t, whh_t, bih, bhh, h, hp):
    """Pack PyTorch-layout GRU weights into one (2*hp, 4*hp) matrix + (1, 4*hp) bias.

    wih_t / whh_t are pre-transposed (in_features, 3H), gate order [r | z | n].
    With  g = concat([x, h_prev]) @ W + b  the kernel recovers exactly:
        r = sigmoid(g[:, 0:hp]); z = sigmoid(g[:, hp:2hp])
        n = tanh(g[:, 2hp:3hp] + r * g[:, 3hp:4hp])
    i.e. column blocks are [ (gi_r+gh_r) | (gi_z+gh_z) | gi_n | gh_n ].
    """
    def gate_blocks(w):
        return [_pad2(w[:, i * h:(i + 1) * h], hp, hp) for i in range(3)]

    ir, iz, inn = gate_blocks(wih_t)
    hr, hz, hn = gate_blocks(whh_t)
    zero = jnp.zeros((hp, hp), jnp.float32)
    w_top = jnp.concatenate([ir, iz, inn, zero], axis=1)   # rows multiplying x
    w_bot = jnp.concatenate([hr, hz, zero, hn], axis=1)    # rows multiplying h
    w = jnp.concatenate([w_top, w_bot], axis=0)            # (2*hp, 4*hp)

    def b_block(b, i):
        return _pad2(b[:, i * h:(i + 1) * h], 1, hp)

    b = jnp.concatenate([
        b_block(bih, 0) + b_block(bhh, 0),
        b_block(bih, 1) + b_block(bhh, 1),
        b_block(bih, 2),
        b_block(bhh, 2)], axis=1)                          # (1, 4*hp)
    return w, b


# ---------------------------------------------------------------------------
# Shared GRU cell (bf16 MXU operands, f32 activations / accumulation)
# ---------------------------------------------------------------------------
def _gru_cell(x, h, w, b, hp):
    xh = jnp.concatenate([x, h], axis=1).astype(w.dtype)            # (1, 2Hp) bf16
    g = jnp.dot(xh, w, preferred_element_type=jnp.float32) + b      # f32 accum + f32 bias
    r = jax.nn.sigmoid(g[:, :hp])
    z = jax.nn.sigmoid(g[:, hp:2 * hp])
    n = jnp.tanh(g[:, 2 * hp:3 * hp] + r * g[:, 3 * hp:])
    return (1.0 - z) * n + z * h


# ---------------------------------------------------------------------------
# Pallas kernels
# ---------------------------------------------------------------------------
def encoder_kernel(emb_ref, wf_ref, bf_ref, wb_ref, bb_ref,
                   out_ref, h0_ref, outb_scr, *, seq_len):
    """Bidirectional 1-layer GRU encoder, whole sequence in one kernel.

    emb_ref : (S, Hp) f32 embedded tokens (resident in VMEM)
    wf/wb   : (2Hp, 4Hp) bf16 packed GRU weights; bf/bb: (1, 4Hp) f32 biases
    out_ref : (S, Hp) f32   sum of forward + backward outputs
    h0_ref  : (1, Hp) f32   forward final hidden (decoder init hidden)
    outb_scr: (S, Hp) f32   backward outputs staging
    """
    hp = h0_ref.shape[1]
    wf = wf_ref[...]; bf = bf_ref[...]
    wb = wb_ref[...]; bb = bb_ref[...]

    hf = jnp.zeros((1, hp), jnp.float32)
    hb = jnp.zeros((1, hp), jnp.float32)

    # Fully unrolled time loop (S is small & static) -> LLO sees the whole chain.
    for t in range(seq_len):
        xf = emb_ref[pl.ds(t, 1), :]
        xb = emb_ref[pl.ds(seq_len - 1 - t, 1), :]
        hf = _gru_cell(xf, hf, wf, bf, hp)
        hb = _gru_cell(xb, hb, wb, bb, hp)
        out_ref[pl.ds(t, 1), :] = hf
        outb_scr[pl.ds(seq_len - 1 - t, 1), :] = hb

    out_ref[...] = out_ref[...] + outb_scr[...]   # tutorial sums the two directions
    h0_ref[...] = hf                              # encoderHidden[:nLayers] == fwd final


def greedy_decode_kernel(enc_ref, h0_ref, emb_ref, wg_ref, bg_ref, wc_ref, wo_ref,
                         vmask_ref, tok_ref, score_ref, tok_scr, score_scr,
                         *, max_length):
    """Entire greedy decode loop; all weights + enc_out stay resident in VMEM.

    enc_ref : (S, Hp) f32        h0_ref : (1, Hp) f32
    emb_ref : (Vp, Hp) bf16      wg/bg  : (2Hp, 4Hp) bf16 / (1, 4Hp) f32
    wc_ref  : (2Hp, Hp) bf16     wo_ref : (Hp, Vp) bf16
    vmask   : (1, Vp) f32 additive pad mask (0 real / -1e30 padded)
    tok_ref : (L,) int32 SMEM    score_ref : (L,) f32 SMEM
    tok_scr / score_scr : (1,1) VMEM staging for the scalar extraction
    """
    hp = h0_ref.shape[1]
    vp = wo_ref.shape[1]

    enc = enc_ref[...]                 # (S, Hp) f32, resident
    wg = wg_ref[...]; bg = bg_ref[...]
    wc = wc_ref[...]; wo = wo_ref[...]
    vmask = vmask_ref[...]             # hoisted out of the loop
    iota_v = jax.lax.broadcasted_iota(jnp.float32, (1, vp), 1)

    h = h0_ref[...]                                              # (1, Hp) f32
    x = emb_ref[pl.ds(SOS_TOKEN, 1), :].astype(jnp.float32)      # embedded SOS

    # Fully unrolled greedy loop (max_length is small & static).
    for t in range(max_length):
        # --- GRU cell: single packed bf16 dot, f32 accumulate ---
        rnn_out = _gru_cell(x, h, wg, bg, hp)

        # --- Luong dot attention (contract last dims; no materialized transpose) ---
        att = jax.lax.dot_general(rnn_out, enc, (((1,), (1,)), ((), ())),
                                  preferred_element_type=jnp.float32)    # (1, S)
        att = att - jnp.max(att, axis=1, keepdims=True)
        e = jnp.exp(att)
        attw = e * pl.reciprocal(jnp.sum(e, axis=1, keepdims=True), approx=True)
        context = jnp.dot(attw, enc, preferred_element_type=jnp.float32)  # (1, Hp)

        # --- concat projection (packed) + output logits (+ hoisted pad mask) ---
        cc = jnp.concatenate([rnn_out, context], axis=1).astype(wc.dtype)  # (1, 2Hp)
        concat_out = jnp.tanh(jnp.dot(cc, wc, preferred_element_type=jnp.float32))
        logits = jnp.dot(concat_out.astype(wo.dtype), wo,
                         preferred_element_type=jnp.float32) + vmask       # (1, Vp)

        # --- argmax + max softmax prob directly on logits (no full softmax) ---
        m = jnp.max(logits, axis=1, keepdims=True)                         # (1, 1)
        tok_f = jnp.min(jnp.where(logits == m, iota_v, jnp.float32(vp)),
                        axis=1, keepdims=True)                             # (1, 1)
        sum_e = jnp.sum(jnp.exp(logits - m), axis=1, keepdims=True)
        score = pl.reciprocal(sum_e, approx=True)                          # (1, 1)

        # --- stage argmax/score in VMEM, read back as scalars ---
        tok_scr[...] = tok_f.astype(jnp.int32)
        score_scr[...] = score
        tok = tok_scr[0, 0]                                                # int32 scalar
        tok_ref[t] = tok                                                   # SMEM store
        score_ref[t] = score_scr[0, 0]

        # --- feed back: dynamic row gather (one row, not the whole table) ---
        x = emb_ref[pl.ds(tok, 1), :].astype(jnp.float32)
        h = rnn_out


# ---------------------------------------------------------------------------
# Pallas wrappers
# ---------------------------------------------------------------------------
_VMEM_LIMIT = 48 * 1024 * 1024  # explicit: > v5e 16 MiB default, < v7x 64 MiB physical


def encoder_forward(input_seq, kp):
    """input_seq: (S,) int32. Returns enc_out (S, Hp) f32 and decoder h0 (1, Hp) f32."""
    # TODO(synk): pack_padded_sequence(inputLength) is a no-op for batch=1 full-length input.
    S = int(input_seq.shape[0])
    hp = kp["hp"]
    emb = jnp.take(kp["enc_emb"], input_seq, axis=0)          # (S, Hp) f32 host-side gather

    vmem = pl.BlockSpec(memory_space=pltpu.MemorySpace.VMEM)
    kernel = functools.partial(encoder_kernel, seq_len=S)
    enc_out, dec_h0 = pl.pallas_call(
        kernel,
        out_shape=(jax.ShapeDtypeStruct((S, hp), jnp.float32),
                   jax.ShapeDtypeStruct((1, hp), jnp.float32)),
        in_specs=[vmem] * 5,
        out_specs=(vmem, vmem),
        scratch_shapes=[pltpu.VMEM((S, hp), jnp.float32)],
        compiler_params=pltpu.CompilerParams(vmem_limit_bytes=_VMEM_LIMIT),
    )(emb, kp["enc_f_w"], kp["enc_f_b"], kp["enc_b_w"], kp["enc_b_b"])
    return enc_out, dec_h0


def greedy_decode(enc_out, dec_h0, kp, max_length):
    vmem = pl.BlockSpec(memory_space=pltpu.MemorySpace.VMEM)
    smem = pl.BlockSpec(memory_space=pltpu.MemorySpace.SMEM)
    kernel = functools.partial(greedy_decode_kernel, max_length=max_length)
    toks, scores = pl.pallas_call(
        kernel,
        out_shape=(jax.ShapeDtypeStruct((max_length,), jnp.int32),
                   jax.ShapeDtypeStruct((max_length,), jnp.float32)),
        in_specs=[vmem] * 8,
        out_specs=(smem, smem),
        scratch_shapes=[pltpu.VMEM((1, 1), jnp.int32),     # argmax token staging
                        pltpu.VMEM((1, 1), jnp.float32)],  # score staging
        compiler_params=pltpu.CompilerParams(vmem_limit_bytes=_VMEM_LIMIT),
    )(enc_out, dec_h0, kp["dec_emb"], kp["dec_w"], kp["dec_b"],
      kp["dec_wc"], kp["dec_wo"], kp["dec_vmask"])
    return toks, scores


def greedy_search_decode(input_seq, input_length, max_length, kernel_params):
    """Mirrors GreedySearchDecoder.forward -> (allTokens (L,), allScores (L,))."""
    del input_length  # only needed for packing, which is a no-op here (batch=1)
    enc_out, dec_h0 = encoder_forward(input_seq, kernel_params)
    return greedy_decode(enc_out, dec_h0, kernel_params, max_length)


# ---------------------------------------------------------------------------
# Model params: encoder (bi-GRU, nLayers=1) + Luong-attn decoder
# ---------------------------------------------------------------------------
def init_params(key, vocab, hidden):
    ks = jax.random.split(key, 16)
    s = 0.1

    def lin(k, shape):
        return (s * jax.random.normal(k, shape)).astype(jnp.float32)

    return dict(
        enc_emb=lin(ks[0], (vocab, hidden)),
        enc_f_wih=lin(ks[1], (hidden, 3 * hidden)),
        enc_f_whh=lin(ks[2], (hidden, 3 * hidden)),
        enc_f_bih=lin(ks[3], (1, 3 * hidden)),
        enc_f_bhh=lin(ks[4], (1, 3 * hidden)),
        enc_b_wih=lin(ks[5], (hidden, 3 * hidden)),
        enc_b_whh=lin(ks[6], (hidden, 3 * hidden)),
        enc_b_bih=lin(ks[7], (1, 3 * hidden)),
        enc_b_bhh=lin(ks[8], (1, 3 * hidden)),
        dec_emb=lin(ks[9], (vocab, hidden)),
        dec_wih=lin(ks[10], (hidden, 3 * hidden)),
        dec_whh=lin(ks[11], (hidden, 3 * hidden)),
        dec_bih=lin(ks[12], (1, 3 * hidden)),
        dec_bhh=lin(ks[13], (1, 3 * hidden)),
        dec_wc1=lin(ks[14], (hidden, hidden)),   # concat Linear: rnn_output half (transposed)
        dec_wc2=lin(ks[15], (hidden, hidden)),   # concat Linear: context half (transposed)
        dec_wo=lin(jax.random.fold_in(key, 99), (hidden, vocab)),
    )


def prepare_kernel_params(params, hidden, vocab):
    """Pad to lane-dense multiples of 128, pack GRU/concat weights, cast MXU weights to bf16."""
    hp = _round_up(hidden, 128)
    vp = _round_up(vocab, 128)
    bf16 = jnp.bfloat16

    enc_f_w, enc_f_b = _pack_gru(params["enc_f_wih"], params["enc_f_whh"],
                                 params["enc_f_bih"], params["enc_f_bhh"], hidden, hp)
    enc_b_w, enc_b_b = _pack_gru(params["enc_b_wih"], params["enc_b_whh"],
                                 params["enc_b_bih"], params["enc_b_bhh"], hidden, hp)
    dec_w, dec_b = _pack_gru(params["dec_wih"], params["dec_whh"],
                             params["dec_bih"], params["dec_bhh"], hidden, hp)
    dec_wc = jnp.concatenate([_pad2(params["dec_wc1"], hp, hp),
                              _pad2(params["dec_wc2"], hp, hp)], axis=0)   # (2Hp, Hp)
    vmask = jnp.where(jnp.arange(vp) < vocab, 0.0, -1e30).astype(jnp.float32)[None, :]
    return dict(
        h=hidden, v=vocab, hp=hp, vp=vp,
        enc_emb=_pad2(params["enc_emb"], vocab, hp),        # f32 (host-side gather)
        enc_f_w=enc_f_w.astype(bf16), enc_f_b=enc_f_b,      # biases stay f32
        enc_b_w=enc_b_w.astype(bf16), enc_b_b=enc_b_b,
        dec_emb=_pad2(params["dec_emb"], vp, hp).astype(bf16),   # (Vp, Hp) in-kernel gather
        dec_w=dec_w.astype(bf16), dec_b=dec_b,
        dec_wc=dec_wc.astype(bf16),
        dec_wo=_pad2(params["dec_wo"], hp, vp).astype(bf16),     # (Hp, Vp)
        dec_vmask=vmask,
    )


# ---------------------------------------------------------------------------
if __name__ == "__main__":
    VOCAB = 32
    HIDDEN = 32
    SEQ = 8
    MAX_LENGTH = 6

    key = jax.random.PRNGKey(0)
    pkey, skey = jax.random.split(key)
    params = init_params(pkey, VOCAB, HIDDEN)
    kp = prepare_kernel_params(params, HIDDEN, VOCAB)

    # inputSequence is (S, 1) int tokens in the tutorial; batch=1 is kept squeezed.
    input_seq = jax.random.randint(skey, (SEQ,), 3, VOCAB, dtype=jnp.int32)
    input_length = jnp.array([SEQ], dtype=jnp.int32)

    tokens, scores = greedy_search_decode(input_seq, input_length, MAX_LENGTH, kp)
    tokens = jax.block_until_ready(tokens)
    scores = jax.block_until_ready(scores)

    assert tokens.shape == (MAX_LENGTH,) and tokens.dtype == jnp.int32
    assert scores.shape == (MAX_LENGTH,) and scores.dtype == jnp.float32
    assert int(tokens.min()) >= 0 and int(tokens.max()) < VOCAB
    assert bool(jnp.all(scores > 0.0)) and bool(jnp.all(scores <= 1.0 + 1e-3))
    print("KERNEL_OK")
</pallas_src>

<mosaic_0001>
module attributes {stable_mosaic.version = 11 : i64} {
  func.func @encoder_kernel(%arg0: memref<8x128xf32, #tpu.memory_space<vmem>>, %arg1: memref<256x512xbf16, #tpu.memory_space<vmem>>, %arg2: memref<1x512xf32, #tpu.memory_space<vmem>>, %arg3: memref<256x512xbf16, #tpu.memory_space<vmem>>, %arg4: memref<1x512xf32, #tpu.memory_space<vmem>>, %arg5: memref<8x128xf32, #tpu.memory_space<vmem>>, %arg6: memref<1x128xf32, #tpu.memory_space<vmem>>, %arg7: memref<8x128xf32, #tpu.memory_space<vmem>>) attributes {dimension_semantics = [], scalar_prefetch = 0 : i64, scratch_operands = 1 : i64, tpu.core_type = #tpu.core_type<tc>} {
    %c0 = arith.constant 0 : index
    %c0_0 = arith.constant 0 : index
    %0 = vector.load %arg1[%c0, %c0_0] : memref<256x512xbf16, #tpu.memory_space<vmem>>, vector<256x512xbf16>
    %c0_1 = arith.constant 0 : index
    %c0_2 = arith.constant 0 : index
    %1 = vector.load %arg2[%c0_1, %c0_2] : memref<1x512xf32, #tpu.memory_space<vmem>>, vector<1x512xf32>
    %c0_3 = arith.constant 0 : index
    %c0_4 = arith.constant 0 : index
    %2 = vector.load %arg3[%c0_3, %c0_4] : memref<256x512xbf16, #tpu.memory_space<vmem>>, vector<256x512xbf16>
    %c0_5 = arith.constant 0 : index
    %c0_6 = arith.constant 0 : index
    %3 = vector.load %arg4[%c0_5, %c0_6] : memref<1x512xf32, #tpu.memory_space<vmem>>, vector<1x512xf32>
    %cst = arith.constant 0.000000e+00 : f32
    %4 = vector.broadcast %cst : f32 to vector<1x128xf32>
    %cst_7 = arith.constant 0.000000e+00 : f32
    %5 = vector.broadcast %cst_7 : f32 to vector<1x128xf32>
    %c0_8 = arith.constant 0 : index
    %c0_9 = arith.constant 0 : index
    %6 = vector.load %arg0[%c0_8, %c0_9] : memref<8x128xf32, #tpu.memory_space<vmem>>, vector<1x128xf32>
    %c7 = arith.constant 7 : index
    %c0_10 = arith.constant 0 : index
    %7 = vector.load %arg0[%c7, %c0_10] : memref<8x128xf32, #tpu.memory_space<vmem>>, vector<1x128xf32>
    %8 = tpu.concatenate %6, %4 in 1 : vector<1x128xf32>, vector<1x128xf32> -> vector<1x256xf32>
    %9 = arith.truncf %8 : vector<1x256xf32> to vector<1x256xbf16>
    %cst_11 = arith.constant dense<0.000000e+00> : vector<1x512xf32>
    %10 = tpu.matmul %9, %0, %cst_11 {dimension_numbers = #tpu.dot_dimension_numbers<[1], [0], [0], [1], [0, 0, 1, 1], [], []>} : vector<1x256xbf16>, vector<256x512xbf16>, vector<1x512xf32> -> vector<1x512xf32>
    %11 = arith.addf %10, %1 : vector<1x512xf32>
    %12 = vector.extract_strided_slice %11 {offsets = [0, 0], sizes = [1, 128], strides = [1, 1]} : vector<1x512xf32> to vector<1x128xf32>
    %13 = arith.negf %12 : vector<1x128xf32>
    %14 = math.exp %13 : vector<1x128xf32>
    %cst_12 = arith.constant 1.000000e+00 : f32
    %15 = vector.broadcast %cst_12 : f32 to vector<1x128xf32>
    %16 = arith.addf %15, %14 : vector<1x128xf32>
    %17 = arith.divf %15, %16 : vector<1x128xf32>
    %18 = vector.extract_strided_slice %11 {offsets = [0, 128], sizes = [1, 128], strides = [1, 1]} : vector<1x512xf32> to vector<1x128xf32>
    %19 = arith.negf %18 : vector<1x128xf32>
    %20 = math.exp %19 : vector<1x128xf32>
    %cst_13 = arith.constant 1.000000e+00 : f32
    %21 = vector.broadcast %cst_13 : f32 to vector<1x128xf32>
    %22 = arith.addf %21, %20 : vector<1x128xf32>
    %23 = arith.divf %21, %22 : vector<1x128xf32>
    %24 = vector.extract_strided_slice %11 {offsets = [0, 256], sizes = [1, 128], strides = [1, 1]} : vector<1x512xf32> to vector<1x128xf32>
    %25 = vector.extract_strided_slice %11 {offsets = [0, 384], sizes = [1, 128], strides = [1, 1]} : vector<1x512xf32> to vector<1x128xf32>
    %26 = arith.mulf %17, %25 : vector<1x128xf32>
    %27 = arith.addf %24, %26 : vector<1x128xf32>
    %28 = math.tanh %27 : vector<1x128xf32>
    %cst_14 = arith.constant 1.000000e+00 : f32
    %29 = vector.broadcast %cst_14 : f32 to vector<1x128xf32>
    %30 = arith.subf %29, %23 : vector<1x128xf32>
    %31 = arith.mulf %30, %28 : vector<1x128xf32>
    %32 = arith.mulf %23, %4 : vector<1x128xf32>
    %33 = arith.addf %31, %32 : vector<1x128xf32>
    %34 = tpu.concatenate %7, %5 in 1 : vector<1x128xf32>, vector<1x128xf32> -> vector<1x256xf32>
    %35 = arith.truncf %34 : vector<1x256xf32> to vector<1x256xbf16>
    %cst_15 = arith.constant dense<0.000000e+00> : vector<1x512xf32>
    %36 = tpu.matmul %35, %2, %cst_15 {dimension_numbers = #tpu.dot_dimension_numbers<[1], [0], [0], [1], [0, 0, 1, 1], [], []>} : vector<1x256xbf16>, vector<256x512xbf16>, vector<1x512xf32> -> vector<1x512xf32>
    %37 = arith.addf %36, %3 : vector<1x512xf32>
    %38 = vector.extract_strided_slice %37 {offsets = [0, 0], sizes = [1, 128], strides = [1, 1]} : vector<1x512xf32> to vector<1x128xf32>
    %39 = arith.negf %38 : vector<1x128xf32>
    %40 = math.exp %39 : vector<1x128xf32>
    %cst_16 = arith.constant 1.000000e+00 : f32
    %41 = vector.broadcast %cst_16 : f32 to vector<1x128xf32>
    %42 = arith.addf %41, %40 : vector<1x128xf32>
    %43 = arith.divf %41, %42 : vector<1x128xf32>
    %44 = vector.extract_strided_slice %37 {offsets = [0, 128], sizes = [1, 128], strides = [1, 1]} : vector<1x512xf32> to vector<1x128xf32>
    %45 = arith.negf %44 : vector<1x128xf32>
    %46 = math.exp %45 : vector<1x128xf32>
    %cst_17 = arith.constant 1.000000e+00 : f32
    %47 = vector.broadcast %cst_17 : f32 to vector<1x128xf32>
    %48 = arith.addf %47, %46 : vector<1x128xf32>
    %49 = arith.divf %47, %48 : vector<1x128xf32>
    %50 = vector.extract_strided_slice %37 {offsets = [0, 256], sizes = [1, 128], strides = [1, 1]} : vector<1x512xf32> to vector<1x128xf32>
    %51 = vector.extract_strided_slice %37 {offsets = [0, 384], sizes = [1, 128], strides = [1, 1]} : vector<1x512xf32> to vector<1x128xf32>
    %52 = arith.mulf %43, %51 : vector<1x128xf32>
    %53 = arith.addf %50, %52 : vector<1x128xf32>
    %54 = math.tanh %53 : vector<1x128xf32>
    %cst_18 = arith.constant 1.000000e+00 : f32
    %55 = vector.broadcast %cst_18 : f32 to vector<1x128xf32>
    %56 = arith.subf %55, %49 : vector<1x128xf32>
    %57 = arith.mulf %56, %54 : vector<1x128xf32>
    %58 = arith.mulf %49, %5 : vector<1x128xf32>
    %59 = arith.addf %57, %58 : vector<1x128xf32>
    %c0_19 = arith.constant 0 : index
    %c0_20 = arith.constant 0 : index
    %60 = vector.load %arg5[%c0_19, %c0_20] : memref<8x128xf32, #tpu.memory_space<vmem>>, vector<1x128xf32>
    tpu.vector_store %arg5[%c0_19, %c0_20], %33 {strides = array<i32>} : memref<8x128xf32, #tpu.memory_space<vmem>>, vector<1x128xf32>,
    %c7_21 = arith.constant 7 : index
    %c0_22 = arith.constant 0 : index
    %61 = vector.load %arg7[%c7_21, %c0_22] : memref<8x128xf32, #tpu.memory_space<vmem>>, vector<1x128xf32>
    tpu.vector_store %arg7[%c7_21, %c0_22], %59 {strides = array<i32>} : memref<8x128xf32, #tpu.memory_space<vmem>>, vector<1x128xf32>,
    %c1 = arith.constant 1 : index
    %c0_23 = arith.constant 0 : index
    %62 = vector.load %arg0[%c1, %c0_23] : memref<8x128xf32, #tpu.memory_space<vmem>>, vector<1x128xf32>
    %c6 = arith.constant 6 : index
    %c0_24 = arith.constant 0 : index
    %63 = vector.load %arg0[%c6, %c0_24] : memref<8x128xf32, #tpu.memory_space<vmem>>, vector<1x128xf32>
    %64 = tpu.concatenate %62, %33 in 1 : vector<1x128xf32>, vector<1x128xf32> -> vector<1x256xf32>
    %65 = arith.truncf %64 : vector<1x256xf32> to vector<1x256xbf16>
    %cst_25 = arith.constant dense<0.000000e+00> : vector<1x512xf32>
    %66 = tpu.matmul %65, %0, %cst_25 {dimension_numbers = #tpu.dot_dimension_numbers<[1], [0], [0], [1], [0, 0, 1, 1], [], []>} : vector<1x256xbf16>, vector<256x512xbf16>, vector<1x512xf32> -> vector<1x512xf32>
    %67 = arith.addf %66, %1 : vector<1x512xf32>
    %68 = vector.extract_strided_slice %67 {offsets = [0, 0], sizes = [1, 128], strides = [1, 1]} : vector<1x512xf32> to vector<1x128xf32>
    %69 = arith.negf %68 : vector<1x128xf32>
    %70 = math.exp %69 : vector<1x128xf32>
    %cst_26 = arith.constant 1.000000e+00 : f32
    %71 = vector.broadcast %cst_26 : f32 to vector<1x128xf32>
    %72 = arith.addf %71, %70 : vector<1x128xf32>
    %73 = arith.divf %71, %72 : vector<1x128xf32>
    %74 = vector.extract_strided_slice %67 {offsets = [0, 128], sizes = [1, 128], strides = [1, 1]} : vector<1x512xf32> to vector<1x128xf32>
    %75 = arith.negf %74 : vector<1x128xf32>
    %76 = math.exp %75 : vector<1x128xf32>
    %cst_27 = arith.constant 1.000000e+00 : f32
    %77 = vector.broadcast %cst_27 : f32 to vector<1x128xf32>
    %78 = arith.addf %77, %76 : vector<1x128xf32>
    %79 = arith.divf %77, %78 : vector<1x128xf32>
    %80 = vector.extract_strided_slice %67 {offsets = [0, 256], sizes = [1, 128], strides = [1, 1]} : vector<1x512xf32> to vector<1x128xf32>
    %81 = vector.extract_strided_slice %67 {offsets = [0, 384], sizes = [1, 128], strides = [1, 1]} : vector<1x512xf32> to vector<1x128xf32>
    %82 = arith.mulf %73, %81 : vector<1x128xf32>
    %83 = arith.addf %80, %82 : vector<1x128xf32>
    %84 = math.tanh %83 : vector<1x128xf32>
    %cst_28 = arith.constant 1.000000e+00 : f32
    %85 = vector.broadcast %cst_28 : f32 to vector<1x128xf32>
    %86 = arith.subf %85, %79 : vector<1x128xf32>
    %87 = arith.mulf %86, %84 : vector<1x128xf32>
    %88 = arith.mulf %79, %33 : vector<1x128xf32>
    %89 = arith.addf %87, %88 : vector<1x128xf32>
    %90 = tpu.concatenate %63, %59 in 1 : vector<1x128xf32>, vector<1x128xf32> -> vector<1x256xf32>
    %91 = arith.truncf %90 : vector<1x256xf32> to vector<1x256xbf16>
    %cst_29 = arith.constant dense<0.000000e+00> : vector<1x512xf32>
    %92 = tpu.matmul %91, %2, %cst_29 {dimension_numbers = #tpu.dot_dimension_numbers<[1], [0], [0], [1], [0, 0, 1, 1], [], []>} : vector<1x256xbf16>, vector<256x512xbf16>, vector<1x512xf32> -> vector<1x512xf32>
    %93 = arith.addf %92, %3 : vector<1x512xf32>
    %94 = vector.extract_strided_slice %93 {offsets = [0, 0], sizes = [1, 128], strides = [1, 1]} : vector<1x512xf32> to vector<1x128xf32>
    %95 = arith.negf %94 : vector<1x128xf32>
    %96 = math.exp %95 : vector<1x128xf32>
    %cst_30 = arith.constant 1.000000e+00 : f32
    %97 = vector.broadcast %cst_30 : f32 to vector<1x128xf32>
    %98 = arith.addf %97, %96 : vector<1x128xf32>
    %99 = arith.divf %97, %98 : vector<1x128xf32>
    %100 = vector.extract_strided_slice %93 {offsets = [0, 128], sizes = [1, 128], strides = [1, 1]} : vector<1x512xf32> to vector<1x128xf32>
    %101 = arith.negf %100 : vector<1x128xf32>
    %102 = math.exp %101 : vector<1x128xf32>
    %cst_31 = arith.constant 1.000000e+00 : f32
    %103 = vector.broadcast %cst_31 : f32 to vector<1x128xf32>
    %104 = arith.addf %103, %102 : vector<1x128xf32>
    %105 = arith.divf %103, %104 : vector<1x128xf32>
    %106 = vector.extract_strided_slice %93 {offsets = [0, 256], sizes = [1, 128], strides = [1, 1]} : vector<1x512xf32> to vector<1x128xf32>
    %107 = vector.extract_strided_slice %93 {offsets = [0, 384], sizes = [1, 128], strides = [1, 1]} : vector<1x512xf32> to vector<1x128xf32>
    %108 = arith.mulf %99, %107 : vector<1x128xf32>
    %109 = arith.addf %106, %108 : vector<1x128xf32>
    %110 = math.tanh %109 : vector<1x128xf32>
    %cst_32 = arith.constant 1.000000e+00 : f32
    %111 = vector.broadcast %cst_32 : f32 to vector<1x128xf32>
    %112 = arith.subf %111, %105 : vector<1x128xf32>
    %113 = arith.mulf %112, %110 : vector<1x128xf32>
    %114 = arith.mulf %105, %59 : vector<1x128xf32>
    %115 = arith.addf %113, %114 : vector<1x128xf32>
    %c1_33 = arith.constant 1 : index
    %c0_34 = arith.constant 0 : index
    %116 = vector.load %arg5[%c1_33, %c0_34] : memref<8x128xf32, #tpu.memory_space<vmem>>, vector<1x128xf32>
    tpu.vector_store %arg5[%c1_33, %c0_34], %89 {strides = array<i32>} : memref<8x128xf32, #tpu.memory_space<vmem>>, vector<1x128xf32>,
    %c6_35 = arith.constant 6 : index
    %c0_36 = arith.constant 0 : index
    %117 = vector.load %arg7[%c6_35, %c0_36] : memref<8x128xf32, #tpu.memory_space<vmem>>, vector<1x128xf32>
    tpu.vector_store %arg7[%c6_35, %c0_36], %115 {strides = array<i32>} : memref<8x128xf32, #tpu.memory_space<vmem>>, vector<1x128xf32>,
    %c2 = arith.constant 2 : index
    %c0_37 = arith.constant 0 : index
    %118 = vector.load %arg0[%c2, %c0_37] : memref<8x128xf32, #tpu.memory_space<vmem>>, vector<1x128xf32>
    %c5 = arith.constant 5 : index
    %c0_38 = arith.constant 0 : index
    %119 = vector.load %arg0[%c5, %c0_38] : memref<8x128xf32, #tpu.memory_space<vmem>>, vector<1x128xf32>
    %120 = tpu.concatenate %118, %89 in 1 : vector<1x128xf32>, vector<1x128xf32> -> vector<1x256xf32>
    %121 = arith.truncf %120 : vector<1x256xf32> to vector<1x256xbf16>
    %cst_39 = arith.constant dense<0.000000e+00> : vector<1x512xf32>
    %122 = tpu.matmul %121, %0, %cst_39 {dimension_numbers = #tpu.dot_dimension_numbers<[1], [0], [0], [1], [0, 0, 1, 1], [], []>} : vector<1x256xbf16>, vector<256x512xbf16>, vector<1x512xf32> -> vector<1x512xf32>
    %123 = arith.addf %122, %1 : vector<1x512xf32>
    %124 = vector.extract_strided_slice %123 {offsets = [0, 0], sizes = [1, 128], strides = [1, 1]} : vector<1x512xf32> to vector<1x128xf32>
    %125 = arith.negf %124 : vector<1x128xf32>
    %126 = math.exp %125 : vector<1x128xf32>
    %cst_40 = arith.constant 1.000000e+00 : f32
    %127 = vector.broadcast %cst_40 : f32 to vector<1x128xf32>
    %128 = arith.addf %127, %126 : vector<1x128xf32>
    %129 = arith.divf %127, %128 : vector<1x128xf32>
    %130 = vector.extract_strided_slice %123 {offsets = [0, 128], sizes = [1, 128], strides = [1, 1]} : vector<1x512xf32> to vector<1x128xf32>
    %131 = arith.negf %130 : vector<1x128xf32>
    %132 = math.exp %131 : vector<1x128xf32>
    %cst_41 = arith.constant 1.000000e+00 : f32
    %133 = vector.broadcast %cst_41 : f32 to vector<1x128xf32>
    %134 = arith.addf %133, %132 : vector<1x128xf32>
    %135 = arith.divf %133, %134 : vector<1x128xf32>
    %136 = vector.extract_strided_slice %123 {offsets = [0, 256], sizes = [1, 128], strides = [1, 1]} : vector<1x512xf32> to vector<1x128xf32>
    %137 = vector.extract_strided_slice %123 {offsets = [0, 384], sizes = [1, 128], strides = [1, 1]} : vector<1x512xf32> to vector<1x128xf32>
    %138 = arith.mulf %129, %137 : vector<1x128xf32>
    %139 = arith.addf %136, %138 : vector<1x128xf32>
    %140 = math.tanh %139 : vector<1x128xf32>
    %cst_42 = arith.constant 1.000000e+00 : f32
    %141 = vector.broadcast %cst_42 : f32 to vector<1x128xf32>
    %142 = arith.subf %141, %135 : vector<1x128xf32>
    %143 = arith.mulf %142, %140 : vector<1x128xf32>
    %144 = arith.mulf %135, %89 : vector<1x128xf32>
    %145 = arith.addf %143, %144 : vector<1x128xf32>
    %146 = tpu.concatenate %119, %115 in 1 : vector<1x128xf32>, vector<1x128xf32> -> vector<1x256xf32>
    %147 = arith.truncf %146 : vector<1x256xf32> to vector<1x256xbf16>
    %cst_43 = arith.constant dense<0.000000e+00> : vector<1x512xf32>
    %148 = tpu.matmul %147, %2, %cst_43 {dimension_numbers = #tpu.dot_dimension_numbers<[1], [0], [0], [1], [0, 0, 1, 1], [], []>} : vector<1x256xbf16>, vector<256x512xbf16>, vector<1x512xf32> -> vector<1x512xf32>
    %149 = arith.addf %148, %3 : vector<1x512xf32>
    %150 = vector.extract_strided_slice %149 {offsets = [0, 0], sizes = [1, 128], strides = [1, 1]} : vector<1x512xf32> to vector<1x128xf32>
    %151 = arith.negf %150 : vector<1x128xf32>
    %152 = math.exp %151 : vector<1x128xf32>
    %cst_44 = arith.constant 1.000000e+00 : f32
    %153 = vector.broadcast %cst_44 : f32 to vector<1x128xf32>
    %154 = arith.addf %153, %152 : vector<1x128xf32>
    %155 = arith.divf %153, %154 : vector<1x128xf32>
    %156 = vector.extract_strided_slice %149 {offsets = [0, 128], sizes = [1, 128], strides = [1, 1]} : vector<1x512xf32> to vector<1x128xf32>
    %157 = arith.negf %156 : vector<1x128xf32>
    %158 = math.exp %157 : vector<1x128xf32>
    %cst_45 = arith.constant 1.000000e+00 : f32
    %159 = vector.broadcast %cst_45 : f32 to vector<1x128xf32>
    %160 = arith.addf %159, %158 : vector<1x128xf32>
    %161 = arith.divf %159, %160 : vector<1x128xf32>
    %162 = vector.extract_strided_slice %149 {offsets = [0, 256], sizes = [1, 128], strides = [1, 1]} : vector<1x512xf32> to vector<1x128xf32>
    %163 = vector.extract_strided_slice %149 {offsets = [0, 384], sizes = [1, 128], strides = [1, 1]} : vector<1x512xf32> to vector<1x128xf32>
    %164 = arith.mulf %155, %163 : vector<1x128xf32>
    %165 = arith.addf %162, %164 : vector<1x128xf32>
    %166 = math.tanh %165 : vector<1x128xf32>
    %cst_46 = arith.constant 1.000000e+00 : f32
    %167 = vector.broadcast %cst_46 : f32 to vector<1x128xf32>
    %168 = arith.subf %167, %161 : vector<1x128xf32>
    %169 = arith.mulf %168, %166 : vector<1x128xf32>
    %170 = arith.mulf %161, %115 : vector<1x128xf32>
    %171 = arith.addf %169, %170 : vector<1x128xf32>
    %c2_47 = arith.constant 2 : index
    %c0_48 = arith.constant 0 : index
    %172 = vector.load %arg5[%c2_47, %c0_48] : memref<8x128xf32, #tpu.memory_space<vmem>>, vector<1x128xf32>
    tpu.vector_store %arg5[%c2_47, %c0_48], %145 {strides = array<i32>} : memref<8x128xf32, #tpu.memory_space<vmem>>, vector<1x128xf32>,
    %c5_49 = arith.constant 5 : index
    %c0_50 = arith.constant 0 : index
    %173 = vector.load %arg7[%c5_49, %c0_50] : memref<8x128xf32, #tpu.memory_space<vmem>>, vector<1x128xf32>
    tpu.vector_store %arg7[%c5_49, %c0_50], %171 {strides = array<i32>} : memref<8x128xf32, #tpu.memory_space<vmem>>, vector<1x128xf32>,
    %c3 = arith.constant 3 : index
    %c0_51 = arith.constant 0 : index
    %174 = vector.load %arg0[%c3, %c0_51] : memref<8x128xf32, #tpu.memory_space<vmem>>, vector<1x128xf32>
    %c4 = arith.constant 4 : index
    %c0_52 = arith.constant 0 : index
    %175 = vector.load %arg0[%c4, %c0_52] : memref<8x128xf32, #tpu.memory_space<vmem>>, vector<1x128xf32>
    %176 = tpu.concatenate %174, %145 in 1 : vector<1x128xf32>, vector<1x128xf32> -> vector<1x256xf32>
    %177 = arith.truncf %176 : vector<1x256xf32> to vector<1x256xbf16>
    %cst_53 = arith.constant dense<0.000000e+00> : vector<1x512xf32>
    %178 = tpu.matmul %177, %0, %cst_53 {dimension_numbers = #tpu.dot_dimension_numbers<[1], [0], [0], [1], [0, 0, 1, 1], [], []>} : vector<1x256xbf16>, vector<256x512xbf16>, vector<1x512xf32> -> vector<1x512xf32>
    %179 = arith.addf %178, %1 : vector<1x512xf32>
    %180 = vector.extract_strided_slice %179 {offsets = [0, 0], sizes = [1, 128], strides = [1, 1]} : vector<1x512xf32> to vector<1x128xf32>
    %181 = arith.negf %180 : vector<1x128xf32>
    %182 = math.exp %181 : vector<1x128xf32>
    %cst_54 = arith.constant 1.000000e+00 : f32
    %183 = vector.broadcast %cst_54 : f32 to vector<1x128xf32>
    %184 = arith.addf %183, %182 : vector<1x128xf32>
    %185 = arith.divf %183, %184 : vector<1x128xf32>
    %186 = vector.extract_strided_slice %179 {offsets = [0, 128], sizes = [1, 128], strides = [1, 1]} : vector<1x512xf32> to vector<1x128xf32>
    %187 = arith.negf %186 : vector<1x128xf32>
    %188 = math.exp %187 : vector<1x128xf32>
    %cst_55 = arith.constant 1.000000e+00 : f32
    %189 = vector.broadcast %cst_55 : f32 to vector<1x128xf32>
    %190 = arith.addf %189, %188 : vector<1x128xf32>
    %191 = arith.divf %189, %190 : vector<1x128xf32>
    %192 = vector.extract_strided_slice %179 {offsets = [0, 256], sizes = [1, 128], strides = [1, 1]} : vector<1x512xf32> to vector<1x128xf32>
    %193 = vector.extract_strided_slice %179 {offsets = [0, 384], sizes = [1, 128], strides = [1, 1]} : vector<1x512xf32> to vector<1x128xf32>
    %194 = arith.mulf %185, %193 : vector<1x128xf32>
    %195 = arith.addf %192, %194 : vector<1x128xf32>
    %196 = math.tanh %195 : vector<1x128xf32>
    %cst_56 = arith.constant 1.000000e+00 : f32
    %197 = vector.broadcast %cst_56 : f32 to vector<1x128xf32>
    %198 = arith.subf %197, %191 : vector<1x128xf32>
    %199 = arith.mulf %198, %196 : vector<1x128xf32>
    %200 = arith.mulf %191, %145 : vector<1x128xf32>
    %201 = arith.addf %199, %200 : vector<1x128xf32>
    %202 = tpu.concatenate %175, %171 in 1 : vector<1x128xf32>, vector<1x128xf32> -> vector<1x256xf32>
    %203 = arith.truncf %202 : vector<1x256xf32> to vector<1x256xbf16>
    %cst_57 = arith.constant dense<0.000000e+00> : vector<1x512xf32>
    %204 = tpu.matmul %203, %2, %cst_57 {dimension_numbers = #tpu.dot_dimension_numbers<[1], [0], [0], [1], [0, 0, 1, 1], [], []>} : vector<1x256xbf16>, vector<256x512xbf16>, vector<1x512xf32> -> vector<1x512xf32>
    %205 = arith.addf %204, %3 : vector<1x512xf32>
    %206 = vector.extract_strided_slice %205 {offsets = [0, 0], sizes = [1, 128], strides = [1, 1]} : vector<1x512xf32> to vector<1x128xf32>
    %207 = arith.negf %206 : vector<1x128xf32>
    %208 = math.exp %207 : vector<1x128xf32>
    %cst_58 = arith.constant 1.000000e+00 : f32
    %209 = vector.broadcast %cst_58 : f32 to vector<1x128xf32>
    %210 = arith.addf %209, %208 : vector<1x128xf32>
    %211 = arith.divf %209, %210 : vector<1x128xf32>
    %212 = vector.extract_strided_slice %205 {offsets = [0, 128], sizes = [1, 128], strides = [1, 1]} : vector<1x512xf32> to vector<1x128xf32>
    %213 = arith.negf %212 : vector<1x128xf32>
    %214 = math.exp %213 : vector<1x128xf32>
    %cst_59 = arith.constant 1.000000e+00 : f32
    %215 = vector.broadcast %cst_59 : f32 to vector<1x128xf32>
    %216 = arith.addf %215, %214 : vector<1x128xf32>
    %217 = arith.divf %215, %216 : vector<1x128xf32>
    %218 = vector.extract_strided_slice %205 {offsets = [0, 256], sizes = [1, 128], strides = [1, 1]} : vector<1x512xf32> to vector<1x128xf32>
    %219 = vector.extract_strided_slice %205 {offsets = [0, 384], sizes = [1, 128], strides = [1, 1]} : vector<1x512xf32> to vector<1x128xf32>
    %220 = arith.mulf %211, %219 : vector<1x128xf32>
    %221 = arith.addf %218, %220 : vector<1x128xf32>
    %222 = math.tanh %221 : vector<1x128xf32>
    %cst_60 = arith.constant 1.000000e+00 : f32
    %223 = vector.broadcast %cst_60 : f32 to vector<1x128xf32>
    %224 = arith.subf %223, %217 : vector<1x128xf32>
    %225 = arith.mulf %224, %222 : vector<1x128xf32>
    %226 = arith.mulf %217, %171 : vector<1x128xf32>
    %227 = arith.addf %225, %226 : vector<1x128xf32>
    %c3_61 = arith.constant 3 : index
    %c0_62 = arith.constant 0 : index
    %228 = vector.load %arg5[%c3_61, %c0_62] : memref<8x128xf32, #tpu.memory_space<vmem>>, vector<1x128xf32>
    tpu.vector_store %arg5[%c3_61, %c0_62], %201 {strides = array<i32>} : memref<8x128xf32, #tpu.memory_space<vmem>>, vector<1x128xf32>,
    %c4_63 = arith.constant 4 : index
    %c0_64 = arith.constant 0 : index
    %229 = vector.load %arg7[%c4_63, %c0_64] : memref<8x128xf32, #tpu.memory_space<vmem>>, vector<1x128xf32>
    tpu.vector_store %arg7[%c4_63, %c0_64], %227 {strides = array<i32>} : memref<8x128xf32, #tpu.memory_space<vmem>>, vector<1x128xf32>,
    %c4_65 = arith.constant 4 : index
    %c0_66 = arith.constant 0 : index
    %230 = vector.load %arg0[%c4_65, %c0_66] : memref<8x128xf32, #tpu.memory_space<vmem>>, vector<1x128xf32>
    %c3_67 = arith.constant 3 : index
    %c0_68 = arith.constant 0 : index
    %231 = vector.load %arg0[%c3_67, %c0_68] : memref<8x128xf32, #tpu.memory_space<vmem>>, vector<1x128xf32>
    %232 = tpu.concatenate %230, %201 in 1 : vector<1x128xf32>, vector<1x128xf32> -> vector<1x256xf32>
    %233 = arith.truncf %232 : vector<1x256xf32> to vector<1x256xbf16>
    %cst_69 = arith.constant dense<0.000000e+00> : vector<1x512xf32>
    %234 = tpu.matmul %233, %0, %cst_69 {dimension_numbers = #tpu.dot_dimension_numbers<[1], [0], [0], [1], [0, 0, 1, 1], [], []>} : vector<1x256xbf16>, vector<256x512xbf16>, vector<1x512xf32> -> vector<1x512xf32>
    %235 = arith.addf %234, %1 : vector<1x512xf32>
    %236 = vector.extract_strided_slice %235 {offsets = [0, 0], sizes = [1, 128], strides = [1, 1]} : vector<1x512xf32> to vector<1x128xf32>
    %237 = arith.negf %236 : vector<1x128xf32>
    %238 = math.exp %237 : vector<1x128xf32>
    %cst_70 = arith.constant 1.000000e+00 : f32
    %239 = vector.broadcast %cst_70 : f32 to vector<1x128xf32>
    %240 = arith.addf %239, %238 : vector<1x128xf32>
    %241 = arith.divf %239, %240 : vector<1x128xf32>
    %242 = vector.extract_strided_slice %235 {offsets = [0, 128], sizes = [1, 128], strides = [1, 1]} : vector<1x512xf32> to vector<1x128xf32>
    %243 = arith.negf %242 : vector<1x128xf32>
    %244 = math.exp %243 : vector<1x128xf32>
    %cst_71 = arith.constant 1.000000e+00 : f32
    %245 = vector.broadcast %cst_71 : f32 to vector<1x128xf32>
    %246 = arith.addf %245, %244 : vector<1x128xf32>
    %247 = arith.divf %245, %246 : vector<1x128xf32>
    %248 = vector.extract_strided_slice %235 {offsets = [0, 256], sizes = [1, 128], strides = [1, 1]} : vector<1x512xf32> to vector<1x128xf32>
    %249 = vector.extract_strided_slice %235 {offsets = [0, 384], sizes = [1, 128], strides = [1, 1]} : vector<1x512xf32> to vector<1x128xf32>
    %250 = arith.mulf %241, %249 : vector<1x128xf32>
    %251 = arith.addf %248, %250 : vector<1x128xf32>
    %252 = math.tanh %251 : vector<1x128xf32>
    %cst_72 = arith.constant 1.000000e+00 : f32
    %253 = vector.broadcast %cst_72 : f32 to vector<1x128xf32>
    %254 = arith.subf %253, %247 : vector<1x128xf32>
    %255 = arith.mulf %254, %252 : vector<1x128xf32>
    %256 = arith.mulf %247, %201 : vector<1x128xf32>
    %257 = arith.addf %255, %256 : vector<1x128xf32>
    %258 = tpu.concatenate %231, %227 in 1 : vector<1x128xf32>, vector<1x128xf32> -> vector<1x256xf32>
    %259 = arith.truncf %258 : vector<1x256xf32> to vector<1x256xbf16>
    %cst_73 = arith.constant dense<0.000000e+00> : vector<1x512xf32>
    %260 = tpu.matmul %259, %2, %cst_73 {dimension_numbers = #tpu.dot_dimension_numbers<[1], [0], [0], [1], [0, 0, 1, 1], [], []>} : vector<1x256xbf16>, vector<256x512xbf16>, vector<1x512xf32> -> vector<1x512xf32>
    %261 = arith.addf %260, %3 : vector<1x512xf32>
    %262 = vector.extract_strided_slice %261 {offsets = [0, 0], sizes = [1, 128], strides = [1, 1]} : vector<1x512xf32> to vector<1x128xf32>
    %263 = arith.negf %262 : vector<1x128xf32>
    %264 = math.exp %263 : vector<1x128xf32>
    %cst_74 = arith.constant 1.000000e+00 : f32
    %265 = vector.broadcast %cst_74 : f32 to vector<1x128xf32>
    %266 = arith.addf %265, %264 : vector<1x128xf32>
    %267 = arith.divf %265, %266 : vector<1x128xf32>
    %268 = vector.extract_strided_slice %261 {offsets = [0, 128], sizes = [1, 128], strides = [1, 1]} : vector<1x512xf32> to vector<1x128xf32>
    %269 = arith.negf %268 : vector<1x128xf32>
    %270 = math.exp %269 : vector<1x128xf32>
    %cst_75 = arith.constant 1.000000e+00 : f32
    %271 = vector.broadcast %cst_75 : f32 to vector<1x128xf32>
    %272 = arith.addf %271, %270 : vector<1x128xf32>
    %273 = arith.divf %271, %272 : vector<1x128xf32>
    %274 = vector.extract_strided_slice %261 {offsets = [0, 256], sizes = [1, 128], strides = [1, 1]} : vector<1x512xf32> to vector<1x128xf32>
    %275 = vector.extract_strided_slice %261 {offsets = [0, 384], sizes = [1, 128], strides = [1, 1]} : vector<1x512xf32> to vector<1x128xf32>
    %276 = arith.mulf %267, %275 : vector<1x128xf32>
    %277 = arith.addf %274, %276 : vector<1x128xf32>
    %278 = math.tanh %277 : vector<1x128xf32>
    %cst_76 = arith.constant 1.000000e+00 : f32
    %279 = vector.broadcast %cst_76 : f32 to vector<1x128xf32>
    %280 = arith.subf %279, %273 : vector<1x128xf32>
    %281 = arith.mulf %280, %278 : vector<1x128xf32>
    %282 = arith.mulf %273, %227 : vector<1x128xf32>
    %283 = arith.addf %281, %282 : vector<1x128xf32>
    %c4_77 = arith.constant 4 : index
    %c0_78 = arith.constant 0 : index
    %284 = vector.load %arg5[%c4_77, %c0_78] : memref<8x128xf32, #tpu.memory_space<vmem>>, vector<1x128xf32>
    tpu.vector_store %arg5[%c4_77, %c0_78], %257 {strides = array<i32>} : memref<8x128xf32, #tpu.memory_space<vmem>>, vector<1x128xf32>,
    %c3_79 = arith.constant 3 : index
    %c0_80 = arith.constant 0 : index
    %285 = vector.load %arg7[%c3_79, %c0_80] : memref<8x128xf32, #tpu.memory_space<vmem>>, vector<1x128xf32>
    tpu.vector_store %arg7[%c3_79, %c0_80], %283 {strides = array<i32>} : memref<8x128xf32, #tpu.memory_space<vmem>>, vector<1x128xf32>,
    %c5_81 = arith.constant 5 : index
    %c0_82 = arith.constant 0 : index
    %286 = vector.load %arg0[%c5_81, %c0_82] : memref<8x128xf32, #tpu.memory_space<vmem>>, vector<1x128xf32>
    %c2_83 = arith.constant 2 : index
    %c0_84 = arith.constant 0 : index
    %287 = vector.load %arg0[%c2_83, %c0_84] : memref<8x128xf32, #tpu.memory_space<vmem>>, vector<1x128xf32>
    %288 = tpu.concatenate %286, %257 in 1 : vector<1x128xf32>, vector<1x128xf32> -> vector<1x256xf32>
    %289 = arith.truncf %288 : vector<1x256xf32> to vector<1x256xbf16>
    %cst_85 = arith.constant dense<0.000000e+00> : vector<1x512xf32>
    %290 = tpu.matmul %289, %0, %cst_85 {dimension_numbers = #tpu.dot_dimension_numbers<[1], [0], [0], [1], [0, 0, 1, 1], [], []>} : vector<1x256xbf16>, vector<256x512xbf16>, vector<1x512xf32> -> vector<1x512xf32>
    %291 = arith.addf %290, %1 : vector<1x512xf32>
    %292 = vector.extract_strided_slice %291 {offsets = [0, 0], sizes = [1, 128], strides = [1, 1]} : vector<1x512xf32> to vector<1x128xf32>
    %293 = arith.negf %292 : vector<1x128xf32>
    %294 = math.exp %293 : vector<1x128xf32>
    %cst_86 = arith.constant 1.000000e+00 : f32
    %295 = vector.broadcast %cst_86 : f32 to vector<1x128xf32>
    %296 = arith.addf %295, %294 : vector<1x128xf32>
    %297 = arith.divf %295, %296 : vector<1x128xf32>
    %298 = vector.extract_strided_slice %291 {offsets = [0, 128], sizes = [1, 128], strides = [1, 1]} : vector<1x512xf32> to vector<1x128xf32>
    %299 = arith.negf %298 : vector<1x128xf32>
    %300 = math.exp %299 : vector<1x128xf32>
    %cst_87 = arith.constant 1.000000e+00 : f32
    %301 = vector.broadcast %cst_87 : f32 to vector<1x128xf32>
    %302 = arith.addf %301, %300 : vector<1x128xf32>
    %303 = arith.divf %301, %302 : vector<1x128xf32>
    %304 = vector.extract_strided_slice %291 {offsets = [0, 256], sizes = [1, 128], strides = [1, 1]} : vector<1x512xf32> to vector<1x128xf32>
    %305 = vector.extract_strided_slice %291 {offsets = [0, 384], sizes = [1, 128], strides = [1, 1]} : vector<1x512xf32> to vector<1x128xf32>
    %306 = arith.mulf %297, %305 : vector<1x128xf32>
    %307 = arith.addf %304, %306 : vector<1x128xf32>
    %308 = math.tanh %307 : vector<1x128xf32>
    %cst_88 = arith.constant 1.000000e+00 : f32
    %309 = vector.broadcast %cst_88 : f32 to vector<1x128xf32>
    %310 = arith.subf %309, %303 : vector<1x128xf32>
    %311 = arith.mulf %310, %308 : vector<1x128xf32>
    %312 = arith.mulf %303, %257 : vector<1x128xf32>
    %313 = arith.addf %311, %312 : vector<1x128xf32>
    %314 = tpu.concatenate %287, %283 in 1 : vector<1x128xf32>, vector<1x128xf32> -> vector<1x256xf32>
    %315 = arith.truncf %314 : vector<1x256xf32> to vector<1x256xbf16>
    %cst_89 = arith.constant dense<0.000000e+00> : vector<1x512xf32>
    %316 = tpu.matmul %315, %2, %cst_89 {dimension_numbers = #tpu.dot_dimension_numbers<[1], [0], [0], [1], [0, 0, 1, 1], [], []>} : vector<1x256xbf16>, vector<256x512xbf16>, vector<1x512xf32> -> vector<1x512xf32>
    %317 = arith.addf %316, %3 : vector<1x512xf32>
    %318 = vector.extract_strided_slice %317 {offsets = [0, 0], sizes = [1, 128], strides = [1, 1]} : vector<1x512xf32> to vector<1x128xf32>
    %319 = arith.negf %318 : vector<1x128xf32>
    %320 = math.exp %319 : vector<1x128xf32>
    %cst_90 = arith.constant 1.000000e+00 : f32
    %321 = vector.broadcast %cst_90 : f32 to vector<1x128xf32>
    %322 = arith.addf %321, %320 : vector<1x128xf32>
    %323 = arith.divf %321, %322 : vector<1x128xf32>
    %324 = vector.extract_strided_slice %317 {offsets = [0, 128], sizes = [1, 128], strides = [1, 1]} : vector<1x512xf32> to vector<1x128xf32>
    %325 = arith.negf %324 : vector<1x128xf32>
    %326 = math.exp %325 : vector<1x128xf32>
    %cst_91 = arith.constant 1.000000e+00 : f32
    %327 = vector.broadcast %cst_91 : f32 to vector<1x128xf32>
    %328 = arith.addf %327, %326 : vector<1x128xf32>
    %329 = arith.divf %327, %328 : vector<1x128xf32>
    %330 = vector.extract_strided_slice %317 {offsets = [0, 256], sizes = [1, 128], strides = [1, 1]} : vector<1x512xf32> to vector<1x128xf32>
    %331 = vector.extract_strided_slice %317 {offsets = [0, 384], sizes = [1, 128], strides = [1, 1]} : vector<1x512xf32> to vector<1x128xf32>
    %332 = arith.mulf %323, %331 : vector<1x128xf32>
    %333 = arith.addf %330, %332 : vector<1x128xf32>
    %334 = math.tanh %333 : vector<1x128xf32>
    %cst_92 = arith.constant 1.000000e+00 : f32
    %335 = vector.broadcast %cst_92 : f32 to vector<1x128xf32>
    %336 = arith.subf %335, %329 : vector<1x128xf32>
    %337 = arith.mulf %336, %334 : vector<1x128xf32>
    %338 = arith.mulf %329, %283 : vector<1x128xf32>
    %339 = arith.addf %337, %338 : vector<1x128xf32>
    %c5_93 = arith.constant 5 : index
    %c0_94 = arith.constant 0 : index
    %340 = vector.load %arg5[%c5_93, %c0_94] : memref<8x128xf32, #tpu.memory_space<vmem>>, vector<1x128xf32>
    tpu.vector_store %arg5[%c5_93, %c0_94], %313 {strides = array<i32>} : memref<8x128xf32, #tpu.memory_space<vmem>>, vector<1x128xf32>,
    %c2_95 = arith.constant 2 : index
    %c0_96 = arith.constant 0 : index
    %341 = vector.load %arg7[%c2_95, %c0_96] : memref<8x128xf32, #tpu.memory_space<vmem>>, vector<1x128xf32>
    tpu.vector_store %arg7[%c2_95, %c0_96], %339 {strides = array<i32>} : memref<8x128xf32, #tpu.memory_space<vmem>>, vector<1x128xf32>,
    %c6_97 = arith.constant 6 : index
    %c0_98 = arith.constant 0 : index
    %342 = vector.load %arg0[%c6_97, %c0_98] : memref<8x128xf32, #tpu.memory_space<vmem>>, vector<1x128xf32>
    %c1_99 = arith.constant 1 : index
    %c0_100 = arith.constant 0 : index
    %343 = vector.load %arg0[%c1_99, %c0_100] : memref<8x128xf32, #tpu.memory_space<vmem>>, vector<1x128xf32>
    %344 = tpu.concatenate %342, %313 in 1 : vector<1x128xf32>, vector<1x128xf32> -> vector<1x256xf32>
    %345 = arith.truncf %344 : vector<1x256xf32> to vector<1x256xbf16>
    %cst_101 = arith.constant dense<0.000000e+00> : vector<1x512xf32>
    %346 = tpu.matmul %345, %0, %cst_101 {dimension_numbers = #tpu.dot_dimension_numbers<[1], [0], [0], [1], [0, 0, 1, 1], [], []>} : vector<1x256xbf16>, vector<256x512xbf16>, vector<1x512xf32> -> vector<1x512xf32>
    %347 = arith.addf %346, %1 : vector<1x512xf32>
    %348 = vector.extract_strided_slice %347 {offsets = [0, 0], sizes = [1, 128], strides = [1, 1]} : vector<1x512xf32> to vector<1x128xf32>
    %349 = arith.negf %348 : vector<1x128xf32>
    %350 = math.exp %349 : vector<1x128xf32>
    %cst_102 = arith.constant 1.000000e+00 : f32
    %351 = vector.broadcast %cst_102 : f32 to vector<1x128xf32>
    %352 = arith.addf %351, %350 : vector<1x128xf32>
    %353 = arith.divf %351, %352 : vector<1x128xf32>
    %354 = vector.extract_strided_slice %347 {offsets = [0, 128], sizes = [1, 128], strides = [1, 1]} : vector<1x512xf32> to vector<1x128xf32>
    %355 = arith.negf %354 : vector<1x128xf32>
    %356 = math.exp %355 : vector<1x128xf32>
    %cst_103 = arith.constant 1.000000e+00 : f32
    %357 = vector.broadcast %cst_103 : f32 to vector<1x128xf32>
    %358 = arith.addf %357, %356 : vector<1x128xf32>
    %359 = arith.divf %357, %358 : vector<1x128xf32>
    %360 = vector.extract_strided_slice %347 {offsets = [0, 256], sizes = [1, 128], strides = [1, 1]} : vector<1x512xf32> to vector<1x128xf32>
    %361 = vector.extract_strided_slice %347 {offsets = [0, 384], sizes = [1, 128], strides = [1, 1]} : vector<1x512xf32> to vector<1x128xf32>
    %362 = arith.mulf %353, %361 : vector<1x128xf32>
    %363 = arith.addf %360, %362 : vector<1x128xf32>
    %364 = math.tanh %363 : vector<1x128xf32>
    %cst_104 = arith.constant 1.000000e+00 : f32
    %365 = vector.broadcast %cst_104 : f32 to vector<1x128xf32>
    %366 = arith.subf %365, %359 : vector<1x128xf32>
    %367 = arith.mulf %366, %364 : vector<1x128xf32>
    %368 = arith.mulf %359, %313 : vector<1x128xf32>
    %369 = arith.addf %367, %368 : vector<1x128xf32>
    %370 = tpu.concatenate %343, %339 in 1 : vector<1x128xf32>, vector<1x128xf32> -> vector<1x256xf32>
    %371 = arith.truncf %370 : vector<1x256xf32> to vector<1x256xbf16>
    %cst_105 = arith.constant dense<0.000000e+00> : vector<1x512xf32>
    %372 = tpu.matmul %371, %2, %cst_105 {dimension_numbers = #tpu.dot_dimension_numbers<[1], [0], [0], [1], [0, 0, 1, 1], [], []>} : vector<1x256xbf16>, vector<256x512xbf16>, vector<1x512xf32> -> vector<1x512xf32>
    %373 = arith.addf %372, %3 : vector<1x512xf32>
    %374 = vector.extract_strided_slice %373 {offsets = [0, 0], sizes = [1, 128], strides = [1, 1]} : vector<1x512xf32> to vector<1x128xf32>
    %375 = arith.negf %374 : vector<1x128xf32>
    %376 = math.exp %375 : vector<1x128xf32>
    %cst_106 = arith.constant 1.000000e+00 : f32
    %377 = vector.broadcast %cst_106 : f32 to vector<1x128xf32>
    %378 = arith.addf %377, %376 : vector<1x128xf32>
    %379 = arith.divf %377, %378 : vector<1x128xf32>
    %380 = vector.extract_strided_slice %373 {offsets = [0, 128], sizes = [1, 128], strides = [1, 1]} : vector<1x512xf32> to vector<1x128xf32>
    %381 = arith.negf %380 : vector<1x128xf32>
    %382 = math.exp %381 : vector<1x128xf32>
    %cst_107 = arith.constant 1.000000e+00 : f32
    %383 = vector.broadcast %cst_107 : f32 to vector<1x128xf32>
    %384 = arith.addf %383, %382 : vector<1x128xf32>
    %385 = arith.divf %383, %384 : vector<1x128xf32>
    %386 = vector.extract_strided_slice %373 {offsets = [0, 256], sizes = [1, 128], strides = [1, 1]} : vector<1x512xf32> to vector<1x128xf32>
    %387 = vector.extract_strided_slice %373 {offsets = [0, 384], sizes = [1, 128], strides = [1, 1]} : vector<1x512xf32> to vector<1x128xf32>
    %388 = arith.mulf %379, %387 : vector<1x128xf32>
    %389 = arith.addf %386, %388 : vector<1x128xf32>
    %390 = math.tanh %389 : vector<1x128xf32>
    %cst_108 = arith.constant 1.000000e+00 : f32
    %391 = vector.broadcast %cst_108 : f32 to vector<1x128xf32>
    %392 = arith.subf %391, %385 : vector<1x128xf32>
    %393 = arith.mulf %392, %390 : vector<1x128xf32>
    %394 = arith.mulf %385, %339 : vector<1x128xf32>
    %395 = arith.addf %393, %394 : vector<1x128xf32>
    %c6_109 = arith.constant 6 : index
    %c0_110 = arith.constant 0 : index
    %396 = vector.load %arg5[%c6_109, %c0_110] : memref<8x128xf32, #tpu.memory_space<vmem>>, vector<1x128xf32>
    tpu.vector_store %arg5[%c6_109, %c0_110], %369 {strides = array<i32>} : memref<8x128xf32, #tpu.memory_space<vmem>>, vector<1x128xf32>,
    %c1_111 = arith.constant 1 : index
    %c0_112 = arith.constant 0 : index
    %397 = vector.load %arg7[%c1_111, %c0_112] : memref<8x128xf32, #tpu.memory_space<vmem>>, vector<1x128xf32>
    tpu.vector_store %arg7[%c1_111, %c0_112], %395 {strides = array<i32>} : memref<8x128xf32, #tpu.memory_space<vmem>>, vector<1x128xf32>,
    %c7_113 = arith.constant 7 : index
    %c0_114 = arith.constant 0 : index
    %398 = vector.load %arg0[%c7_113, %c0_114] : memref<8x128xf32, #tpu.memory_space<vmem>>, vector<1x128xf32>
    %c0_115 = arith.constant 0 : index
    %c0_116 = arith.constant 0 : index
    %399 = vector.load %arg0[%c0_115, %c0_116] : memref<8x128xf32, #tpu.memory_space<vmem>>, vector<1x128xf32>
    %400 = tpu.concatenate %398, %369 in 1 : vector<1x128xf32>, vector<1x128xf32> -> vector<1x256xf32>
    %401 = arith.truncf %400 : vector<1x256xf32> to vector<1x256xbf16>
    %cst_117 = arith.constant dense<0.000000e+00> : vector<1x512xf32>
    %402 = tpu.matmul %401, %0, %cst_117 {dimension_numbers = #tpu.dot_dimension_numbers<[1], [0], [0], [1], [0, 0, 1, 1], [], []>} : vector<1x256xbf16>, vector<256x512xbf16>, vector<1x512xf32> -> vector<1x512xf32>
    %403 = arith.addf %402, %1 : vector<1x512xf32>
    %404 = vector.extract_strided_slice %403 {offsets = [0, 0], sizes = [1, 128], strides = [1, 1]} : vector<1x512xf32> to vector<1x128xf32>
    %405 = arith.negf %404 : vector<1x128xf32>
    %406 = math.exp %405 : vector<1x128xf32>
    %cst_118 = arith.constant 1.000000e+00 : f32
    %407 = vector.broadcast %cst_118 : f32 to vector<1x128xf32>
    %408 = arith.addf %407, %406 : vector<1x128xf32>
    %409 = arith.divf %407, %408 : vector<1x128xf32>
    %410 = vector.extract_strided_slice %403 {offsets = [0, 128], sizes = [1, 128], strides = [1, 1]} : vector<1x512xf32> to vector<1x128xf32>
    %411 = arith.negf %410 : vector<1x128xf32>
    %412 = math.exp %411 : vector<1x128xf32>
    %cst_119 = arith.constant 1.000000e+00 : f32
    %413 = vector.broadcast %cst_119 : f32 to vector<1x128xf32>
    %414 = arith.addf %413, %412 : vector<1x128xf32>
    %415 = arith.divf %413, %414 : vector<1x128xf32>
    %416 = vector.extract_strided_slice %403 {offsets = [0, 256], sizes = [1, 128], strides = [1, 1]} : vector<1x512xf32> to vector<1x128xf32>
    %417 = vector.extract_strided_slice %403 {offsets = [0, 384], sizes = [1, 128], strides = [1, 1]} : vector<1x512xf32> to vector<1x128xf32>
    %418 = arith.mulf %409, %417 : vector<1x128xf32>
    %419 = arith.addf %416, %418 : vector<1x128xf32>
    %420 = math.tanh %419 : vector<1x128xf32>
    %cst_120 = arith.constant 1.000000e+00 : f32
    %421 = vector.broadcast %cst_120 : f32 to vector<1x128xf32>
    %422 = arith.subf %421, %415 : vector<1x128xf32>
    %423 = arith.mulf %422, %420 : vector<1x128xf32>
    %424 = arith.mulf %415, %369 : vector<1x128xf32>
    %425 = arith.addf %423, %424 : vector<1x128xf32>
    %426 = tpu.concatenate %399, %395 in 1 : vector<1x128xf32>, vector<1x128xf32> -> vector<1x256xf32>
    %427 = arith.truncf %426 : vector<1x256xf32> to vector<1x256xbf16>
    %cst_121 = arith.constant dense<0.000000e+00> : vector<1x512xf32>
    %428 = tpu.matmul %427, %2, %cst_121 {dimension_numbers = #tpu.dot_dimension_numbers<[1], [0], [0], [1], [0, 0, 1, 1], [], []>} : vector<1x256xbf16>, vector<256x512xbf16>, vector<1x512xf32> -> vector<1x512xf32>
    %429 = arith.addf %428, %3 : vector<1x512xf32>
    %430 = vector.extract_strided_slice %429 {offsets = [0, 0], sizes = [1, 128], strides = [1, 1]} : vector<1x512xf32> to vector<1x128xf32>
    %431 = arith.negf %430 : vector<1x128xf32>
    %432 = math.exp %431 : vector<1x128xf32>
    %cst_122 = arith.constant 1.000000e+00 : f32
    %433 = vector.broadcast %cst_122 : f32 to vector<1x128xf32>
    %434 = arith.addf %433, %432 : vector<1x128xf32>
    %435 = arith.divf %433, %434 : vector<1x128xf32>
    %436 = vector.extract_strided_slice %429 {offsets = [0, 128], sizes = [1, 128], strides = [1, 1]} : vector<1x512xf32> to vector<1x128xf32>
    %437 = arith.negf %436 : vector<1x128xf32>
    %438 = math.exp %437 : vector<1x128xf32>
    %cst_123 = arith.constant 1.000000e+00 : f32
    %439 = vector.broadcast %cst_123 : f32 to vector<1x128xf32>
    %440 = arith.addf %439, %438 : vector<1x128xf32>
    %441 = arith.divf %439, %440 : vector<1x128xf32>
    %442 = vector.extract_strided_slice %429 {offsets = [0, 256], sizes = [1, 128], strides = [1, 1]} : vector<1x512xf32> to vector<1x128xf32>
    %443 = vector.extract_strided_slice %429 {offsets = [0, 384], sizes = [1, 128], strides = [1, 1]} : vector<1x512xf32> to vector<1x128xf32>
    %444 = arith.mulf %435, %443 : vector<1x128xf32>
    %445 = arith.addf %442, %444 : vector<1x128xf32>
    %446 = math.tanh %445 : vector<1x128xf32>
    %cst_124 = arith.constant 1.000000e+00 : f32
    %447 = vector.broadcast %cst_124 : f32 to vector<1x128xf32>
    %448 = arith.subf %447, %441 : vector<1x128xf32>
    %449 = arith.mulf %448, %446 : vector<1x128xf32>
    %450 = arith.mulf %441, %395 : vector<1x128xf32>
    %451 = arith.addf %449, %450 : vector<1x128xf32>
    %c7_125 = arith.constant 7 : index
    %c0_126 = arith.constant 0 : index
    %452 = vector.load %arg5[%c7_125, %c0_126] : memref<8x128xf32, #tpu.memory_space<vmem>>, vector<1x128xf32>
    tpu.vector_store %arg5[%c7_125, %c0_126], %425 {strides = array<i32>} : memref<8x128xf32, #tpu.memory_space<vmem>>, vector<1x128xf32>,
    %c0_127 = arith.constant 0 : index
    %c0_128 = arith.constant 0 : index
    %453 = vector.load %arg7[%c0_127, %c0_128] : memref<8x128xf32, #tpu.memory_space<vmem>>, vector<1x128xf32>
    tpu.vector_store %arg7[%c0_127, %c0_128], %451 {strides = array<i32>} : memref<8x128xf32, #tpu.memory_space<vmem>>, vector<1x128xf32>,
    %c0_129 = arith.constant 0 : index
    %c0_130 = arith.constant 0 : index
    %454 = vector.load %arg5[%c0_129, %c0_130] : memref<8x128xf32, #tpu.memory_space<vmem>>, vector<8x128xf32>
    %c0_131 = arith.constant 0 : index
    %c0_132 = arith.constant 0 : index
    %455 = vector.load %arg7[%c0_131, %c0_132] : memref<8x128xf32, #tpu.memory_space<vmem>>, vector<8x128xf32>
    %456 = arith.addf %454, %455 : vector<8x128xf32>
    %c0_133 = arith.constant 0 : index
    %c0_134 = arith.constant 0 : index
    %457 = vector.load %arg5[%c0_133, %c0_134] : memref<8x128xf32, #tpu.memory_space<vmem>>, vector<8x128xf32>
    tpu.vector_store %arg5[%c0_133, %c0_134], %456 {strides = array<i32>} : memref<8x128xf32, #tpu.memory_space<vmem>>, vector<8x128xf32>,
    %c0_135 = arith.constant 0 : index
    %c0_136 = arith.constant 0 : index
    %458 = vector.load %arg6[%c0_135, %c0_136] : memref<1x128xf32, #tpu.memory_space<vmem>>, vector<1x128xf32>
    tpu.vector_store %arg6[%c0_135, %c0_136], %425 {strides = array<i32>} : memref<1x128xf32, #tpu.memory_space<vmem>>, vector<1x128xf32>,
    return
  }
}

</mosaic_0001>

<llo_original>
// kernel: tpu_custom_call.1
$region0: #{tpu_custom_call.1}
  #allocation0 [shape = 'u32[]', space=smem, size = 0x4, offset = 0x4, fixed_abs, tag = 'smem constant byte address 0x4 - core index']
  #allocation1 [shape = 'u32[72,128]{1,0:T(1,128)}', space=vmem, size = 0x9000, scoped, tag = 'internal scratch']
  #allocation2 [shape = 'f32[8,128]{1,0:T(8,128)}', space=vmem, size = 0x1000, scoped, tag = 'scratch operand']
  %s0 = inlined_call_operand.hbm [shape: f32[8,128], index: 0, kind: input, shape index: {}]
  %s1 = inlined_call_operand.hbm [shape: bf16[256,512], index: 1, kind: input, shape index: {}]
  %s2 = inlined_call_operand.hbm [shape: f32[1,512], index: 2, kind: input, shape index: {}]
  %s3 = inlined_call_operand.hbm [shape: bf16[256,512], index: 3, kind: input, shape index: {}]
  %s4 = inlined_call_operand.hbm [shape: f32[1,512], index: 4, kind: input, shape index: {}]
  %s5 = inlined_call_operand.hbm [shape: f32[8,128], index: 5, kind: output, shape index: {0}]
  %s6 = inlined_call_operand.hbm [shape: f32[1,128], index: 6, kind: output, shape index: {1}]
  %7 = xla_tuple %s5, %s6
  %s8 = sld [smem:[#allocation0]]
  $region58: #{tpu_custom_call.1} parent=0
    _
  %s10 = ssub.s32 1, %s8
  %s11 = scalar_select 0, %s10, %s8
  $region1: #{tpu_custom_call.1} parent=0
    #allocation3 [shape = 'u8[4096]{0}', space=vmem, size = 0x1000, scoped, tag = 'input window, operand 0, single buffered']
    #allocation4 [shape = 's32[1]{0}', space=sflag, size = 0x4, scoped, tag = 'scoped memory for tpu_custom_call.1']
    #allocation5 [shape = 's32[1]{0}', space=sflag, size = 0x4, scoped, tag = 'scoped memory for tpu_custom_call.1']
    #allocation6 [shape = 'u8[262144]{0}', space=vmem, size = 0x40000, scoped, tag = 'input window, operand 1, single buffered']
    #allocation7 [shape = 's32[1]{0}', space=sflag, size = 0x4, scoped, tag = 'scoped memory for tpu_custom_call.1']
    #allocation8 [shape = 'u8[2048]{0}', space=vmem, size = 0x800, scoped, tag = 'input window, operand 2, single buffered']
    #allocation9 [shape = 'u8[262144]{0}', space=vmem, size = 0x40000, scoped, tag = 'input window, operand 3, single buffered']
    #allocation10 [shape = 's32[1]{0}', space=sflag, size = 0x4, scoped, tag = 'scoped memory for tpu_custom_call.1']
    #allocation11 [shape = 'u8[2048]{0}', space=vmem, size = 0x800, scoped, tag = 'input window, operand 4, single buffered']
    #allocation12 [shape = 'u8[4096]{0}', space=vmem, size = 0x1000, scoped, tag = 'output window, operand 0, single buffered']
    #allocation13 [shape = 'u8[512]{0}', space=vmem, size = 0x400, scoped, tag = 'output window, operand 1, single buffered']
    #allocation14 [shape = 's32[1]{0}', space=sflag, size = 0x4, scoped, tag = 'scoped memory for tpu_custom_call.1']
    %12 = vsyncpa [#allocation4], 0
    %13 = vsyncpa [#allocation7], 0
    %14 = vsyncpa [#allocation10], 0
    %15 = vsyncpa [#allocation5], 0
    %16 = vsyncpa [#allocation14], 0
    // Predicated region
    $region2: #{tpu_custom_call.1} parent=1 // pred_check
      _
    $region3: #{tpu_custom_call.1} parent=1 // pred_check_branch
      %18 = sbr.rel (0) target = $region5
    $region4: #{tpu_custom_call.1} parent=1 // pred_region
      %20 = vsyncadd [#allocation4], 0
      %s22 = sshll.u32 %s0, 4
      %s23 = int_to_ptr.hbm [resolvable:$true] %s22
      %s24 = sshll.u32 [#allocation3], 4
      %s25 = int_to_ptr.vmem [resolvable:$true] %s24
      %27 = dma.hbm_to_vmem [thread:$0]  %s23, 128, %s25, [#allocation4]
    $region5: #{tpu_custom_call.1} parent=1 // pred_fallthru
      _
    // Predicated region
    $region6: #{tpu_custom_call.1} parent=1 // pred_check
      _
    $region7: #{tpu_custom_call.1} parent=1 // pred_check_branch
      %29 = sbr.rel (0) target = $region9
    $region8: #{tpu_custom_call.1} parent=1 // pred_region
      %31 = vsyncadd [#allocation7], 0
      %s32 = sshll.u32 %s1, 4
      %s33 = int_to_ptr.hbm [resolvable:$true] %s32
      %s34 = sshll.u32 [#allocation6], 4
      %s35 = int_to_ptr.vmem [resolvable:$true] %s34
      %40 = dma.hbm_to_vmem [thread:$0]  %s33, 8192, %s35, [#allocation7], 256, 256, 16
    $region9: #{tpu_custom_call.1} parent=1 // pred_fallthru
      _
    // Predicated region
    $region10: #{tpu_custom_call.1} parent=1 // pred_check
      _
    $region11: #{tpu_custom_call.1} parent=1 // pred_check_branch
      %42 = sbr.rel (0) target = $region13
    $region12: #{tpu_custom_call.1} parent=1 // pred_region
      %44 = vsyncadd [#allocation7], 0
      %s46 = sshll.u32 %s2, 4
      %s47 = int_to_ptr.hbm [resolvable:$true] %s46
      %s48 = sshll.u32 [#allocation8], 4
      %s49 = int_to_ptr.vmem [resolvable:$true] %s48
      %51 = dma.hbm_to_vmem [thread:$0]  %s47, 64, %s49, [#allocation7]
    $region13: #{tpu_custom_call.1} parent=1 // pred_fallthru
      _
    // Predicated region
    $region14: #{tpu_custom_call.1} parent=1 // pred_check
      _
    $region15: #{tpu_custom_call.1} parent=1 // pred_check_branch
      %53 = sbr.rel (0) target = $region17
    $region16: #{tpu_custom_call.1} parent=1 // pred_region
      %55 = vsyncadd [#allocation10], 0
      %s56 = sshll.u32 %s3, 4
      %s57 = int_to_ptr.hbm [resolvable:$true] %s56
      %s58 = sshll.u32 [#allocation9], 4
      %s59 = int_to_ptr.vmem [resolvable:$true] %s58
      %64 = dma.hbm_to_vmem [thread:$0]  %s57, 8192, %s59, [#allocation10], 256, 256, 16
    $region17: #{tpu_custom_call.1} parent=1 // pred_fallthru
      _
    // Predicated region
    $region18: #{tpu_custom_call.1} parent=1 // pred_check
      _
    $region19: #{tpu_custom_call.1} parent=1 // pred_check_branch
      %66 = sbr.rel (0) target = $region21
    $region20: #{tpu_custom_call.1} parent=1 // pred_region
      %68 = vsyncadd [#allocation10], 0
      %s70 = sshll.u32 %s4, 4
      %s71 = int_to_ptr.hbm [resolvable:$true] %s70
      %s72 = sshll.u32 [#allocation11], 4
      %s73 = int_to_ptr.vmem [resolvable:$true] %s72
      %75 = dma.hbm_to_vmem [thread:$0]  %s71, 64, %s73, [#allocation10]
    $region21: #{tpu_custom_call.1} parent=1 // pred_fallthru
      _
    // Predicated region
    $region22: #{tpu_custom_call.1} parent=1 // pred_check
      _
    $region23: #{tpu_custom_call.1} parent=1 // pred_check_branch
      %77 = sbr.rel (0) target = $region25
    $region24: #{tpu_custom_call.1} parent=1 // pred_region
      %79 = dma.done [#allocation4], 128
    $region25: #{tpu_custom_call.1} parent=1 // pred_fallthru
      _
    // Predicated region
    $region26: #{tpu_custom_call.1} parent=1 // pred_check
      _
    $region27: #{tpu_custom_call.1} parent=1 // pred_check_branch
      %81 = sbr.rel (0) target = $region29
    $region28: #{tpu_custom_call.1} parent=1 // pred_region
      %83 = dma.done [#allocation7], 8192
    $region29: #{tpu_custom_call.1} parent=1 // pred_fallthru
      _
    // Predicated region
    $region30: #{tpu_custom_call.1} parent=1 // pred_check
      _
    $region31: #{tpu_custom_call.1} parent=1 // pred_check_branch
      %85 = sbr.rel (0) target = $region33
    $region32: #{tpu_custom_call.1} parent=1 // pred_region
      %87 = dma.done [#allocation7], 64
    $region33: #{tpu_custom_call.1} parent=1 // pred_fallthru
      _
    // Predicated region
    $region34: #{tpu_custom_call.1} parent=1 // pred_check
      _
    $region35: #{tpu_custom_call.1} parent=1 // pred_check_branch
      %89 = sbr.rel (0) target = $region37
    $region36: #{tpu_custom_call.1} parent=1 // pred_region
      %91 = dma.done [#allocation10], 8192
    $region37: #{tpu_custom_call.1} parent=1 // pred_fallthru
      _
    // Predicated region
    $region38: #{tpu_custom_call.1} parent=1 // pred_check
      _
    $region39: #{tpu_custom_call.1} parent=1 // pred_check_branch
      %93 = sbr.rel (0) target = $region41
    $region40: #{tpu_custom_call.1} parent=1 // pred_region
      %95 = dma.done [#allocation10], 64
    $region41: #{tpu_custom_call.1} parent=1 // pred_fallthru
      _
    %v96 = vld [vmem:[#allocation6] sm:$0xff]
    %v97 = vld [vmem:[#allocation6 + $0x8] sm:$0xff]
    %v98 = vld [vmem:[#allocation6 + $0x10] sm:$0xff]
    %v99 = vld [vmem:[#allocation6 + $0x18] sm:$0xff]
    %v100 = vld [vmem:[#allocation6 + $0x20] sm:$0xff]
    %v101 = vld [vmem:[#allocation6 + $0x28] sm:$0xff]
    %v102 = vld [vmem:[#allocation6 + $0x30] sm:$0xff]
    %v103 = vld [vmem:[#allocation6 + $0x38] sm:$0xff]
    %v104 = vld [vmem:[#allocation6 + $0x40] sm:$0xff]
    %v105 = vld [vmem:[#allocation6 + $0x48] sm:$0xff]
    %v106 = vld [vmem:[#allocation6 + $0x50] sm:$0xff]
    %v107 = vld [vmem:[#allocation6 + $0x58] sm:$0xff]
    %v108 = vld [vmem:[#allocation6 + $0x60] sm:$0xff]
    %v109 = vld [vmem:[#allocation6 + $0x68] sm:$0xff]
    %v110 = vld [vmem:[#allocation6 + $0x70] sm:$0xff]
    %v111 = vld [vmem:[#allocation6 + $0x78] sm:$0xff]
    %v112 = vld [vmem:[#allocation6 + $0x80] sm:$0xff]
    %v113 = vld [vmem:[#allocation6 + $0x88] sm:$0xff]
    %v114 = vld [vmem:[#allocation6 + $0x90] sm:$0xff]
    %v115 = vld [vmem:[#allocation6 + $0x98] sm:$0xff]
    %v116 = vld [vmem:[#allocation6 + $0xa0] sm:$0xff]
    %v117 = vld [vmem:[#allocation6 + $0xa8] sm:$0xff]
    %v118 = vld [vmem:[#allocation6 + $0xb0] sm:$0xff]
    %v119 = vld [vmem:[#allocation6 + $0xb8] sm:$0xff]
    %v120 = vld [vmem:[#allocation6 + $0xc0] sm:$0xff]
    %v121 = vld [vmem:[#allocation6 + $0xc8] sm:$0xff]
    %v122 = vld [vmem:[#allocation6 + $0xd0] sm:$0xff]
    %v123 = vld [vmem:[#allocation6 + $0xd8] sm:$0xff]
    %v124 = vld [vmem:[#allocation6 + $0xe0] sm:$0xff]
    %v125 = vld [vmem:[#allocation6 + $0xe8] sm:$0xff]
    %v126 = vld [vmem:[#allocation6 + $0xf0] sm:$0xff]
    %v127 = vld [vmem:[#allocation6 + $0xf8] sm:$0xff]
    %v128 = vld [vmem:[#allocation6 + $0x100] sm:$0xff]
    %v129 = vld [vmem:[#allocation6 + $0x108] sm:$0xff]
    %v130 = vld [vmem:[#allocation6 + $0x110] sm:$0xff]
    %v131 = vld [vmem:[#allocation6 + $0x118] sm:$0xff]
    %v132 = vld [vmem:[#allocation6 + $0x120] sm:$0xff]
    %v133 = vld [vmem:[#allocation6 + $0x128] sm:$0xff]
    %v134 = vld [vmem:[#allocation6 + $0x130] sm:$0xff]
    %v135 = vld [vmem:[#allocation6 + $0x138] sm:$0xff]
    %v136 = vld [vmem:[#allocation6 + $0x140] sm:$0xff]
    %v137 = vld [vmem:[#allocation6 + $0x148] sm:$0xff]
    %v138 = vld [vmem:[#allocation6 + $0x150] sm:$0xff]
    %v139 = vld [vmem:[#allocation6 + $0x158] sm:$0xff]
    %v140 = vld [vmem:[#allocation6 + $0x160] sm:$0xff]
    %v141 = vld [vmem:[#allocation6 + $0x168] sm:$0xff]
    %v142 = vld [vmem:[#allocation6 + $0x170] sm:$0xff]
    %v143 = vld [vmem:[#allocation6 + $0x178] sm:$0xff]
    %v144 = vld [vmem:[#allocation6 + $0x180] sm:$0xff]
    %v145 = vld [vmem:[#allocation6 + $0x188] sm:$0xff]
    %v146 = vld [vmem:[#allocation6 + $0x190] sm:$0xff]
    %v147 = vld [vmem:[#allocation6 + $0x198] sm:$0xff]
    %v148 = vld [vmem:[#allocation6 + $0x1a0] sm:$0xff]
    %v149 = vld [vmem:[#allocation6 + $0x1a8] sm:$0xff]
    %v150 = vld [vmem:[#allocation6 + $0x1b0] sm:$0xff]
    %v151 = vld [vmem:[#allocation6 + $0x1b8] sm:$0xff]
    %v152 = vld [vmem:[#allocation6 + $0x1c0] sm:$0xff]
    %v153 = vld [vmem:[#allocation6 + $0x1c8] sm:$0xff]
    %v154 = vld [vmem:[#allocation6 + $0x1d0] sm:$0xff]
    %v155 = vld [vmem:[#allocation6 + $0x1d8] sm:$0xff]
    %v156 = vld [vmem:[#allocation6 + $0x1e0] sm:$0xff]
    %v157 = vld [vmem:[#allocation6 + $0x1e8] sm:$0xff]
    %v158 = vld [vmem:[#allocation6 + $0x1f0] sm:$0xff]
    %v159 = vld [vmem:[#allocation6 + $0x1f8] sm:$0xff]
    %v160 = vld [vmem:[#allocation8] sm:$0xf]
    %v161 = vld [vmem:[#allocation9] sm:$0xff]
    %v162 = vld [vmem:[#allocation9 + $0x8] sm:$0xff]
    %v163 = vld [vmem:[#allocation9 + $0x10] sm:$0xff]
    %v164 = vld [vmem:[#allocation9 + $0x18] sm:$0xff]
    %v165 = vld [vmem:[#allocation9 + $0x20] sm:$0xff]
    %v166 = vld [vmem:[#allocation9 + $0x28] sm:$0xff]
    %v167 = vld [vmem:[#allocation9 + $0x30] sm:$0xff]
    %v168 = vld [vmem:[#allocation9 + $0x38] sm:$0xff]
    %v169 = vld [vmem:[#allocation9 + $0x40] sm:$0xff]
    %v170 = vld [vmem:[#allocation9 + $0x48] sm:$0xff]
    %v171 = vld [vmem:[#allocation9 + $0x50] sm:$0xff]
    %v172 = vld [vmem:[#allocation9 + $0x58] sm:$0xff]
    %v173 = vld [vmem:[#allocation9 + $0x60] sm:$0xff]
    %v174 = vld [vmem:[#allocation9 + $0x68] sm:$0xff]
    %v175 = vld [vmem:[#allocation9 + $0x70] sm:$0xff]
    %v176 = vld [vmem:[#allocation9 + $0x78] sm:$0xff]
    %v177 = vld [vmem:[#allocation9 + $0x80] sm:$0xff]
    %v178 = vld [vmem:[#allocation9 + $0x88] sm:$0xff]
    %v179 = vld [vmem:[#allocation9 + $0x90] sm:$0xff]
    %v180 = vld [vmem:[#allocation9 + $0x98] sm:$0xff]
    %v181 = vld [vmem:[#allocation9 + $0xa0] sm:$0xff]
    %v182 = vld [vmem:[#allocation9 + $0xa8] sm:$0xff]
    %v183 = vld [vmem:[#allocation9 + $0xb0] sm:$0xff]
    %v184 = vld [vmem:[#allocation9 + $0xb8] sm:$0xff]
    %v185 = vld [vmem:[#allocation9 + $0xc0] sm:$0xff]
    %v186 = vld [vmem:[#allocation9 + $0xc8] sm:$0xff]
    %v187 = vld [vmem:[#allocation9 + $0xd0] sm:$0xff]
    %v188 = vld [vmem:[#allocation9 + $0xd8] sm:$0xff]
    %v189 = vld [vmem:[#allocation9 + $0xe0] sm:$0xff]
    %v190 = vld [vmem:[#allocation9 + $0xe8] sm:$0xff]
    %v191 = vld [vmem:[#allocation9 + $0xf0] sm:$0xff]
    %v192 = vld [vmem:[#allocation9 + $0xf8] sm:$0xff]
    %v193 = vld [vmem:[#allocation9 + $0x100] sm:$0xff]
    %v194 = vld [vmem:[#allocation9 + $0x108] sm:$0xff]
    %v195 = vld [vmem:[#allocation9 + $0x110] sm:$0xff]
    %v196 = vld [vmem:[#allocation9 + $0x118] sm:$0xff]
    %v197 = vld [vmem:[#allocation9 + $0x120] sm:$0xff]
    %v198 = vld [vmem:[#allocation9 + $0x128] sm:$0xff]
    %v199 = vld [vmem:[#allocation9 + $0x130] sm:$0xff]
    %v200 = vld [vmem:[#allocation9 + $0x138] sm:$0xff]
    %v201 = vld [vmem:[#allocation9 + $0x140] sm:$0xff]
    %v202 = vld [vmem:[#allocation9 + $0x148] sm:$0xff]
    %v203 = vld [vmem:[#allocation9 + $0x150] sm:$0xff]
    %v204 = vld [vmem:[#allocation9 + $0x158] sm:$0xff]
    %v205 = vld [vmem:[#allocation9 + $0x160] sm:$0xff]
    %v206 = vld [vmem:[#allocation9 + $0x168] sm:$0xff]
    %v207 = vld [vmem:[#allocation9 + $0x170] sm:$0xff]
    %v208 = vld [vmem:[#allocation9 + $0x178] sm:$0xff]
    %v209 = vld [vmem:[#allocation9 + $0x180] sm:$0xff]
    %v210 = vld [vmem:[#allocation9 + $0x188] sm:$0xff]
    %v211 = vld [vmem:[#allocation9 + $0x190] sm:$0xff]
    %v212 = vld [vmem:[#allocation9 + $0x198] sm:$0xff]
    %v213 = vld [vmem:[#allocation9 + $0x1a0] sm:$0xff]
    %v214 = vld [vmem:[#allocation9 + $0x1a8] sm:$0xff]
    %v215 = vld [vmem:[#allocation9 + $0x1b0] sm:$0xff]
    %v216 = vld [vmem:[#allocation9 + $0x1b8] sm:$0xff]
    %v217 = vld [vmem:[#allocation9 + $0x1c0] sm:$0xff]
    %v218 = vld [vmem:[#allocation9 + $0x1c8] sm:$0xff]
    %v219 = vld [vmem:[#allocation9 + $0x1d0] sm:$0xff]
    %v220 = vld [vmem:[#allocation9 + $0x1d8] sm:$0xff]
    %v221 = vld [vmem:[#allocation9 + $0x1e0] sm:$0xff]
    %v222 = vld [vmem:[#allocation9 + $0x1e8] sm:$0xff]
    %v223 = vld [vmem:[#allocation9 + $0x1f0] sm:$0xff]
    %v224 = vld [vmem:[#allocation9 + $0x1f8] sm:$0xff]
    %v225 = vld [vmem:[#allocation11] sm:$0xf]
    %v226 = vld [vmem:[#allocation3] sm:$0x1]
    %v227 = vld [vmem:[#allocation3 + $0x7] sm:$0x1]
    %v228 = vpack.c.bf16 %v226, %v226
    %v229 = vpack.c.bf16 0.0, 0.0
    %v294 = vunpack.c.l.b16 %v96
    %v295 = vunpack.c.h.b16 %v96
    %v296 = vunpack.c.l.b16 %v97
    %v297 = vunpack.c.h.b16 %v97
    %v298 = vunpack.c.l.b16 %v98
    %v299 = vunpack.c.h.b16 %v98
    %v300 = vunpack.c.l.b16 %v99
    %v301 = vunpack.c.h.b16 %v99
    %v302 = vunpack.c.l.b16 %v100
    %v303 = vunpack.c.h.b16 %v100
    %v304 = vunpack.c.l.b16 %v101
    %v305 = vunpack.c.h.b16 %v101
    %v306 = vunpack.c.l.b16 %v102
    %v307 = vunpack.c.h.b16 %v102
    %v308 = vunpack.c.l.b16 %v103
    %v309 = vunpack.c.h.b16 %v103
    %v310 = vunpack.c.l.b16 %v104
    %v311 = vunpack.c.h.b16 %v104
    %v312 = vunpack.c.l.b16 %v105
    %v313 = vunpack.c.h.b16 %v105
    %v314 = vunpack.c.l.b16 %v106
    %v315 = vunpack.c.h.b16 %v106
    %v316 = vunpack.c.l.b16 %v107
    %v317 = vunpack.c.h.b16 %v107
    %v318 = vunpack.c.l.b16 %v108
    %v319 = vunpack.c.h.b16 %v108
    %v320 = vunpack.c.l.b16 %v109
    %v321 = vunpack.c.h.b16 %v109
    %v322 = vunpack.c.l.b16 %v110
    %v323 = vunpack.c.h.b16 %v110
    %v324 = vunpack.c.l.b16 %v111
    %v325 = vunpack.c.h.b16 %v111
    %v326 = vunpack.c.l.b16 %v112
    %v327 = vunpack.c.h.b16 %v112
    %v328 = vunpack.c.l.b16 %v113
    %v329 = vunpack.c.h.b16 %v113
    %v330 = vunpack.c.l.b16 %v114
    %v331 = vunpack.c.h.b16 %v114
    %v332 = vunpack.c.l.b16 %v115
    %v333 = vunpack.c.h.b16 %v115
    %v334 = vunpack.c.l.b16 %v116
    %v335 = vunpack.c.h.b16 %v116
    %v336 = vunpack.c.l.b16 %v117
    %v337 = vunpack.c.h.b16 %v117
    %v338 = vunpack.c.l.b16 %v118
    %v339 = vunpack.c.h.b16 %v118
    %v340 = vunpack.c.l.b16 %v119
    %v341 = vunpack.c.h.b16 %v119
    %v342 = vunpack.c.l.b16 %v120
    %v343 = vunpack.c.h.b16 %v120
    %v344 = vunpack.c.l.b16 %v121
    %v345 = vunpack.c.h.b16 %v121
    %v346 = vunpack.c.l.b16 %v122
    %v347 = vunpack.c.h.b16 %v122
    %v348 = vunpack.c.l.b16 %v123
    %v349 = vunpack.c.h.b16 %v123
    %v350 = vunpack.c.l.b16 %v124
    %v351 = vunpack.c.h.b16 %v124
    %v352 = vunpack.c.l.b16 %v125
    %v353 = vunpack.c.h.b16 %v125
    %v354 = vunpack.c.l.b16 %v126
    %v355 = vunpack.c.h.b16 %v126
    %v356 = vunpack.c.l.b16 %v127
    %v357 = vunpack.c.h.b16 %v127
    %v358 = vunpack.c.l.b16 %v128
    %v359 = vunpack.c.h.b16 %v128
    %v360 = vunpack.c.l.b16 %v129
    %v361 = vunpack.c.h.b16 %v129
    %v362 = vunpack.c.l.b16 %v130
    %v363 = vunpack.c.h.b16 %v130
    %v364 = vunpack.c.l.b16 %v131
    %v365 = vunpack.c.h.b16 %v131
    %v366 = vunpack.c.l.b16 %v132
    %v367 = vunpack.c.h.b16 %v132
    %v368 = vunpack.c.l.b16 %v133
    %v369 = vunpack.c.h.b16 %v133
    %v370 = vunpack.c.l.b16 %v134
    %v371 = vunpack.c.h.b16 %v134
    %v372 = vunpack.c.l.b16 %v135
    %v373 = vunpack.c.h.b16 %v135
    %v374 = vunpack.c.l.b16 %v136
    %v375 = vunpack.c.h.b16 %v136
    %v376 = vunpack.c.l.b16 %v137
    %v377 = vunpack.c.h.b16 %v137
    %v378 = vunpack.c.l.b16 %v138
    %v379 = vunpack.c.h.b16 %v138
    %v380 = vunpack.c.l.b16 %v139
    %v381 = vunpack.c.h.b16 %v139
    %v382 = vunpack.c.l.b16 %v140
    %v383 = vunpack.c.h.b16 %v140
    %v384 = vunpack.c.l.b16 %v141
    %v385 = vunpack.c.h.b16 %v141
    %v386 = vunpack.c.l.b16 %v142
    %v387 = vunpack.c.h.b16 %v142
    %v388 = vunpack.c.l.b16 %v143
    %v389 = vunpack.c.h.b16 %v143
    %v390 = vunpack.c.l.b16 %v144
    %v391 = vunpack.c.h.b16 %v144
    %v392 = vunpack.c.l.b16 %v145
    %v393 = vunpack.c.h.b16 %v145
    %v394 = vunpack.c.l.b16 %v146
    %v395 = vunpack.c.h.b16 %v146
    %v396 = vunpack.c.l.b16 %v147
    %v397 = vunpack.c.h.b16 %v147
    %v398 = vunpack.c.l.b16 %v148
    %v399 = vunpack.c.h.b16 %v148
    %v400 = vunpack.c.l.b16 %v149
    %v401 = vunpack.c.h.b16 %v149
    %v402 = vunpack.c.l.b16 %v150
    %v403 = vunpack.c.h.b16 %v150
    %v404 = vunpack.c.l.b16 %v151
    %v405 = vunpack.c.h.b16 %v151
    %v406 = vunpack.c.l.b16 %v152
    %v407 = vunpack.c.h.b16 %v152
    %v408 = vunpack.c.l.b16 %v153
    %v409 = vunpack.c.h.b16 %v153
    %v410 = vunpack.c.l.b16 %v154
    %v411 = vunpack.c.h.b16 %v154
    %v412 = vunpack.c.l.b16 %v155
    %v413 = vunpack.c.h.b16 %v155
    %v414 = vunpack.c.l.b16 %v156
    %v415 = vunpack.c.h.b16 %v156
    %v416 = vunpack.c.l.b16 %v157
    %v417 = vunpack.c.h.b16 %v157
    %v418 = vunpack.c.l.b16 %v158
    %v419 = vunpack.c.h.b16 %v158
    %v420 = vunpack.c.l.b16 %v159
    %v421 = vunpack.c.h.b16 %v159
    %v422 = vpack.c.b16 %v298, %v294
    %v423 = vpack.c.b16 %v299, %v295
    %v424 = vpack.c.b16 %v300, %v296
    %v425 = vpack.c.b16 %v301, %v297
    %v426 = vpack.c.b16 %v306, %v302
    %v427 = vpack.c.b16 %v307, %v303
    %v428 = vpack.c.b16 %v308, %v304
    %v429 = vpack.c.b16 %v309, %v305
    %v430 = vpack.c.b16 %v314, %v310
    %v431 = vpack.c.b16 %v315, %v311
    %v432 = vpack.c.b16 %v316, %v312
    %v433 = vpack.c.b16 %v317, %v313
    %v434 = vpack.c.b16 %v322, %v318
    %v435 = vpack.c.b16 %v323, %v319
    %v436 = vpack.c.b16 %v324, %v320
    %v437 = vpack.c.b16 %v325, %v321
    %v438 = vpack.c.b16 %v330, %v326
    %v439 = vpack.c.b16 %v331, %v327
    %v440 = vpack.c.b16 %v332, %v328
    %v441 = vpack.c.b16 %v333, %v329
    %v442 = vpack.c.b16 %v338, %v334
    %v443 = vpack.c.b16 %v339, %v335
    %v444 = vpack.c.b16 %v340, %v336
    %v445 = vpack.c.b16 %v341, %v337
    %v446 = vpack.c.b16 %v346, %v342
    %v447 = vpack.c.b16 %v347, %v343
    %v448 = vpack.c.b16 %v348, %v344
    %v449 = vpack.c.b16 %v349, %v345
    %v450 = vpack.c.b16 %v354, %v350
    %v451 = vpack.c.b16 %v355, %v351
    %v452 = vpack.c.b16 %v356, %v352
    %v453 = vpack.c.b16 %v357, %v353
    %v454 = vpack.c.b16 %v362, %v358
    %v455 = vpack.c.b16 %v363, %v359
    %v456 = vpack.c.b16 %v364, %v360
    %v457 = vpack.c.b16 %v365, %v361
    %v458 = vpack.c.b16 %v370, %v366
    %v459 = vpack.c.b16 %v371, %v367
    %v460 = vpack.c.b16 %v372, %v368
    %v461 = vpack.c.b16 %v373, %v369
    %v462 = vpack.c.b16 %v378, %v374
    %v463 = vpack.c.b16 %v379, %v375
    %v464 = vpack.c.b16 %v380, %v376
    %v465 = vpack.c.b16 %v381, %v377
    %v466 = vpack.c.b16 %v386, %v382
    %v467 = vpack.c.b16 %v387, %v383
    %v468 = vpack.c.b16 %v388, %v384
    %v469 = vpack.c.b16 %v389, %v385
    %v470 = vpack.c.b16 %v394, %v390
    %v471 = vpack.c.b16 %v395, %v391
    %v472 = vpack.c.b16 %v396, %v392
    %v473 = vpack.c.b16 %v397, %v393
    %v474 = vpack.c.b16 %v402, %v398
    %v475 = vpack.c.b16 %v403, %v399
    %v476 = vpack.c.b16 %v404, %v400
    %v477 = vpack.c.b16 %v405, %v401
    %v478 = vpack.c.b16 %v410, %v406
    %v479 = vpack.c.b16 %v411, %v407
    %v480 = vpack.c.b16 %v412, %v408
    %v481 = vpack.c.b16 %v413, %v409
    %v482 = vpack.c.b16 %v418, %v414
    %v483 = vpack.c.b16 %v419, %v415
    %v484 = vpack.c.b16 %v420, %v416
    %v485 = vpack.c.b16 %v421, %v417
    %v551 = vperm.slane %v160, 0
    %v552 = vperm.slane %v160, 1
    %v553 = vperm.slane %v160, 2
    %v554 = vperm.slane %v160, 3
    %559 = vmatpush.bf16.msra.mxu0 %v450
    %560 = vmatpush.bf16.msra.mxu0 %v446
    %561 = vmatpush.bf16.msra.mxu0 %v442
    %562 = vmatpush.bf16.msra.mxu0 %v438
    %563 = vmatpush.bf16.msra.mxu0 %v434
    %564 = vmatpush.bf16.msra.mxu0 %v430
    %565 = vmatpush.bf16.msra.mxu0 %v426
    %566 = vmatpush.bf16.msra.mxu0 %v422
    %567 = vmatmul.bf16.gmra.mxu0 %v228
    %v568 = vpop.f32.mrf.mxu0
    %v569 = vadd.f32 %v551, %v568
    %v570 = vpop.f32.mrf.mxu0
    %571 = vdwg.mxu0
    %572 = vmatpush.bf16.msra.mxu0 %v482
    %573 = vmatpush.bf16.msra.mxu0 %v478
    %574 = vmatpush.bf16.msra.mxu0 %v474
    %575 = vmatpush.bf16.msra.mxu0 %v470
    %576 = vmatpush.bf16.msra.mxu0 %v466
    %577 = vmatpush.bf16.msra.mxu0 %v462
    %578 = vmatpush.bf16.msra.mxu0 %v458
    %579 = vmatpush.bf16.msra.mxu0 %v454
    %580 = vmatmul.bf16.gmra.mxu0 %v229
    %v581 = vpop.f32.mrf.mxu0
    %v582 = vadd.f32 %v569, %v581
    %v583 = vpop.f32.mrf.mxu0
    %584 = vdwg.mxu0
    %585 = vmatpush.bf16.msra.mxu0 %v451
    %586 = vmatpush.bf16.msra.mxu0 %v447
    %587 = vmatpush.bf16.msra.mxu0 %v443
    %588 = vmatpush.bf16.msra.mxu0 %v439
    %589 = vmatpush.bf16.msra.mxu0 %v435
    %590 = vmatpush.bf16.msra.mxu0 %v431
    %591 = vmatpush.bf16.msra.mxu0 %v427
    %592 = vmatpush.bf16.msra.mxu0 %v423
    %593 = vmatmul.bf16.gmra.mxu0 %v228
    %v594 = vpop.f32.mrf.mxu0
    %v595 = vadd.f32 %v552, %v594
    %v596 = vpop.f32.mrf.mxu0
    %597 = vdwg.mxu0
    %598 = vmatpush.bf16.msra.mxu0 %v483
    %599 = vmatpush.bf16.msra.mxu0 %v479
    %600 = vmatpush.bf16.msra.mxu0 %v475
    %601 = vmatpush.bf16.msra.mxu0 %v471
    %602 = vmatpush.bf16.msra.mxu0 %v467
    %603 = vmatpush.bf16.msra.mxu0 %v463
    %604 = vmatpush.bf16.msra.mxu0 %v459
    %605 = vmatpush.bf16.msra.mxu0 %v455
    %606 = vmatmul.bf16.gmra.mxu0 %v229
    %v607 = vpop.f32.mrf.mxu0
    %v608 = vadd.f32 %v595, %v607
    %v609 = vpop.f32.mrf.mxu0
    %610 = vdwg.mxu0
    %611 = vmatpush.bf16.msra.mxu0 %v452
    %612 = vmatpush.bf16.msra.mxu0 %v448
    %613 = vmatpush.bf16.msra.mxu0 %v444
    %614 = vmatpush.bf16.msra.mxu0 %v440
    %615 = vmatpush.bf16.msra.mxu0 %v436
    %616 = vmatpush.bf16.msra.mxu0 %v432
    %617 = vmatpush.bf16.msra.mxu0 %v428
    %618 = vmatpush.bf16.msra.mxu0 %v424
    %619 = vmatmul.bf16.gmra.mxu0 %v228
    %v620 = vpop.f32.mrf.mxu0
    %v621 = vadd.f32 %v553, %v620
    %v622 = vpop.f32.mrf.mxu0
    %623 = vdwg.mxu0
    %624 = vmatpush.bf16.msra.mxu0 %v484
    %625 = vmatpush.bf16.msra.mxu0 %v480
    %626 = vmatpush.bf16.msra.mxu0 %v476
    %627 = vmatpush.bf16.msra.mxu0 %v472
    %628 = vmatpush.bf16.msra.mxu0 %v468
    %629 = vmatpush.bf16.msra.mxu0 %v464
    %630 = vmatpush.bf16.msra.mxu0 %v460
    %631 = vmatpush.bf16.msra.mxu0 %v456
    %632 = vmatmul.bf16.gmra.mxu0 %v229
    %v633 = vpop.f32.mrf.mxu0
    %v634 = vadd.f32 %v621, %v633
    %v635 = vpop.f32.mrf.mxu0
    %636 = vdwg.mxu0
    %637 = vmatpush.bf16.msra.mxu0 %v453
    %638 = vmatpush.bf16.msra.mxu0 %v449
    %639 = vmatpush.bf16.msra.mxu0 %v445
    %640 = vmatpush.bf16.msra.mxu0 %v441
    %641 = vmatpush.bf16.msra.mxu0 %v437
    %642 = vmatpush.bf16.msra.mxu0 %v433
    %643 = vmatpush.bf16.msra.mxu0 %v429
    %644 = vmatpush.bf16.msra.mxu0 %v425
    %645 = vmatmul.bf16.gmra.mxu0 %v228
    %v646 = vpop.f32.mrf.mxu0
    %v647 = vadd.f32 %v554, %v646
    %v648 = vpop.f32.mrf.mxu0
    %649 = vdwg.mxu0
    %650 = vmatpush.bf16.msra.mxu0 %v485
    %651 = vmatpush.bf16.msra.mxu0 %v481
    %652 = vmatpush.bf16.msra.mxu0 %v477
    %653 = vmatpush.bf16.msra.mxu0 %v473
    %654 = vmatpush.bf16.msra.mxu0 %v469
    %655 = vmatpush.bf16.msra.mxu0 %v465
    %656 = vmatpush.bf16.msra.mxu0 %v461
    %657 = vmatpush.bf16.msra.mxu0 %v457
    %658 = vmatmul.bf16.gmra.mxu0 %v229
    %v659 = vpop.f32.mrf.mxu0
    %v660 = vadd.f32 %v647, %v659
    %v661 = vpop.f32.mrf.mxu0
    %662 = vdwg.mxu0
    %v663 = vxor.u32 %v582, 2147483648
    %v664 = vmul.f32 %v663, 1.442695
    %v665 = vpow.pop %v664
    %v666 = vadd.f32 %v665, 1.0
    %v667 = vrcp.pop %v666
    %v668 = vmul.f32 %v666, %v667
    %v669 = vsub.f32 1.0, %v668
    %v670 = vmul.f32 %v667, %v669
    %v671 = vadd.f32 %v667, %v670
    %vm672 = vweird.f32 %v666
    %vm673 = vweird.f32 %v667
    %vm674 = vmor %vm672, %vm673
    %v675 = vsel %vm674, %v667, %v671
    %v676 = vand.u32 2147483647, %v666
    %vm677 = vcmp.eq.f32.partialorder %v676, 8.507059e+37
    %v678 = vand.u32 %v666, 2147483648
    %v679 = vor.u32 1.1754944e-38, %v678
    %v680 = vsel %vm677, %v679, %v675
    %v681 = vmul.f32 1.0, %v680
    %v682 = vxor.u32 %v608, 2147483648
    %v683 = vmul.f32 %v682, 1.442695
    %v684 = vpow.pop %v683
    %v685 = vadd.f32 %v684, 1.0
    %v686 = vrcp.pop %v685
    %v687 = vmul.f32 %v685, %v686
    %v688 = vsub.f32 1.0, %v687
    %v689 = vmul.f32 %v686, %v688
    %v690 = vadd.f32 %v686, %v689
    %vm691 = vweird.f32 %v685
    %vm692 = vweird.f32 %v686
    %vm693 = vmor %vm691, %vm692
    %v694 = vsel %vm693, %v686, %v690
    %v695 = vand.u32 2147483647, %v685
    %vm696 = vcmp.eq.f32.partialorder %v695, 8.507059e+37
    %v697 = vand.u32 %v685, 2147483648
    %v698 = vor.u32 1.1754944e-38, %v697
    %v699 = vsel %vm696, %v698, %v694
    %v700 = vmul.f32 1.0, %v699
    %v701 = vmul.f32 %v681, %v660
    %v702 = vadd.f32 %v634, %v701
    %v703 = vtanh.pop %v702
    %v704 = vsub.f32 1.0, %v700
    %v705 = vmul.f32 %v704, %v703
    %v706 = vmul.f32 %v700, 0.0
    %v707 = vadd.f32 %v705, %v706
    %v708 = vpack.c.bf16 %v227, %v227
    %v773 = vunpack.c.l.b16 %v161
    %v774 = vunpack.c.h.b16 %v161
    %v775 = vunpack.c.l.b16 %v162
    %v776 = vunpack.c.h.b16 %v162
    %v777 = vunpack.c.l.b16 %v163
    %v778 = vunpack.c.h.b16 %v163
    %v779 = vunpack.c.l.b16 %v164
    %v780 = vunpack.c.h.b16 %v164
    %v781 = vunpack.c.l.b16 %v165
    %v782 = vunpack.c.h.b16 %v165
    %v783 = vunpack.c.l.b16 %v166
    %v784 = vunpack.c.h.b16 %v166
    %v785 = vunpack.c.l.b16 %v167
    %v786 = vunpack.c.h.b16 %v167
    %v787 = vunpack.c.l.b16 %v168
    %v788 = vunpack.c.h.b16 %v168
    %v789 = vunpack.c.l.b16 %v169
    %v790 = vunpack.c.h.b16 %v169
    %v791 = vunpack.c.l.b16 %v170
    %v792 = vunpack.c.h.b16 %v170
    %v793 = vunpack.c.l.b16 %v171
    %v794 = vunpack.c.h.b16 %v171
    %v795 = vunpack.c.l.b16 %v172
    %v796 = vunpack.c.h.b16 %v172
    %v797 = vunpack.c.l.b16 %v173
    %v798 = vunpack.c.h.b16 %v173
    %v799 = vunpack.c.l.b16 %v174
    %v800 = vunpack.c.h.b16 %v174
    %v801 = vunpack.c.l.b16 %v175
    %v802 = vunpack.c.h.b16 %v175
    %v803 = vunpack.c.l.b16 %v176
    %v804 = vunpack.c.h.b16 %v176
    %v805 = vunpack.c.l.b16 %v177
    %v806 = vunpack.c.h.b16 %v177
    %v807 = vunpack.c.l.b16 %v178
    %v808 = vunpack.c.h.b16 %v178
    %v809 = vunpack.c.l.b16 %v179
    %v810 = vunpack.c.h.b16 %v179
    %v811 = vunpack.c.l.b16 %v180
    %v812 = vunpack.c.h.b16 %v180
    %v813 = vunpack.c.l.b16 %v181
    %v814 = vunpack.c.h.b16 %v181
    %v815 = vunpack.c.l.b16 %v182
    %v816 = vunpack.c.h.b16 %v182
    %v817 = vunpack.c.l.b16 %v183
    %v818 = vunpack.c.h.b16 %v183
    %v819 = vunpack.c.l.b16 %v184
    %v820 = vunpack.c.h.b16 %v184
    %v821 = vunpack.c.l.b16 %v185
    %v822 = vunpack.c.h.b16 %v185
    %v823 = vunpack.c.l.b16 %v186
    %v824 = vunpack.c.h.b16 %v186
    %v825 = vunpack.c.l.b16 %v187
    %v826 = vunpack.c.h.b16 %v187
    %v827 = vunpack.c.l.b16 %v188
    %v828 = vunpack.c.h.b16 %v188
    %v829 = vunpack.c.l.b16 %v189
    %v830 = vunpack.c.h.b16 %v189
    %v831 = vunpack.c.l.b16 %v190
    %v832 = vunpack.c.h.b16 %v190
    %v833 = vunpack.c.l.b16 %v191
    %v834 = vunpack.c.h.b16 %v191
    %v835 = vunpack.c.l.b16 %v192
    %v836 = vunpack.c.h.b16 %v192
    %v837 = vunpack.c.l.b16 %v193
    %v838 = vunpack.c.h.b16 %v193
    %v839 = vunpack.c.l.b16 %v194
    %v840 = vunpack.c.h.b16 %v194
    %v841 = vunpack.c.l.b16 %v195
    %v842 = vunpack.c.h.b16 %v195
    %v843 = vunpack.c.l.b16 %v196
    %v844 = vunpack.c.h.b16 %v196
    %v845 = vunpack.c.l.b16 %v197
    %v846 = vunpack.c.h.b16 %v197
    %v847 = vunpack.c.l.b16 %v198
    %v848 = vunpack.c.h.b16 %v198
    %v849 = vunpack.c.l.b16 %v199
    %v850 = vunpack.c.h.b16 %v199
    %v851 = vunpack.c.l.b16 %v200
    %v852 = vunpack.c.h.b16 %v200
    %v853 = vunpack.c.l.b16 %v201
    %v854 = vunpack.c.h.b16 %v201
    %v855 = vunpack.c.l.b16 %v202
    %v856 = vunpack.c.h.b16 %v202
    %v857 = vunpack.c.l.b16 %v203
    %v858 = vunpack.c.h.b16 %v203
    %v859 = vunpack.c.l.b16 %v204
    %v860 = vunpack.c.h.b16 %v204
    %v861 = vunpack.c.l.b16 %v205
    %v862 = vunpack.c.h.b16 %v205
    %v863 = vunpack.c.l.b16 %v206
    %v864 = vunpack.c.h.b16 %v206
    %v865 = vunpack.c.l.b16 %v207
    %v866 = vunpack.c.h.b16 %v207
    %v867 = vunpack.c.l.b16 %v208
    %v868 = vunpack.c.h.b16 %v208
    %v869 = vunpack.c.l.b16 %v209
    %v870 = vunpack.c.h.b16 %v209
    %v871 = vunpack.c.l.b16 %v210
    %v872 = vunpack.c.h.b16 %v210
    %v873 = vunpack.c.l.b16 %v211
    %v874 = vunpack.c.h.b16 %v211
    %v875 = vunpack.c.l.b16 %v212
    %v876 = vunpack.c.h.b16 %v212
    %v877 = vunpack.c.l.b16 %v213
    %v878 = vunpack.c.h.b16 %v213
    %v879 = vunpack.c.l.b16 %v214
    %v880 = vunpack.c.h.b16 %v214
    %v881 = vunpack.c.l.b16 %v215
    %v882 = vunpack.c.h.b16 %v215
    %v883 = vunpack.c.l.b16 %v216
    %v884 = vunpack.c.h.b16 %v216
    %v885 = vunpack.c.l.b16 %v217
    %v886 = vunpack.c.h.b16 %v217
    %v887 = vunpack.c.l.b16 %v218
    %v888 = vunpack.c.h.b16 %v218
    %v889 = vunpack.c.l.b16 %v219
    %v890 = vunpack.c.h.b16 %v219
    %v891 = vunpack.c.l.b16 %v220
    %v892 = vunpack.c.h.b16 %v220
    %v893 = vunpack.c.l.b16 %v221
    %v894 = vunpack.c.h.b16 %v221
    %v895 = vunpack.c.l.b16 %v222
    %v896 = vunpack.c.h.b16 %v222
    %v897 = vunpack.c.l.b16 %v223
    %v898 = vunpack.c.h.b16 %v223
    %v899 = vunpack.c.l.b16 %v224
    %v900 = vunpack.c.h.b16 %v224
    %v901 = vpack.c.b16 %v777, %v773
    %v902 = vpack.c.b16 %v778, %v774
    %v903 = vpack.c.b16 %v779, %v775
    %v904 = vpack.c.b16 %v780, %v776
    %v905 = vpack.c.b16 %v785, %v781
    %v906 = vpack.c.b16 %v786, %v782
    %v907 = vpack.c.b16 %v787, %v783
    %v908 = vpack.c.b16 %v788, %v784
    %v909 = vpack.c.b16 %v793, %v789
    %v910 = vpack.c.b16 %v794, %v790
    %v911 = vpack.c.b16 %v795, %v791
    %v912 = vpack.c.b16 %v796, %v792
    %v913 = vpack.c.b16 %v801, %v797
    %v914 = vpack.c.b16 %v802, %v798
    %v915 = vpack.c.b16 %v803, %v799
    %v916 = vpack.c.b16 %v804, %v800
    %v917 = vpack.c.b16 %v809, %v805
    %v918 = vpack.c.b16 %v810, %v806
    %v919 = vpack.c.b16 %v811, %v807
    %v920 = vpack.c.b16 %v812, %v808
    %v921 = vpack.c.b16 %v817, %v813
    %v922 = vpack.c.b16 %v818, %v814
    %v923 = vpack.c.b16 %v819, %v815
    %v924 = vpack.c.b16 %v820, %v816
    %v925 = vpack.c.b16 %v825, %v821
    %v926 = vpack.c.b16 %v826, %v822
    %v927 = vpack.c.b16 %v827, %v823
    %v928 = vpack.c.b16 %v828, %v824
    %v929 = vpack.c.b16 %v833, %v829
    %v930 = vpack.c.b16 %v834, %v830
    %v931 = vpack.c.b16 %v835, %v831
    %v932 = vpack.c.b16 %v836, %v832
    %v933 = vpack.c.b16 %v841, %v837
    %v934 = vpack.c.b16 %v842, %v838
    %v935 = vpack.c.b16 %v843, %v839
    %v936 = vpack.c.b16 %v844, %v840
    %v937 = vpack.c.b16 %v849, %v845
    %v938 = vpack.c.b16 %v850, %v846
    %v939 = vpack.c.b16 %v851, %v847
    %v940 = vpack.c.b16 %v852, %v848
    %v941 = vpack.c.b16 %v857, %v853
    %v942 = vpack.c.b16 %v858, %v854
    %v943 = vpack.c.b16 %v859, %v855
    %v944 = vpack.c.b16 %v860, %v856
    %v945 = vpack.c.b16 %v865, %v861
    %v946 = vpack.c.b16 %v866, %v862
    %v947 = vpack.c.b16 %v867, %v863
    %v948 = vpack.c.b16 %v868, %v864
    %v949 = vpack.c.b16 %v873, %v869
    %v950 = vpack.c.b16 %v874, %v870
    %v951 = vpack.c.b16 %v875, %v871
    %v952 = vpack.c.b16 %v876, %v872
    %v953 = vpack.c.b16 %v881, %v877
    %v954 = vpack.c.b16 %v882, %v878
    %v955 = vpack.c.b16 %v883, %v879
    %v956 = vpack.c.b16 %v884, %v880
    %v957 = vpack.c.b16 %v889, %v885
    %v958 = vpack.c.b16 %v890, %v886
    %v959 = vpack.c.b16 %v891, %v887
    %v960 = vpack.c.b16 %v892, %v888
    %v961 = vpack.c.b16 %v897, %v893
    %v962 = vpack.c.b16 %v898, %v894
    %v963 = vpack.c.b16 %v899, %v895
    %v964 = vpack.c.b16 %v900, %v896
    %v1030 = vperm.slane %v225, 0
    %v1031 = vperm.slane %v225, 1
    %v1032 = vperm.slane %v225, 2
    %v1033 = vperm.slane %v225, 3
    %1038 = vmatpush.bf16.msra.mxu0 %v929
    %1039 = vmatpush.bf16.msra.mxu0 %v925
    %1040 = vmatpush.bf16.msra.mxu0 %v921
    %1041 = vmatpush.bf16.msra.mxu0 %v917
    %1042 = vmatpush.bf16.msra.mxu0 %v913
    %1043 = vmatpush.bf16.msra.mxu0 %v909
    %1044 = vmatpush.bf16.msra.mxu0 %v905
    %1045 = vmatpush.bf16.msra.mxu0 %v901
    %1046 = vmatmul.bf16.gmra.mxu0 %v708
    %v1047 = vpop.f32.mrf.mxu0
    %v1048 = vadd.f32 %v1030, %v1047
    %v1049 = vpop.f32.mrf.mxu0
    %1050 = vdwg.mxu0
    %1051 = vmatpush.bf16.msra.mxu0 %v961
    %1052 = vmatpush.bf16.msra.mxu0 %v957
    %1053 = vmatpush.bf16.msra.mxu0 %v953
    %1054 = vmatpush.bf16.msra.mxu0 %v949
    %1055 = vmatpush.bf16.msra.mxu0 %v945
    %1056 = vmatpush.bf16.msra.mxu0 %v941
    %1057 = vmatpush.bf16.msra.mxu0 %v937
    %1058 = vmatpush.bf16.msra.mxu0 %v933
    %1059 = vmatmul.bf16.gmra.mxu0 %v229
    %v1060 = vpop.f32.mrf.mxu0
    %v1061 = vadd.f32 %v1048, %v1060
    %v1062 = vpop.f32.mrf.mxu0
    %1063 = vdwg.mxu0
    %1064 = vmatpush.bf16.msra.mxu0 %v930
    %1065 = vmatpush.bf16.msra.mxu0 %v926
    %1066 = vmatpush.bf16.msra.mxu0 %v922
    %1067 = vmatpush.bf16.msra.mxu0 %v918
    %1068 = vmatpush.bf16.msra.mxu0 %v914
    %1069 = vmatpush.bf16.msra.mxu0 %v910
    %1070 = vmatpush.bf16.msra.mxu0 %v906
    %1071 = vmatpush.bf16.msra.mxu0 %v902
    %1072 = vmatmul.bf16.gmra.mxu0 %v708
    %v1073 = vpop.f32.mrf.mxu0
    %v1074 = vadd.f32 %v1031, %v1073
    %v1075 = vpop.f32.mrf.mxu0
    %1076 = vdwg.mxu0
    %1077 = vmatpush.bf16.msra.mxu0 %v962
    %1078 = vmatpush.bf16.msra.mxu0 %v958
    %1079 = vmatpush.bf16.msra.mxu0 %v954
    %1080 = vmatpush.bf16.msra.mxu0 %v950
    %1081 = vmatpush.bf16.msra.mxu0 %v946
    %1082 = vmatpush.bf16.msra.mxu0 %v942
    %1083 = vmatpush.bf16.msra.mxu0 %v938
    %1084 = vmatpush.bf16.msra.mxu0 %v934
    %1085 = vmatmul.bf16.gmra.mxu0 %v229
    %v1086 = vpop.f32.mrf.mxu0
    %v1087 = vadd.f32 %v1074, %v1086
    %v1088 = vpop.f32.mrf.mxu0
    %1089 = vdwg.mxu0
    %1090 = vmatpush.bf16.msra.mxu0 %v931
    %1091 = vmatpush.bf16.msra.mxu0 %v927
    %1092 = vmatpush.bf16.msra.mxu0 %v923
    %1093 = vmatpush.bf16.msra.mxu0 %v919
    %1094 = vmatpush.bf16.msra.mxu0 %v915
    %1095 = vmatpush.bf16.msra.mxu0 %v911
    %1096 = vmatpush.bf16.msra.mxu0 %v907
    %1097 = vmatpush.bf16.msra.mxu0 %v903
    %1098 = vmatmul.bf16.gmra.mxu0 %v708
    %v1099 = vpop.f32.mrf.mxu0
    %v1100 = vadd.f32 %v1032, %v1099
    %v1101 = vpop.f32.mrf.mxu0
    %1102 = vdwg.mxu0
    %1103 = vmatpush.bf16.msra.mxu0 %v963
    %1104 = vmatpush.bf16.msra.mxu0 %v959
    %1105 = vmatpush.bf16.msra.mxu0 %v955
    %1106 = vmatpush.bf16.msra.mxu0 %v951
    %1107 = vmatpush.bf16.msra.mxu0 %v947
    %1108 = vmatpush.bf16.msra.mxu0 %v943
    %1109 = vmatpush.bf16.msra.mxu0 %v939
    %1110 = vmatpush.bf16.msra.mxu0 %v935
    %1111 = vmatmul.bf16.gmra.mxu0 %v229
    %v1112 = vpop.f32.mrf.mxu0
    %v1113 = vadd.f32 %v1100, %v1112
    %v1114 = vpop.f32.mrf.mxu0
    %1115 = vdwg.mxu0
    %1116 = vmatpush.bf16.msra.mxu0 %v932
    %1117 = vmatpush.bf16.msra.mxu0 %v928
    %1118 = vmatpush.bf16.msra.mxu0 %v924
    %1119 = vmatpush.bf16.msra.mxu0 %v920
    %1120 = vmatpush.bf16.msra.mxu0 %v916
    %1121 = vmatpush.bf16.msra.mxu0 %v912
    %1122 = vmatpush.bf16.msra.mxu0 %v908
    %1123 = vmatpush.bf16.msra.mxu0 %v904
    %1124 = vmatmul.bf16.gmra.mxu0 %v708
    %v1125 = vpop.f32.mrf.mxu0
    %v1126 = vadd.f32 %v1033, %v1125
    %v1127 = vpop.f32.mrf.mxu0
    %1128 = vdwg.mxu0
    %1129 = vmatpush.bf16.msra.mxu0 %v964
    %1130 = vmatpush.bf16.msra.mxu0 %v960
    %1131 = vmatpush.bf16.msra.mxu0 %v956
    %1132 = vmatpush.bf16.msra.mxu0 %v952
    %1133 = vmatpush.bf16.msra.mxu0 %v948
    %1134 = vmatpush.bf16.msra.mxu0 %v944
    %1135 = vmatpush.bf16.msra.mxu0 %v940
    %1136 = vmatpush.bf16.msra.mxu0 %v936
    %1137 = vmatmul.bf16.gmra.mxu0 %v229
    %v1138 = vpop.f32.mrf.mxu0
    %v1139 = vadd.f32 %v1126, %v1138
    %v1140 = vpop.f32.mrf.mxu0
    %1141 = vdwg.mxu0
    %v1142 = vxor.u32 %v1061, 2147483648
    %v1143 = vmul.f32 %v1142, 1.442695
    %v1144 = vpow.pop %v1143
    %v1145 = vadd.f32 %v1144, 1.0
    %v1146 = vrcp.pop %v1145
    %v1147 = vmul.f32 %v1145, %v1146
    %v1148 = vsub.f32 1.0, %v1147
    %v1149 = vmul.f32 %v1146, %v1148
    %v1150 = vadd.f32 %v1146, %v1149
    %vm1151 = vweird.f32 %v1145
    %vm1152 = vweird.f32 %v1146
    %vm1153 = vmor %vm1151, %vm1152
    %v1154 = vsel %vm1153, %v1146, %v1150
    %v1155 = vand.u32 2147483647, %v1145
    %vm1156 = vcmp.eq.f32.partialorder %v1155, 8.507059e+37
    %v1157 = vand.u32 %v1145, 2147483648
    %v1158 = vor.u32 1.1754944e-38, %v1157
    %v1159 = vsel %vm1156, %v1158, %v1154
    %v1160 = vmul.f32 1.0, %v1159
    %v1161 = vxor.u32 %v1087, 2147483648
    %v1162 = vmul.f32 %v1161, 1.442695
    %v1163 = vpow.pop %v1162
    %v1164 = vadd.f32 %v1163, 1.0
    %v1165 = vrcp.pop %v1164
    %v1166 = vmul.f32 %v1164, %v1165
    %v1167 = vsub.f32 1.0, %v1166
    %v1168 = vmul.f32 %v1165, %v1167
    %v1169 = vadd.f32 %v1165, %v1168
    %vm1170 = vweird.f32 %v1164
    %vm1171 = vweird.f32 %v1165
    %vm1172 = vmor %vm1170, %vm1171
    %v1173 = vsel %vm1172, %v1165, %v1169
    %v1174 = vand.u32 2147483647, %v1164
    %vm1175 = vcmp.eq.f32.partialorder %v1174, 8.507059e+37
    %v1176 = vand.u32 %v1164, 2147483648
    %v1177 = vor.u32 1.1754944e-38, %v1176
    %v1178 = vsel %vm1175, %v1177, %v1173
    %v1179 = vmul.f32 1.0, %v1178
    %v1180 = vmul.f32 %v1160, %v1139
    %v1181 = vadd.f32 %v1113, %v1180
    %v1182 = vtanh.pop %v1181
    %v1183 = vsub.f32 1.0, %v1179
    %v1184 = vmul.f32 %v1183, %v1182
    %v1185 = vmul.f32 %v1179, 0.0
    %v1186 = vadd.f32 %v1184, %v1185
    %1187 = vst [vmem:[#allocation12] sm:$0x1] %v707
    %1188 = vst [vmem:[#allocation2 + $0x7] sm:$0x1] %v1186
    %v1189 = vld [vmem:[#allocation3 + $0x1] sm:$0x1]
    %v1190 = vld [vmem:[#allocation3 + $0x6] sm:$0x1]
    %v1191 = vpack.c.bf16 %v1189, %v1189
    %v1192 = vpack.c.bf16 %v707, %v707
    %1193 = vmatpush.bf16.msra.mxu0 %v450
    %1194 = vmatpush.bf16.msra.mxu0 %v446
    %1195 = vmatpush.bf16.msra.mxu0 %v442
    %1196 = vmatpush.bf16.msra.mxu0 %v438
    %1197 = vmatpush.bf16.msra.mxu0 %v434
    %1198 = vmatpush.bf16.msra.mxu0 %v430
    %1199 = vmatpush.bf16.msra.mxu0 %v426
    %1200 = vmatpush.bf16.msra.mxu0 %v422
    %1201 = vmatmul.bf16.gmra.mxu0 %v1191
    %v1202 = vpop.f32.mrf.mxu0
    %v1203 = vadd.f32 %v551, %v1202
    %v1204 = vpop.f32.mrf.mxu0
    %1205 = vdwg.mxu0
    %1206 = vmatpush.bf16.msra.mxu0 %v482
    %1207 = vmatpush.bf16.msra.mxu0 %v478
    %1208 = vmatpush.bf16.msra.mxu0 %v474
    %1209 = vmatpush.bf16.msra.mxu0 %v470
    %1210 = vmatpush.bf16.msra.mxu0 %v466
    %1211 = vmatpush.bf16.msra.mxu0 %v462
    %1212 = vmatpush.bf16.msra.mxu0 %v458
    %1213 = vmatpush.bf16.msra.mxu0 %v454
    %1214 = vmatmul.bf16.gmra.mxu0 %v1192
    %v1215 = vpop.f32.mrf.mxu0
    %v1216 = vadd.f32 %v1203, %v1215
    %v1217 = vpop.f32.mrf.mxu0
    %1218 = vdwg.mxu0
    %1219 = vmatpush.bf16.msra.mxu0 %v451
    %1220 = vmatpush.bf16.msra.mxu0 %v447
    %1221 = vmatpush.bf16.msra.mxu0 %v443
    %1222 = vmatpush.bf16.msra.mxu0 %v439
    %1223 = vmatpush.bf16.msra.mxu0 %v435
    %1224 = vmatpush.bf16.msra.mxu0 %v431
    %1225 = vmatpush.bf16.msra.mxu0 %v427
    %1226 = vmatpush.bf16.msra.mxu0 %v423
    %1227 = vmatmul.bf16.gmra.mxu0 %v1191
    %v1228 = vpop.f32.mrf.mxu0
    %v1229 = vadd.f32 %v552, %v1228
    %v1230 = vpop.f32.mrf.mxu0
    %1231 = vdwg.mxu0
    %1232 = vmatpush.bf16.msra.mxu0 %v483
    %1233 = vmatpush.bf16.msra.mxu0 %v479
    %1234 = vmatpush.bf16.msra.mxu0 %v475
    %1235 = vmatpush.bf16.msra.mxu0 %v471
    %1236 = vmatpush.bf16.msra.mxu0 %v467
    %1237 = vmatpush.bf16.msra.mxu0 %v463
    %1238 = vmatpush.bf16.msra.mxu0 %v459
    %1239 = vmatpush.bf16.msra.mxu0 %v455
    %1240 = vmatmul.bf16.gmra.mxu0 %v1192
    %v1241 = vpop.f32.mrf.mxu0
    %v1242 = vadd.f32 %v1229, %v1241
    %v1243 = vpop.f32.mrf.mxu0
    %1244 = vdwg.mxu0
    %1245 = vmatpush.bf16.msra.mxu0 %v452
    %1246 = vmatpush.bf16.msra.mxu0 %v448
    %1247 = vmatpush.bf16.msra.mxu0 %v444
    %1248 = vmatpush.bf16.msra.mxu0 %v440
    %1249 = vmatpush.bf16.msra.mxu0 %v436
    %1250 = vmatpush.bf16.msra.mxu0 %v432
    %1251 = vmatpush.bf16.msra.mxu0 %v428
    %1252 = vmatpush.bf16.msra.mxu0 %v424
    %1253 = vmatmul.bf16.gmra.mxu0 %v1191
    %v1254 = vpop.f32.mrf.mxu0
    %v1255 = vadd.f32 %v553, %v1254
    %v1256 = vpop.f32.mrf.mxu0
    %1257 = vdwg.mxu0
    %1258 = vmatpush.bf16.msra.mxu0 %v484
    %1259 = vmatpush.bf16.msra.mxu0 %v480
    %1260 = vmatpush.bf16.msra.mxu0 %v476
    %1261 = vmatpush.bf16.msra.mxu0 %v472
    %1262 = vmatpush.bf16.msra.mxu0 %v468
    %1263 = vmatpush.bf16.msra.mxu0 %v464
    %1264 = vmatpush.bf16.msra.mxu0 %v460
    %1265 = vmatpush.bf16.msra.mxu0 %v456
    %1266 = vmatmul.bf16.gmra.mxu0 %v1192
    %v1267 = vpop.f32.mrf.mxu0
    %v1268 = vadd.f32 %v1255, %v1267
    %v1269 = vpop.f32.mrf.mxu0
    %1270 = vdwg.mxu0
    %1271 = vmatpush.bf16.msra.mxu0 %v453
    %1272 = vmatpush.bf16.msra.mxu0 %v449
    %1273 = vmatpush.bf16.msra.mxu0 %v445
    %1274 = vmatpush.bf16.msra.mxu0 %v441
    %1275 = vmatpush.bf16.msra.mxu0 %v437
    %1276 = vmatpush.bf16.msra.mxu0 %v433
    %1277 = vmatpush.bf16.msra.mxu0 %v429
    %1278 = vmatpush.bf16.msra.mxu0 %v425
    %1279 = vmatmul.bf16.gmra.mxu0 %v1191
    %v1280 = vpop.f32.mrf.mxu0
    %v1281 = vadd.f32 %v554, %v1280
    %v1282 = vpop.f32.mrf.mxu0
    %1283 = vdwg.mxu0
    %1284 = vmatpush.bf16.msra.mxu0 %v485
    %1285 = vmatpush.bf16.msra.mxu0 %v481
    %1286 = vmatpush.bf16.msra.mxu0 %v477
    %1287 = vmatpush.bf16.msra.mxu0 %v473
    %1288 = vmatpush.bf16.msra.mxu0 %v469
    %1289 = vmatpush.bf16.msra.mxu0 %v465
    %1290 = vmatpush.bf16.msra.mxu0 %v461
    %1291 = vmatpush.bf16.msra.mxu0 %v457
    %1292 = vmatmul.bf16.gmra.mxu0 %v1192
    %v1293 = vpop.f32.mrf.mxu0
    %v1294 = vadd.f32 %v1281, %v1293
    %v1295 = vpop.f32.mrf.mxu0
    %1296 = vdwg.mxu0
    %v1297 = vxor.u32 %v1216, 2147483648
    %v1298 = vmul.f32 %v1297, 1.442695
    %v1299 = vpow.pop %v1298
    %v1300 = vadd.f32 %v1299, 1.0
    %v1301 = vrcp.pop %v1300
    %v1302 = vmul.f32 %v1300, %v1301
    %v1303 = vsub.f32 1.0, %v1302
    %v1304 = vmul.f32 %v1301, %v1303
    %v1305 = vadd.f32 %v1301, %v1304
    %vm1306 = vweird.f32 %v1300
    %vm1307 = vweird.f32 %v1301
    %vm1308 = vmor %vm1306, %vm1307
    %v1309 = vsel %vm1308, %v1301, %v1305
    %v1310 = vand.u32 2147483647, %v1300
    %vm1311 = vcmp.eq.f32.partialorder %v1310, 8.507059e+37
    %v1312 = vand.u32 %v1300, 2147483648
    %v1313 = vor.u32 1.1754944e-38, %v1312
    %v1314 = vsel %vm1311, %v1313, %v1309
    %v1315 = vmul.f32 1.0, %v1314
    %v1316 = vxor.u32 %v1242, 2147483648
    %v1317 = vmul.f32 %v1316, 1.442695
    %v1318 = vpow.pop %v1317
    %v1319 = vadd.f32 %v1318, 1.0
    %v1320 = vrcp.pop %v1319
    %v1321 = vmul.f32 %v1319, %v1320
    %v1322 = vsub.f32 1.0, %v1321
    %v1323 = vmul.f32 %v1320, %v1322
    %v1324 = vadd.f32 %v1320, %v1323
    %vm1325 = vweird.f32 %v1319
    %vm1326 = vweird.f32 %v1320
    %vm1327 = vmor %vm1325, %vm1326
    %v1328 = vsel %vm1327, %v1320, %v1324
    %v1329 = vand.u32 2147483647, %v1319
    %vm1330 = vcmp.eq.f32.partialorder %v1329, 8.507059e+37
    %v1331 = vand.u32 %v1319, 2147483648
    %v1332 = vor.u32 1.1754944e-38, %v1331
    %v1333 = vsel %vm1330, %v1332, %v1328
    %v1334 = vmul.f32 1.0, %v1333
    %v1335 = vmul.f32 %v1315, %v1294
    %v1336 = vadd.f32 %v1268, %v1335
    %v1337 = vtanh.pop %v1336
    %v1338 = vsub.f32 1.0, %v1334
    %v1339 = vmul.f32 %v1338, %v1337
    %v1340 = vmul.f32 %v1334, %v707
    %v1341 = vadd.f32 %v1339, %v1340
    %v1342 = vpack.c.bf16 %v1190, %v1190
    %v1343 = vpack.c.bf16 %v1186, %v1186
    %1344 = vmatpush.bf16.msra.mxu0 %v929
    %1345 = vmatpush.bf16.msra.mxu0 %v925
    %1346 = vmatpush.bf16.msra.mxu0 %v921
    %1347 = vmatpush.bf16.msra.mxu0 %v917
    %1348 = vmatpush.bf16.msra.mxu0 %v913
    %1349 = vmatpush.bf16.msra.mxu0 %v909
    %1350 = vmatpush.bf16.msra.mxu0 %v905
    %1351 = vmatpush.bf16.msra.mxu0 %v901
    %1352 = vmatmul.bf16.gmra.mxu0 %v1342
    %v1353 = vpop.f32.mrf.mxu0
    %v1354 = vadd.f32 %v1030, %v1353
    %v1355 = vpop.f32.mrf.mxu0
    %1356 = vdwg.mxu0
    %1357 = vmatpush.bf16.msra.mxu0 %v961
    %1358 = vmatpush.bf16.msra.mxu0 %v957
    %1359 = vmatpush.bf16.msra.mxu0 %v953
    %1360 = vmatpush.bf16.msra.mxu0 %v949
    %1361 = vmatpush.bf16.msra.mxu0 %v945
    %1362 = vmatpush.bf16.msra.mxu0 %v941
    %1363 = vmatpush.bf16.msra.mxu0 %v937
    %1364 = vmatpush.bf16.msra.mxu0 %v933
    %1365 = vmatmul.bf16.gmra.mxu0 %v1343
    %v1366 = vpop.f32.mrf.mxu0
    %v1367 = vadd.f32 %v1354, %v1366
    %v1368 = vpop.f32.mrf.mxu0
    %1369 = vdwg.mxu0
    %1370 = vmatpush.bf16.msra.mxu0 %v930
    %1371 = vmatpush.bf16.msra.mxu0 %v926
    %1372 = vmatpush.bf16.msra.mxu0 %v922
    %1373 = vmatpush.bf16.msra.mxu0 %v918
    %1374 = vmatpush.bf16.msra.mxu0 %v914
    %1375 = vmatpush.bf16.msra.mxu0 %v910
    %1376 = vmatpush.bf16.msra.mxu0 %v906
    %1377 = vmatpush.bf16.msra.mxu0 %v902
    %1378 = vmatmul.bf16.gmra.mxu0 %v1342
    %v1379 = vpop.f32.mrf.mxu0
    %v1380 = vadd.f32 %v1031, %v1379
    %v1381 = vpop.f32.mrf.mxu0
    %1382 = vdwg.mxu0
    %1383 = vmatpush.bf16.msra.mxu0 %v962
    %1384 = vmatpush.bf16.msra.mxu0 %v958
    %1385 = vmatpush.bf16.msra.mxu0 %v954
    %1386 = vmatpush.bf16.msra.mxu0 %v950
    %1387 = vmatpush.bf16.msra.mxu0 %v946
    %1388 = vmatpush.bf16.msra.mxu0 %v942
    %1389 = vmatpush.bf16.msra.mxu0 %v938
    %1390 = vmatpush.bf16.msra.mxu0 %v934
    %1391 = vmatmul.bf16.gmra.mxu0 %v1343
    %v1392 = vpop.f32.mrf.mxu0
    %v1393 = vadd.f32 %v1380, %v1392
    %v1394 = vpop.f32.mrf.mxu0
    %1395 = vdwg.mxu0
    %1396 = vmatpush.bf16.msra.mxu0 %v931
    %1397 = vmatpush.bf16.msra.mxu0 %v927
    %1398 = vmatpush.bf16.msra.mxu0 %v923
    %1399 = vmatpush.bf16.msra.mxu0 %v919
    %1400 = vmatpush.bf16.msra.mxu0 %v915
    %1401 = vmatpush.bf16.msra.mxu0 %v911
    %1402 = vmatpush.bf16.msra.mxu0 %v907
    %1403 = vmatpush.bf16.msra.mxu0 %v903
    %1404 = vmatmul.bf16.gmra.mxu0 %v1342
    %v1405 = vpop.f32.mrf.mxu0
    %v1406 = vadd.f32 %v1032, %v1405
    %v1407 = vpop.f32.mrf.mxu0
    %1408 = vdwg.mxu0
    %1409 = vmatpush.bf16.msra.mxu0 %v963
    %1410 = vmatpush.bf16.msra.mxu0 %v959
    %1411 = vmatpush.bf16.msra.mxu0 %v955
    %1412 = vmatpush.bf16.msra.mxu0 %v951
    %1413 = vmatpush.bf16.msra.mxu0 %v947
    %1414 = vmatpush.bf16.msra.mxu0 %v943
    %1415 = vmatpush.bf16.msra.mxu0 %v939
    %1416 = vmatpush.bf16.msra.mxu0 %v935
    %1417 = vmatmul.bf16.gmra.mxu0 %v1343
    %v1418 = vpop.f32.mrf.mxu0
    %v1419 = vadd.f32 %v1406, %v1418
    %v1420 = vpop.f32.mrf.mxu0
    %1421 = vdwg.mxu0
    %1422 = vmatpush.bf16.msra.mxu0 %v932
    %1423 = vmatpush.bf16.msra.mxu0 %v928
    %1424 = vmatpush.bf16.msra.mxu0 %v924
    %1425 = vmatpush.bf16.msra.mxu0 %v920
    %1426 = vmatpush.bf16.msra.mxu0 %v916
    %1427 = vmatpush.bf16.msra.mxu0 %v912
    %1428 = vmatpush.bf16.msra.mxu0 %v908
    %1429 = vmatpush.bf16.msra.mxu0 %v904
    %1430 = vmatmul.bf16.gmra.mxu0 %v1342
    %v1431 = vpop.f32.mrf.mxu0
    %v1432 = vadd.f32 %v1033, %v1431
    %v1433 = vpop.f32.mrf.mxu0
    %1434 = vdwg.mxu0
    %1435 = vmatpush.bf16.msra.mxu0 %v964
    %1436 = vmatpush.bf16.msra.mxu0 %v960
    %1437 = vmatpush.bf16.msra.mxu0 %v956
    %1438 = vmatpush.bf16.msra.mxu0 %v952
    %1439 = vmatpush.bf16.msra.mxu0 %v948
    %1440 = vmatpush.bf16.msra.mxu0 %v944
    %1441 = vmatpush.bf16.msra.mxu0 %v940
    %1442 = vmatpush.bf16.msra.mxu0 %v936
    %1443 = vmatmul.bf16.gmra.mxu0 %v1343
    %v1444 = vpop.f32.mrf.mxu0
    %v1445 = vadd.f32 %v1432, %v1444
    %v1446 = vpop.f32.mrf.mxu0
    %1447 = vdwg.mxu0
    %v1448 = vxor.u32 %v1367, 2147483648
    %v1449 = vmul.f32 %v1448, 1.442695
    %v1450 = vpow.pop %v1449
    %v1451 = vadd.f32 %v1450, 1.0
    %v1452 = vrcp.pop %v1451
    %v1453 = vmul.f32 %v1451, %v1452
    %v1454 = vsub.f32 1.0, %v1453
    %v1455 = vmul.f32 %v1452, %v1454
    %v1456 = vadd.f32 %v1452, %v1455
    %vm1457 = vweird.f32 %v1451
    %vm1458 = vweird.f32 %v1452
    %vm1459 = vmor %vm1457, %vm1458
    %v1460 = vsel %vm1459, %v1452, %v1456
    %v1461 = vand.u32 2147483647, %v1451
    %vm1462 = vcmp.eq.f32.partialorder %v1461, 8.507059e+37
    %v1463 = vand.u32 %v1451, 2147483648
    %v1464 = vor.u32 1.1754944e-38, %v1463
    %v1465 = vsel %vm1462, %v1464, %v1460
    %v1466 = vmul.f32 1.0, %v1465
    %v1467 = vxor.u32 %v1393, 2147483648
    %v1468 = vmul.f32 %v1467, 1.442695
    %v1469 = vpow.pop %v1468
    %v1470 = vadd.f32 %v1469, 1.0
    %v1471 = vrcp.pop %v1470
    %v1472 = vmul.f32 %v1470, %v1471
    %v1473 = vsub.f32 1.0, %v1472
    %v1474 = vmul.f32 %v1471, %v1473
    %v1475 = vadd.f32 %v1471, %v1474
    %vm1476 = vweird.f32 %v1470
    %vm1477 = vweird.f32 %v1471
    %vm1478 = vmor %vm1476, %vm1477
    %v1479 = vsel %vm1478, %v1471, %v1475
    %v1480 = vand.u32 2147483647, %v1470
    %vm1481 = vcmp.eq.f32.partialorder %v1480, 8.507059e+37
    %v1482 = vand.u32 %v1470, 2147483648
    %v1483 = vor.u32 1.1754944e-38, %v1482
    %v1484 = vsel %vm1481, %v1483, %v1479
    %v1485 = vmul.f32 1.0, %v1484
    %v1486 = vmul.f32 %v1466, %v1445
    %v1487 = vadd.f32 %v1419, %v1486
    %v1488 = vtanh.pop %v1487
    %v1489 = vsub.f32 1.0, %v1485
    %v1490 = vmul.f32 %v1489, %v1488
    %v1491 = vmul.f32 %v1485, %v1186
    %v1492 = vadd.f32 %v1490, %v1491
    %1493 = vst [vmem:[#allocation12 + $0x1] sm:$0x1] %v1341
    %1494 = vst [vmem:[#allocation2 + $0x6] sm:$0x1] %v1492
    %v1495 = vld [vmem:[#allocation3 + $0x2] sm:$0x1]
    %v1496 = vld [vmem:[#allocation3 + $0x5] sm:$0x1]
    %v1497 = vpack.c.bf16 %v1495, %v1495
    %v1498 = vpack.c.bf16 %v1341, %v1341
    %1499 = vmatpush.bf16.msra.mxu0 %v450
    %1500 = vmatpush.bf16.msra.mxu0 %v446
    %1501 = vmatpush.bf16.msra.mxu0 %v442
    %1502 = vmatpush.bf16.msra.mxu0 %v438
    %1503 = vmatpush.bf16.msra.mxu0 %v434
    %1504 = vmatpush.bf16.msra.mxu0 %v430
    %1505 = vmatpush.bf16.msra.mxu0 %v426
    %1506 = vmatpush.bf16.msra.mxu0 %v422
    %1507 = vmatmul.bf16.gmra.mxu0 %v1497
    %v1508 = vpop.f32.mrf.mxu0
    %v1509 = vadd.f32 %v551, %v1508
    %v1510 = vpop.f32.mrf.mxu0
    %1511 = vdwg.mxu0
    %1512 = vmatpush.bf16.msra.mxu0 %v482
    %1513 = vmatpush.bf16.msra.mxu0 %v478
    %1514 = vmatpush.bf16.msra.mxu0 %v474
    %1515 = vmatpush.bf16.msra.mxu0 %v470
    %1516 = vmatpush.bf16.msra.mxu0 %v466
    %1517 = vmatpush.bf16.msra.mxu0 %v462
    %1518 = vmatpush.bf16.msra.mxu0 %v458
    %1519 = vmatpush.bf16.msra.mxu0 %v454
    %1520 = vmatmul.bf16.gmra.mxu0 %v1498
    %v1521 = vpop.f32.mrf.mxu0
    %v1522 = vadd.f32 %v1509, %v1521
    %v1523 = vpop.f32.mrf.mxu0
    %1524 = vdwg.mxu0
    %1525 = vmatpush.bf16.msra.mxu0 %v451
    %1526 = vmatpush.bf16.msra.mxu0 %v447
    %1527 = vmatpush.bf16.msra.mxu0 %v443
    %1528 = vmatpush.bf16.msra.mxu0 %v439
    %1529 = vmatpush.bf16.msra.mxu0 %v435
    %1530 = vmatpush.bf16.msra.mxu0 %v431
    %1531 = vmatpush.bf16.msra.mxu0 %v427
    %1532 = vmatpush.bf16.msra.mxu0 %v423
    %1533 = vmatmul.bf16.gmra.mxu0 %v1497
    %v1534 = vpop.f32.mrf.mxu0
    %v1535 = vadd.f32 %v552, %v1534
    %v1536 = vpop.f32.mrf.mxu0
    %1537 = vdwg.mxu0
    %1538 = vmatpush.bf16.msra.mxu0 %v483
    %1539 = vmatpush.bf16.msra.mxu0 %v479
    %1540 = vmatpush.bf16.msra.mxu0 %v475
    %1541 = vmatpush.bf16.msra.mxu0 %v471
    %1542 = vmatpush.bf16.msra.mxu0 %v467
    %1543 = vmatpush.bf16.msra.mxu0 %v463
    %1544 = vmatpush.bf16.msra.mxu0 %v459
    %1545 = vmatpush.bf16.msra.mxu0 %v455
    %1546 = vmatmul.bf16.gmra.mxu0 %v1498
    %v1547 = vpop.f32.mrf.mxu0
    %v1548 = vadd.f32 %v1535, %v1547
    %v1549 = vpop.f32.mrf.mxu0
    %1550 = vdwg.mxu0
    %1551 = vmatpush.bf16.msra.mxu0 %v452
    %1552 = vmatpush.bf16.msra.mxu0 %v448
    %1553 = vmatpush.bf16.msra.mxu0 %v444
    %1554 = vmatpush.bf16.msra.mxu0 %v440
    %1555 = vmatpush.bf16.msra.mxu0 %v436
    %1556 = vmatpush.bf16.msra.mxu0 %v432
    %1557 = vmatpush.bf16.msra.mxu0 %v428
    %1558 = vmatpush.bf16.msra.mxu0 %v424
    %1559 = vmatmul.bf16.gmra.mxu0 %v1497
    %v1560 = vpop.f32.mrf.mxu0
    %v1561 = vadd.f32 %v553, %v1560
    %v1562 = vpop.f32.mrf.mxu0
    %1563 = vdwg.mxu0
    %1564 = vmatpush.bf16.msra.mxu0 %v484
    %1565 = vmatpush.bf16.msra.mxu0 %v480
    %1566 = vmatpush.bf16.msra.mxu0 %v476
    %1567 = vmatpush.bf16.msra.mxu0 %v472
    %1568 = vmatpush.bf16.msra.mxu0 %v468
    %1569 = vmatpush.bf16.msra.mxu0 %v464
    %1570 = vmatpush.bf16.msra.mxu0 %v460
    %1571 = vmatpush.bf16.msra.mxu0 %v456
    %1572 = vmatmul.bf16.gmra.mxu0 %v1498
    %v1573 = vpop.f32.mrf.mxu0
    %v1574 = vadd.f32 %v1561, %v1573
    %v1575 = vpop.f32.mrf.mxu0
    %1576 = vdwg.mxu0
    %1577 = vmatpush.bf16.msra.mxu0 %v453
    %1578 = vmatpush.bf16.msra.mxu0 %v449
    %1579 = vmatpush.bf16.msra.mxu0 %v445
    %1580 = vmatpush.bf16.msra.mxu0 %v441
    %1581 = vmatpush.bf16.msra.mxu0 %v437
    %1582 = vmatpush.bf16.msra.mxu0 %v433
    %1583 = vmatpush.bf16.msra.mxu0 %v429
    %1584 = vmatpush.bf16.msra.mxu0 %v425
    %1585 = vmatmul.bf16.gmra.mxu0 %v1497
    %v1586 = vpop.f32.mrf.mxu0
    %v1587 = vadd.f32 %v554, %v1586
    %v1588 = vpop.f32.mrf.mxu0
    %1589 = vdwg.mxu0
    %1590 = vmatpush.bf16.msra.mxu0 %v485
    %1591 = vmatpush.bf16.msra.mxu0 %v481
    %1592 = vmatpush.bf16.msra.mxu0 %v477
    %1593 = vmatpush.bf16.msra.mxu0 %v473
    %1594 = vmatpush.bf16.msra.mxu0 %v469
    %1595 = vmatpush.bf16.msra.mxu0 %v465
    %1596 = vmatpush.bf16.msra.mxu0 %v461
    %1597 = vmatpush.bf16.msra.mxu0 %v457
    %1598 = vmatmul.bf16.gmra.mxu0 %v1498
    %v1599 = vpop.f32.mrf.mxu0
    %v1600 = vadd.f32 %v1587, %v1599
    %v1601 = vpop.f32.mrf.mxu0
    %1602 = vdwg.mxu0
    %v1603 = vxor.u32 %v1522, 2147483648
    %v1604 = vmul.f32 %v1603, 1.442695
    %v1605 = vpow.pop %v1604
    %v1606 = vadd.f32 %v1605, 1.0
    %v1607 = vrcp.pop %v1606
    %v1608 = vmul.f32 %v1606, %v1607
    %v1609 = vsub.f32 1.0, %v1608
    %v1610 = vmul.f32 %v1607, %v1609
    %v1611 = vadd.f32 %v1607, %v1610
    %vm1612 = vweird.f32 %v1606
    %vm1613 = vweird.f32 %v1607
    %vm1614 = vmor %vm1612, %vm1613
    %v1615 = vsel %vm1614, %v1607, %v1611
    %v1616 = vand.u32 2147483647, %v1606
    %vm1617 = vcmp.eq.f32.partialorder %v1616, 8.507059e+37
    %v1618 = vand.u32 %v1606, 2147483648
    %v1619 = vor.u32 1.1754944e-38, %v1618
    %v1620 = vsel %vm1617, %v1619, %v1615
    %v1621 = vmul.f32 1.0, %v1620
    %v1622 = vxor.u32 %v1548, 2147483648
    %v1623 = vmul.f32 %v1622, 1.442695
    %v1624 = vpow.pop %v1623
    %v1625 = vadd.f32 %v1624, 1.0
    %v1626 = vrcp.pop %v1625
    %v1627 = vmul.f32 %v1625, %v1626
    %v1628 = vsub.f32 1.0, %v1627
    %v1629 = vmul.f32 %v1626, %v1628
    %v1630 = vadd.f32 %v1626, %v1629
    %vm1631 = vweird.f32 %v1625
    %vm1632 = vweird.f32 %v1626
    %vm1633 = vmor %vm1631, %vm1632
    %v1634 = vsel %vm1633, %v1626, %v1630
    %v1635 = vand.u32 2147483647, %v1625
    %vm1636 = vcmp.eq.f32.partialorder %v1635, 8.507059e+37
    %v1637 = vand.u32 %v1625, 2147483648
    %v1638 = vor.u32 1.1754944e-38, %v1637
    %v1639 = vsel %vm1636, %v1638, %v1634
    %v1640 = vmul.f32 1.0, %v1639
    %v1641 = vmul.f32 %v1621, %v1600
    %v1642 = vadd.f32 %v1574, %v1641
    %v1643 = vtanh.pop %v1642
    %v1644 = vsub.f32 1.0, %v1640
    %v1645 = vmul.f32 %v1644, %v1643
    %v1646 = vmul.f32 %v1640, %v1341
    %v1647 = vadd.f32 %v1645, %v1646
    %v1648 = vpack.c.bf16 %v1496, %v1496
    %v1649 = vpack.c.bf16 %v1492, %v1492
    %1650 = vmatpush.bf16.msra.mxu0 %v929
    %1651 = vmatpush.bf16.msra.mxu0 %v925
    %1652 = vmatpush.bf16.msra.mxu0 %v921
    %1653 = vmatpush.bf16.msra.mxu0 %v917
    %1654 = vmatpush.bf16.msra.mxu0 %v913
    %1655 = vmatpush.bf16.msra.mxu0 %v909
    %1656 = vmatpush.bf16.msra.mxu0 %v905
    %1657 = vmatpush.bf16.msra.mxu0 %v901
    %1658 = vmatmul.bf16.gmra.mxu0 %v1648
    %v1659 = vpop.f32.mrf.mxu0
    %v1660 = vadd.f32 %v1030, %v1659
    %v1661 = vpop.f32.mrf.mxu0
    %1662 = vdwg.mxu0
    %1663 = vmatpush.bf16.msra.mxu0 %v961
    %1664 = vmatpush.bf16.msra.mxu0 %v957
    %1665 = vmatpush.bf16.msra.mxu0 %v953
    %1666 = vmatpush.bf16.msra.mxu0 %v949
    %1667 = vmatpush.bf16.msra.mxu0 %v945
    %1668 = vmatpush.bf16.msra.mxu0 %v941
    %1669 = vmatpush.bf16.msra.mxu0 %v937
    %1670 = vmatpush.bf16.msra.mxu0 %v933
    %1671 = vmatmul.bf16.gmra.mxu0 %v1649
    %v1672 = vpop.f32.mrf.mxu0
    %v1673 = vadd.f32 %v1660, %v1672
    %v1674 = vpop.f32.mrf.mxu0
    %1675 = vdwg.mxu0
    %1676 = vmatpush.bf16.msra.mxu0 %v930
    %1677 = vmatpush.bf16.msra.mxu0 %v926
    %1678 = vmatpush.bf16.msra.mxu0 %v922
    %1679 = vmatpush.bf16.msra.mxu0 %v918
    %1680 = vmatpush.bf16.msra.mxu0 %v914
    %1681 = vmatpush.bf16.msra.mxu0 %v910
    %1682 = vmatpush.bf16.msra.mxu0 %v906
    %1683 = vmatpush.bf16.msra.mxu0 %v902
    %1684 = vmatmul.bf16.gmra.mxu0 %v1648
    %v1685 = vpop.f32.mrf.mxu0
    %v1686 = vadd.f32 %v1031, %v1685
    %v1687 = vpop.f32.mrf.mxu0
    %1688 = vdwg.mxu0
    %1689 = vmatpush.bf16.msra.mxu0 %v962
    %1690 = vmatpush.bf16.msra.mxu0 %v958
    %1691 = vmatpush.bf16.msra.mxu0 %v954
    %1692 = vmatpush.bf16.msra.mxu0 %v950
    %1693 = vmatpush.bf16.msra.mxu0 %v946
    %1694 = vmatpush.bf16.msra.mxu0 %v942
    %1695 = vmatpush.bf16.msra.mxu0 %v938
    %1696 = vmatpush.bf16.msra.mxu0 %v934
    %1697 = vmatmul.bf16.gmra.mxu0 %v1649
    %v1698 = vpop.f32.mrf.mxu0
    %v1699 = vadd.f32 %v1686, %v1698
    %v1700 = vpop.f32.mrf.mxu0
    %1701 = vdwg.mxu0
    %1702 = vmatpush.bf16.msra.mxu0 %v931
    %1703 = vmatpush.bf16.msra.mxu0 %v927
    %1704 = vmatpush.bf16.msra.mxu0 %v923
    %1705 = vmatpush.bf16.msra.mxu0 %v919
    %1706 = vmatpush.bf16.msra.mxu0 %v915
    %1707 = vmatpush.bf16.msra.mxu0 %v911
    %1708 = vmatpush.bf16.msra.mxu0 %v907
    %1709 = vmatpush.bf16.msra.mxu0 %v903
    %1710 = vmatmul.bf16.gmra.mxu0 %v1648
    %v1711 = vpop.f32.mrf.mxu0
    %v1712 = vadd.f32 %v1032, %v1711
    %v1713 = vpop.f32.mrf.mxu0
    %1714 = vdwg.mxu0
    %1715 = vmatpush.bf16.msra.mxu0 %v963
    %1716 = vmatpush.bf16.msra.mxu0 %v959
    %1717 = vmatpush.bf16.msra.mxu0 %v955
    %1718 = vmatpush.bf16.msra.mxu0 %v951
    %1719 = vmatpush.bf16.msra.mxu0 %v947
    %1720 = vmatpush.bf16.msra.mxu0 %v943
    %1721 = vmatpush.bf16.msra.mxu0 %v939
    %1722 = vmatpush.bf16.msra.mxu0 %v935
    %1723 = vmatmul.bf16.gmra.mxu0 %v1649
    %v1724 = vpop.f32.mrf.mxu0
    %v1725 = vadd.f32 %v1712, %v1724
    %v1726 = vpop.f32.mrf.mxu0
    %1727 = vdwg.mxu0
    %1728 = vmatpush.bf16.msra.mxu0 %v932
    %1729 = vmatpush.bf16.msra.mxu0 %v928
    %1730 = vmatpush.bf16.msra.mxu0 %v924
    %1731 = vmatpush.bf16.msra.mxu0 %v920
    %1732 = vmatpush.bf16.msra.mxu0 %v916
    %1733 = vmatpush.bf16.msra.mxu0 %v912
    %1734 = vmatpush.bf16.msra.mxu0 %v908
    %1735 = vmatpush.bf16.msra.mxu0 %v904
    %1736 = vmatmul.bf16.gmra.mxu0 %v1648
    %v1737 = vpop.f32.mrf.mxu0
    %v1738 = vadd.f32 %v1033, %v1737
    %v1739 = vpop.f32.mrf.mxu0
    %1740 = vdwg.mxu0
    %1741 = vmatpush.bf16.msra.mxu0 %v964
    %1742 = vmatpush.bf16.msra.mxu0 %v960
    %1743 = vmatpush.bf16.msra.mxu0 %v956
    %1744 = vmatpush.bf16.msra.mxu0 %v952
    %1745 = vmatpush.bf16.msra.mxu0 %v948
    %1746 = vmatpush.bf16.msra.mxu0 %v944
    %1747 = vmatpush.bf16.msra.mxu0 %v940
    %1748 = vmatpush.bf16.msra.mxu0 %v936
    %1749 = vmatmul.bf16.gmra.mxu0 %v1649
    %v1750 = vpop.f32.mrf.mxu0
    %v1751 = vadd.f32 %v1738, %v1750
    %v1752 = vpop.f32.mrf.mxu0
    %1753 = vdwg.mxu0
    %v1754 = vxor.u32 %v1673, 2147483648
    %v1755 = vmul.f32 %v1754, 1.442695
    %v1756 = vpow.pop %v1755
    %v1757 = vadd.f32 %v1756, 1.0
    %v1758 = vrcp.pop %v1757
    %v1759 = vmul.f32 %v1757, %v1758
    %v1760 = vsub.f32 1.0, %v1759
    %v1761 = vmul.f32 %v1758, %v1760
    %v1762 = vadd.f32 %v1758, %v1761
    %vm1763 = vweird.f32 %v1757
    %vm1764 = vweird.f32 %v1758
    %vm1765 = vmor %vm1763, %vm1764
    %v1766 = vsel %vm1765, %v1758, %v1762
    %v1767 = vand.u32 2147483647, %v1757
    %vm1768 = vcmp.eq.f32.partialorder %v1767, 8.507059e+37
    %v1769 = vand.u32 %v1757, 2147483648
    %v1770 = vor.u32 1.1754944e-38, %v1769
    %v1771 = vsel %vm1768, %v1770, %v1766
    %v1772 = vmul.f32 1.0, %v1771
    %v1773 = vxor.u32 %v1699, 2147483648
    %v1774 = vmul.f32 %v1773, 1.442695
    %v1775 = vpow.pop %v1774
    %v1776 = vadd.f32 %v1775, 1.0
    %v1777 = vrcp.pop %v1776
    %v1778 = vmul.f32 %v1776, %v1777
    %v1779 = vsub.f32 1.0, %v1778
    %v1780 = vmul.f32 %v1777, %v1779
    %v1781 = vadd.f32 %v1777, %v1780
    %vm1782 = vweird.f32 %v1776
    %vm1783 = vweird.f32 %v1777
    %vm1784 = vmor %vm1782, %vm1783
    %v1785 = vsel %vm1784, %v1777, %v1781
    %v1786 = vand.u32 2147483647, %v1776
    %vm1787 = vcmp.eq.f32.partialorder %v1786, 8.507059e+37
    %v1788 = vand.u32 %v1776, 2147483648
    %v1789 = vor.u32 1.1754944e-38, %v1788
    %v1790 = vsel %vm1787, %v1789, %v1785
    %v1791 = vmul.f32 1.0, %v1790
    %v1792 = vmul.f32 %v1772, %v1751
    %v1793 = vadd.f32 %v1725, %v1792
    %v1794 = vtanh.pop %v1793
    %v1795 = vsub.f32 1.0, %v1791
    %v1796 = vmul.f32 %v1795, %v1794
    %v1797 = vmul.f32 %v1791, %v1492
    %v1798 = vadd.f32 %v1796, %v1797
    %1799 = vst [vmem:[#allocation12 + $0x2] sm:$0x1] %v1647
    %1800 = vst [vmem:[#allocation2 + $0x5] sm:$0x1] %v1798
    %v1801 = vld [vmem:[#allocation3 + $0x3] sm:$0x1]
    %v1802 = vld [vmem:[#allocation3 + $0x4] sm:$0x1]
    %v1803 = vpack.c.bf16 %v1801, %v1801
    %v1804 = vpack.c.bf16 %v1647, %v1647
    %1805 = vmatpush.bf16.msra.mxu0 %v450
    %1806 = vmatpush.bf16.msra.mxu0 %v446
    %1807 = vmatpush.bf16.msra.mxu0 %v442
    %1808 = vmatpush.bf16.msra.mxu0 %v438
    %1809 = vmatpush.bf16.msra.mxu0 %v434
    %1810 = vmatpush.bf16.msra.mxu0 %v430
    %1811 = vmatpush.bf16.msra.mxu0 %v426
    %1812 = vmatpush.bf16.msra.mxu0 %v422
    %1813 = vmatmul.bf16.gmra.mxu0 %v1803
    %v1814 = vpop.f32.mrf.mxu0
    %v1815 = vadd.f32 %v551, %v1814
    %v1816 = vpop.f32.mrf.mxu0
    %1817 = vdwg.mxu0
    %1818 = vmatpush.bf16.msra.mxu0 %v482
    %1819 = vmatpush.bf16.msra.mxu0 %v478
    %1820 = vmatpush.bf16.msra.mxu0 %v474
    %1821 = vmatpush.bf16.msra.mxu0 %v470
    %1822 = vmatpush.bf16.msra.mxu0 %v466
    %1823 = vmatpush.bf16.msra.mxu0 %v462
    %1824 = vmatpush.bf16.msra.mxu0 %v458
    %1825 = vmatpush.bf16.msra.mxu0 %v454
    %1826 = vmatmul.bf16.gmra.mxu0 %v1804
    %v1827 = vpop.f32.mrf.mxu0
    %v1828 = vadd.f32 %v1815, %v1827
    %v1829 = vpop.f32.mrf.mxu0
    %1830 = vdwg.mxu0
    %1831 = vmatpush.bf16.msra.mxu0 %v451
    %1832 = vmatpush.bf16.msra.mxu0 %v447
    %1833 = vmatpush.bf16.msra.mxu0 %v443
    %1834 = vmatpush.bf16.msra.mxu0 %v439
    %1835 = vmatpush.bf16.msra.mxu0 %v435
    %1836 = vmatpush.bf16.msra.mxu0 %v431
    %1837 = vmatpush.bf16.msra.mxu0 %v427
    %1838 = vmatpush.bf16.msra.mxu0 %v423
    %1839 = vmatmul.bf16.gmra.mxu0 %v1803
    %v1840 = vpop.f32.mrf.mxu0
    %v1841 = vadd.f32 %v552, %v1840
    %v1842 = vpop.f32.mrf.mxu0
    %1843 = vdwg.mxu0
    %1844 = vmatpush.bf16.msra.mxu0 %v483
    %1845 = vmatpush.bf16.msra.mxu0 %v479
    %1846 = vmatpush.bf16.msra.mxu0 %v475
    %1847 = vmatpush.bf16.msra.mxu0 %v471
    %1848 = vmatpush.bf16.msra.mxu0 %v467
    %1849 = vmatpush.bf16.msra.mxu0 %v463
    %1850 = vmatpush.bf16.msra.mxu0 %v459
    %1851 = vmatpush.bf16.msra.mxu0 %v455
    %1852 = vmatmul.bf16.gmra.mxu0 %v1804
    %v1853 = vpop.f32.mrf.mxu0
    %v1854 = vadd.f32 %v1841, %v1853
    %v1855 = vpop.f32.mrf.mxu0
    %1856 = vdwg.mxu0
    %1857 = vmatpush.bf16.msra.mxu0 %v452
    %1858 = vmatpush.bf16.msra.mxu0 %v448
    %1859 = vmatpush.bf16.msra.mxu0 %v444
    %1860 = vmatpush.bf16.msra.mxu0 %v440
    %1861 = vmatpush.bf16.msra.mxu0 %v436
    %1862 = vmatpush.bf16.msra.mxu0 %v432
    %1863 = vmatpush.bf16.msra.mxu0 %v428
    %1864 = vmatpush.bf16.msra.mxu0 %v424
    %1865 = vmatmul.bf16.gmra.mxu0 %v1803
    %v1866 = vpop.f32.mrf.mxu0
    %v1867 = vadd.f32 %v553, %v1866
    %v1868 = vpop.f32.mrf.mxu0
    %1869 = vdwg.mxu0
    %1870 = vmatpush.bf16.msra.mxu0 %v484
    %1871 = vmatpush.bf16.msra.mxu0 %v480
    %1872 = vmatpush.bf16.msra.mxu0 %v476
    %1873 = vmatpush.bf16.msra.mxu0 %v472
    %1874 = vmatpush.bf16.msra.mxu0 %v468
    %1875 = vmatpush.bf16.msra.mxu0 %v464
    %1876 = vmatpush.bf16.msra.mxu0 %v460
    %1877 = vmatpush.bf16.msra.mxu0 %v456
    %1878 = vmatmul.bf16.gmra.mxu0 %v1804
    %v1879 = vpop.f32.mrf.mxu0
    %v1880 = vadd.f32 %v1867, %v1879
    %v1881 = vpop.f32.mrf.mxu0
    %1882 = vdwg.mxu0
    %1883 = vmatpush.bf16.msra.mxu0 %v453
    %1884 = vmatpush.bf16.msra.mxu0 %v449
    %1885 = vmatpush.bf16.msra.mxu0 %v445
    %1886 = vmatpush.bf16.msra.mxu0 %v441
    %1887 = vmatpush.bf16.msra.mxu0 %v437
    %1888 = vmatpush.bf16.msra.mxu0 %v433
    %1889 = vmatpush.bf16.msra.mxu0 %v429
    %1890 = vmatpush.bf16.msra.mxu0 %v425
    %1891 = vmatmul.bf16.gmra.mxu0 %v1803
    %v1892 = vpop.f32.mrf.mxu0
    %v1893 = vadd.f32 %v554, %v1892
    %v1894 = vpop.f32.mrf.mxu0
    %1895 = vdwg.mxu0
    %1896 = vmatpush.bf16.msra.mxu0 %v485
    %1897 = vmatpush.bf16.msra.mxu0 %v481
    %1898 = vmatpush.bf16.msra.mxu0 %v477
    %1899 = vmatpush.bf16.msra.mxu0 %v473
    %1900 = vmatpush.bf16.msra.mxu0 %v469
    %1901 = vmatpush.bf16.msra.mxu0 %v465
    %1902 = vmatpush.bf16.msra.mxu0 %v461
    %1903 = vmatpush.bf16.msra.mxu0 %v457
    %1904 = vmatmul.bf16.gmra.mxu0 %v1804
    %v1905 = vpop.f32.mrf.mxu0
    %v1906 = vadd.f32 %v1893, %v1905
    %v1907 = vpop.f32.mrf.mxu0
    %1908 = vdwg.mxu0
    %v1909 = vxor.u32 %v1828, 2147483648
    %v1910 = vmul.f32 %v1909, 1.442695
    %v1911 = vpow.pop %v1910
    %v1912 = vadd.f32 %v1911, 1.0
    %v1913 = vrcp.pop %v1912
    %v1914 = vmul.f32 %v1912, %v1913
    %v1915 = vsub.f32 1.0, %v1914
    %v1916 = vmul.f32 %v1913, %v1915
    %v1917 = vadd.f32 %v1913, %v1916
    %vm1918 = vweird.f32 %v1912
    %vm1919 = vweird.f32 %v1913
    %vm1920 = vmor %vm1918, %vm1919
    %v1921 = vsel %vm1920, %v1913, %v1917
    %v1922 = vand.u32 2147483647, %v1912
    %vm1923 = vcmp.eq.f32.partialorder %v1922, 8.507059e+37
    %v1924 = vand.u32 %v1912, 2147483648
    %v1925 = vor.u32 1.1754944e-38, %v1924
    %v1926 = vsel %vm1923, %v1925, %v1921
    %v1927 = vmul.f32 1.0, %v1926
    %v1928 = vxor.u32 %v1854, 2147483648
    %v1929 = vmul.f32 %v1928, 1.442695
    %v1930 = vpow.pop %v1929
    %v1931 = vadd.f32 %v1930, 1.0
    %v1932 = vrcp.pop %v1931
    %v1933 = vmul.f32 %v1931, %v1932
    %v1934 = vsub.f32 1.0, %v1933
    %v1935 = vmul.f32 %v1932, %v1934
    %v1936 = vadd.f32 %v1932, %v1935
    %vm1937 = vweird.f32 %v1931
    %vm1938 = vweird.f32 %v1932
    %vm1939 = vmor %vm1937, %vm1938
    %v1940 = vsel %vm1939, %v1932, %v1936
    %v1941 = vand.u32 2147483647, %v1931
    %vm1942 = vcmp.eq.f32.partialorder %v1941, 8.507059e+37
    %v1943 = vand.u32 %v1931, 2147483648
    %v1944 = vor.u32 1.1754944e-38, %v1943
    %v1945 = vsel %vm1942, %v1944, %v1940
    %v1946 = vmul.f32 1.0, %v1945
    %v1947 = vmul.f32 %v1927, %v1906
    %v1948 = vadd.f32 %v1880, %v1947
    %v1949 = vtanh.pop %v1948
    %v1950 = vsub.f32 1.0, %v1946
    %v1951 = vmul.f32 %v1950, %v1949
    %v1952 = vmul.f32 %v1946, %v1647
    %v1953 = vadd.f32 %v1951, %v1952
    %v1954 = vpack.c.bf16 %v1802, %v1802
    %v1955 = vpack.c.bf16 %v1798, %v1798
    %1956 = vmatpush.bf16.msra.mxu0 %v929
    %1957 = vmatpush.bf16.msra.mxu0 %v925
    %1958 = vmatpush.bf16.msra.mxu0 %v921
    %1959 = vmatpush.bf16.msra.mxu0 %v917
    %1960 = vmatpush.bf16.msra.mxu0 %v913
    %1961 = vmatpush.bf16.msra.mxu0 %v909
    %1962 = vmatpush.bf16.msra.mxu0 %v905
    %1963 = vmatpush.bf16.msra.mxu0 %v901
    %1964 = vmatmul.bf16.gmra.mxu0 %v1954
    %v1965 = vpop.f32.mrf.mxu0
    %v1966 = vadd.f32 %v1030, %v1965
    %v1967 = vpop.f32.mrf.mxu0
    %1968 = vdwg.mxu0
    %1969 = vmatpush.bf16.msra.mxu0 %v961
    %1970 = vmatpush.bf16.msra.mxu0 %v957
    %1971 = vmatpush.bf16.msra.mxu0 %v953
    %1972 = vmatpush.bf16.msra.mxu0 %v949
    %1973 = vmatpush.bf16.msra.mxu0 %v945
    %1974 = vmatpush.bf16.msra.mxu0 %v941
    %1975 = vmatpush.bf16.msra.mxu0 %v937
    %1976 = vmatpush.bf16.msra.mxu0 %v933
    %1977 = vmatmul.bf16.gmra.mxu0 %v1955
    %v1978 = vpop.f32.mrf.mxu0
    %v1979 = vadd.f32 %v1966, %v1978
    %v1980 = vpop.f32.mrf.mxu0
    %1981 = vdwg.mxu0
    %1982 = vmatpush.bf16.msra.mxu0 %v930
    %1983 = vmatpush.bf16.msra.mxu0 %v926
    %1984 = vmatpush.bf16.msra.mxu0 %v922
    %1985 = vmatpush.bf16.msra.mxu0 %v918
    %1986 = vmatpush.bf16.msra.mxu0 %v914
    %1987 = vmatpush.bf16.msra.mxu0 %v910
    %1988 = vmatpush.bf16.msra.mxu0 %v906
    %1989 = vmatpush.bf16.msra.mxu0 %v902
    %1990 = vmatmul.bf16.gmra.mxu0 %v1954
    %v1991 = vpop.f32.mrf.mxu0
    %v1992 = vadd.f32 %v1031, %v1991
    %v1993 = vpop.f32.mrf.mxu0
    %1994 = vdwg.mxu0
    %1995 = vmatpush.bf16.msra.mxu0 %v962
    %1996 = vmatpush.bf16.msra.mxu0 %v958
    %1997 = vmatpush.bf16.msra.mxu0 %v954
    %1998 = vmatpush.bf16.msra.mxu0 %v950
    %1999 = vmatpush.bf16.msra.mxu0 %v946
    %2000 = vmatpush.bf16.msra.mxu0 %v942
    %2001 = vmatpush.bf16.msra.mxu0 %v938
    %2002 = vmatpush.bf16.msra.mxu0 %v934
    %2003 = vmatmul.bf16.gmra.mxu0 %v1955
    %v2004 = vpop.f32.mrf.mxu0
    %v2005 = vadd.f32 %v1992, %v2004
    %v2006 = vpop.f32.mrf.mxu0
    %2007 = vdwg.mxu0
    %2008 = vmatpush.bf16.msra.mxu0 %v931
    %2009 = vmatpush.bf16.msra.mxu0 %v927
    %2010 = vmatpush.bf16.msra.mxu0 %v923
    %2011 = vmatpush.bf16.msra.mxu0 %v919
    %2012 = vmatpush.bf16.msra.mxu0 %v915
    %2013 = vmatpush.bf16.msra.mxu0 %v911
    %2014 = vmatpush.bf16.msra.mxu0 %v907
    %2015 = vmatpush.bf16.msra.mxu0 %v903
    %2016 = vmatmul.bf16.gmra.mxu0 %v1954
    %v2017 = vpop.f32.mrf.mxu0
    %v2018 = vadd.f32 %v1032, %v2017
    %v2019 = vpop.f32.mrf.mxu0
    %2020 = vdwg.mxu0
    %2021 = vmatpush.bf16.msra.mxu0 %v963
    %2022 = vmatpush.bf16.msra.mxu0 %v959
    %2023 = vmatpush.bf16.msra.mxu0 %v955
    %2024 = vmatpush.bf16.msra.mxu0 %v951
    %2025 = vmatpush.bf16.msra.mxu0 %v947
    %2026 = vmatpush.bf16.msra.mxu0 %v943
    %2027 = vmatpush.bf16.msra.mxu0 %v939
    %2028 = vmatpush.bf16.msra.mxu0 %v935
    %2029 = vmatmul.bf16.gmra.mxu0 %v1955
    %v2030 = vpop.f32.mrf.mxu0
    %v2031 = vadd.f32 %v2018, %v2030
    %v2032 = vpop.f32.mrf.mxu0
    %2033 = vdwg.mxu0
    %2034 = vmatpush.bf16.msra.mxu0 %v932
    %2035 = vmatpush.bf16.msra.mxu0 %v928
    %2036 = vmatpush.bf16.msra.mxu0 %v924
    %2037 = vmatpush.bf16.msra.mxu0 %v920
    %2038 = vmatpush.bf16.msra.mxu0 %v916
    %2039 = vmatpush.bf16.msra.mxu0 %v912
    %2040 = vmatpush.bf16.msra.mxu0 %v908
    %2041 = vmatpush.bf16.msra.mxu0 %v904
    %2042 = vmatmul.bf16.gmra.mxu0 %v1954
    %v2043 = vpop.f32.mrf.mxu0
    %v2044 = vadd.f32 %v1033, %v2043
    %v2045 = vpop.f32.mrf.mxu0
    %2046 = vdwg.mxu0
    %2047 = vmatpush.bf16.msra.mxu0 %v964
    %2048 = vmatpush.bf16.msra.mxu0 %v960
    %2049 = vmatpush.bf16.msra.mxu0 %v956
    %2050 = vmatpush.bf16.msra.mxu0 %v952
    %2051 = vmatpush.bf16.msra.mxu0 %v948
    %2052 = vmatpush.bf16.msra.mxu0 %v944
    %2053 = vmatpush.bf16.msra.mxu0 %v940
    %2054 = vmatpush.bf16.msra.mxu0 %v936
    %2055 = vmatmul.bf16.gmra.mxu0 %v1955
    %v2056 = vpop.f32.mrf.mxu0
    %v2057 = vadd.f32 %v2044, %v2056
    %v2058 = vpop.f32.mrf.mxu0
    %2059 = vdwg.mxu0
    %v2060 = vxor.u32 %v1979, 2147483648
    %v2061 = vmul.f32 %v2060, 1.442695
    %v2062 = vpow.pop %v2061
    %v2063 = vadd.f32 %v2062, 1.0
    %v2064 = vrcp.pop %v2063
    %v2065 = vmul.f32 %v2063, %v2064
    %v2066 = vsub.f32 1.0, %v2065
    %v2067 = vmul.f32 %v2064, %v2066
    %v2068 = vadd.f32 %v2064, %v2067
    %vm2069 = vweird.f32 %v2063
    %vm2070 = vweird.f32 %v2064
    %vm2071 = vmor %vm2069, %vm2070
    %v2072 = vsel %vm2071, %v2064, %v2068
    %v2073 = vand.u32 2147483647, %v2063
    %vm2074 = vcmp.eq.f32.partialorder %v2073, 8.507059e+37
    %v2075 = vand.u32 %v2063, 2147483648
    %v2076 = vor.u32 1.1754944e-38, %v2075
    %v2077 = vsel %vm2074, %v2076, %v2072
    %v2078 = vmul.f32 1.0, %v2077
    %v2079 = vxor.u32 %v2005, 2147483648
    %v2080 = vmul.f32 %v2079, 1.442695
    %v2081 = vpow.pop %v2080
    %v2082 = vadd.f32 %v2081, 1.0
    %v2083 = vrcp.pop %v2082
    %v2084 = vmul.f32 %v2082, %v2083
    %v2085 = vsub.f32 1.0, %v2084
    %v2086 = vmul.f32 %v2083, %v2085
    %v2087 = vadd.f32 %v2083, %v2086
    %vm2088 = vweird.f32 %v2082
    %vm2089 = vweird.f32 %v2083
    %vm2090 = vmor %vm2088, %vm2089
    %v2091 = vsel %vm2090, %v2083, %v2087
    %v2092 = vand.u32 2147483647, %v2082
    %vm2093 = vcmp.eq.f32.partialorder %v2092, 8.507059e+37
    %v2094 = vand.u32 %v2082, 2147483648
    %v2095 = vor.u32 1.1754944e-38, %v2094
    %v2096 = vsel %vm2093, %v2095, %v2091
    %v2097 = vmul.f32 1.0, %v2096
    %v2098 = vmul.f32 %v2078, %v2057
    %v2099 = vadd.f32 %v2031, %v2098
    %v2100 = vtanh.pop %v2099
    %v2101 = vsub.f32 1.0, %v2097
    %v2102 = vmul.f32 %v2101, %v2100
    %v2103 = vmul.f32 %v2097, %v1798
    %v2104 = vadd.f32 %v2102, %v2103
    %2105 = vst [vmem:[#allocation12 + $0x3] sm:$0x1] %v1953
    %2106 = vst [vmem:[#allocation2 + $0x4] sm:$0x1] %v2104
    %v2107 = vld [vmem:[#allocation3 + $0x4] sm:$0x1]
    %v2108 = vld [vmem:[#allocation3 + $0x3] sm:$0x1]
    %v2109 = vpack.c.bf16 %v2107, %v2107
    %v2110 = vpack.c.bf16 %v1953, %v1953
    %2111 = vmatpush.bf16.msra.mxu0 %v450
    %2112 = vmatpush.bf16.msra.mxu0 %v446
    %2113 = vmatpush.bf16.msra.mxu0 %v442
    %2114 = vmatpush.bf16.msra.mxu0 %v438
    %2115 = vmatpush.bf16.msra.mxu0 %v434
    %2116 = vmatpush.bf16.msra.mxu0 %v430
    %2117 = vmatpush.bf16.msra.mxu0 %v426
    %2118 = vmatpush.bf16.msra.mxu0 %v422
    %2119 = vmatmul.bf16.gmra.mxu0 %v2109
    %v2120 = vpop.f32.mrf.mxu0
    %v2121 = vadd.f32 %v551, %v2120
    %v2122 = vpop.f32.mrf.mxu0
    %2123 = vdwg.mxu0
    %2124 = vmatpush.bf16.msra.mxu0 %v482
    %2125 = vmatpush.bf16.msra.mxu0 %v478
    %2126 = vmatpush.bf16.msra.mxu0 %v474
    %2127 = vmatpush.bf16.msra.mxu0 %v470
    %2128 = vmatpush.bf16.msra.mxu0 %v466
    %2129 = vmatpush.bf16.msra.mxu0 %v462
    %2130 = vmatpush.bf16.msra.mxu0 %v458
    %2131 = vmatpush.bf16.msra.mxu0 %v454
    %2132 = vmatmul.bf16.gmra.mxu0 %v2110
    %v2133 = vpop.f32.mrf.mxu0
    %v2134 = vadd.f32 %v2121, %v2133
    %v2135 = vpop.f32.mrf.mxu0
    %2136 = vdwg.mxu0
    %2137 = vmatpush.bf16.msra.mxu0 %v451
    %2138 = vmatpush.bf16.msra.mxu0 %v447
    %2139 = vmatpush.bf16.msra.mxu0 %v443
    %2140 = vmatpush.bf16.msra.mxu0 %v439
    %2141 = vmatpush.bf16.msra.mxu0 %v435
    %2142 = vmatpush.bf16.msra.mxu0 %v431
    %2143 = vmatpush.bf16.msra.mxu0 %v427
    %2144 = vmatpush.bf16.msra.mxu0 %v423
    %2145 = vmatmul.bf16.gmra.mxu0 %v2109
    %v2146 = vpop.f32.mrf.mxu0
    %v2147 = vadd.f32 %v552, %v2146
    %v2148 = vpop.f32.mrf.mxu0
    %2149 = vdwg.mxu0
    %2150 = vmatpush.bf16.msra.mxu0 %v483
    %2151 = vmatpush.bf16.msra.mxu0 %v479
    %2152 = vmatpush.bf16.msra.mxu0 %v475
    %2153 = vmatpush.bf16.msra.mxu0 %v471
    %2154 = vmatpush.bf16.msra.mxu0 %v467
    %2155 = vmatpush.bf16.msra.mxu0 %v463
    %2156 = vmatpush.bf16.msra.mxu0 %v459
    %2157 = vmatpush.bf16.msra.mxu0 %v455
    %2158 = vmatmul.bf16.gmra.mxu0 %v2110
    %v2159 = vpop.f32.mrf.mxu0
    %v2160 = vadd.f32 %v2147, %v2159
    %v2161 = vpop.f32.mrf.mxu0
    %2162 = vdwg.mxu0
    %2163 = vmatpush.bf16.msra.mxu0 %v452
    %2164 = vmatpush.bf16.msra.mxu0 %v448
    %2165 = vmatpush.bf16.msra.mxu0 %v444
    %2166 = vmatpush.bf16.msra.mxu0 %v440
    %2167 = vmatpush.bf16.msra.mxu0 %v436
    %2168 = vmatpush.bf16.msra.mxu0 %v432
    %2169 = vmatpush.bf16.msra.mxu0 %v428
    %2170 = vmatpush.bf16.msra.mxu0 %v424
    %2171 = vmatmul.bf16.gmra.mxu0 %v2109
    %v2172 = vpop.f32.mrf.mxu0
    %v2173 = vadd.f32 %v553, %v2172
    %v2174 = vpop.f32.mrf.mxu0
    %2175 = vdwg.mxu0
    %2176 = vmatpush.bf16.msra.mxu0 %v484
    %2177 = vmatpush.bf16.msra.mxu0 %v480
    %2178 = vmatpush.bf16.msra.mxu0 %v476
    %2179 = vmatpush.bf16.msra.mxu0 %v472
    %2180 = vmatpush.bf16.msra.mxu0 %v468
    %2181 = vmatpush.bf16.msra.mxu0 %v464
    %2182 = vmatpush.bf16.msra.mxu0 %v460
    %2183 = vmatpush.bf16.msra.mxu0 %v456
    %2184 = vmatmul.bf16.gmra.mxu0 %v2110
    %v2185 = vpop.f32.mrf.mxu0
    %v2186 = vadd.f32 %v2173, %v2185
    %v2187 = vpop.f32.mrf.mxu0
    %2188 = vdwg.mxu0
    %2189 = vmatpush.bf16.msra.mxu0 %v453
    %2190 = vmatpush.bf16.msra.mxu0 %v449
    %2191 = vmatpush.bf16.msra.mxu0 %v445
    %2192 = vmatpush.bf16.msra.mxu0 %v441
    %2193 = vmatpush.bf16.msra.mxu0 %v437
    %2194 = vmatpush.bf16.msra.mxu0 %v433
    %2195 = vmatpush.bf16.msra.mxu0 %v429
    %2196 = vmatpush.bf16.msra.mxu0 %v425
    %2197 = vmatmul.bf16.gmra.mxu0 %v2109
    %v2198 = vpop.f32.mrf.mxu0
    %v2199 = vadd.f32 %v554, %v2198
    %v2200 = vpop.f32.mrf.mxu0
    %2201 = vdwg.mxu0
    %2202 = vmatpush.bf16.msra.mxu0 %v485
    %2203 = vmatpush.bf16.msra.mxu0 %v481
    %2204 = vmatpush.bf16.msra.mxu0 %v477
    %2205 = vmatpush.bf16.msra.mxu0 %v473
    %2206 = vmatpush.bf16.msra.mxu0 %v469
    %2207 = vmatpush.bf16.msra.mxu0 %v465
    %2208 = vmatpush.bf16.msra.mxu0 %v461
    %2209 = vmatpush.bf16.msra.mxu0 %v457
    %2210 = vmatmul.bf16.gmra.mxu0 %v2110
    %v2211 = vpop.f32.mrf.mxu0
    %v2212 = vadd.f32 %v2199, %v2211
    %v2213 = vpop.f32.mrf.mxu0
    %2214 = vdwg.mxu0
    %v2215 = vxor.u32 %v2134, 2147483648
    %v2216 = vmul.f32 %v2215, 1.442695
    %v2217 = vpow.pop %v2216
    %v2218 = vadd.f32 %v2217, 1.0
    %v2219 = vrcp.pop %v2218
    %v2220 = vmul.f32 %v2218, %v2219
    %v2221 = vsub.f32 1.0, %v2220
    %v2222 = vmul.f32 %v2219, %v2221
    %v2223 = vadd.f32 %v2219, %v2222
    %vm2224 = vweird.f32 %v2218
    %vm2225 = vweird.f32 %v2219
    %vm2226 = vmor %vm2224, %vm2225
    %v2227 = vsel %vm2226, %v2219, %v2223
    %v2228 = vand.u32 2147483647, %v2218
    %vm2229 = vcmp.eq.f32.partialorder %v2228, 8.507059e+37
    %v2230 = vand.u32 %v2218, 2147483648
    %v2231 = vor.u32 1.1754944e-38, %v2230
    %v2232 = vsel %vm2229, %v2231, %v2227
    %v2233 = vmul.f32 1.0, %v2232
    %v2234 = vxor.u32 %v2160, 2147483648
    %v2235 = vmul.f32 %v2234, 1.442695
    %v2236 = vpow.pop %v2235
    %v2237 = vadd.f32 %v2236, 1.0
    %v2238 = vrcp.pop %v2237
    %v2239 = vmul.f32 %v2237, %v2238
    %v2240 = vsub.f32 1.0, %v2239
    %v2241 = vmul.f32 %v2238, %v2240
    %v2242 = vadd.f32 %v2238, %v2241
    %vm2243 = vweird.f32 %v2237
    %vm2244 = vweird.f32 %v2238
    %vm2245 = vmor %vm2243, %vm2244
    %v2246 = vsel %vm2245, %v2238, %v2242
    %v2247 = vand.u32 2147483647, %v2237
    %vm2248 = vcmp.eq.f32.partialorder %v2247, 8.507059e+37
    %v2249 = vand.u32 %v2237, 2147483648
    %v2250 = vor.u32 1.1754944e-38, %v2249
    %v2251 = vsel %vm2248, %v2250, %v2246
    %v2252 = vmul.f32 1.0, %v2251
    %v2253 = vmul.f32 %v2233, %v2212
    %v2254 = vadd.f32 %v2186, %v2253
    %v2255 = vtanh.pop %v2254
    %v2256 = vsub.f32 1.0, %v2252
    %v2257 = vmul.f32 %v2256, %v2255
    %v2258 = vmul.f32 %v2252, %v1953
    %v2259 = vadd.f32 %v2257, %v2258
    %v2260 = vpack.c.bf16 %v2108, %v2108
    %v2261 = vpack.c.bf16 %v2104, %v2104
    %2262 = vmatpush.bf16.msra.mxu0 %v929
    %2263 = vmatpush.bf16.msra.mxu0 %v925
    %2264 = vmatpush.bf16.msra.mxu0 %v921
    %2265 = vmatpush.bf16.msra.mxu0 %v917
    %2266 = vmatpush.bf16.msra.mxu0 %v913
    %2267 = vmatpush.bf16.msra.mxu0 %v909
    %2268 = vmatpush.bf16.msra.mxu0 %v905
    %2269 = vmatpush.bf16.msra.mxu0 %v901
    %2270 = vmatmul.bf16.gmra.mxu0 %v2260
    %v2271 = vpop.f32.mrf.mxu0
    %v2272 = vadd.f32 %v1030, %v2271
    %v2273 = vpop.f32.mrf.mxu0
    %2274 = vdwg.mxu0
    %2275 = vmatpush.bf16.msra.mxu0 %v961
    %2276 = vmatpush.bf16.msra.mxu0 %v957
    %2277 = vmatpush.bf16.msra.mxu0 %v953
    %2278 = vmatpush.bf16.msra.mxu0 %v949
    %2279 = vmatpush.bf16.msra.mxu0 %v945
    %2280 = vmatpush.bf16.msra.mxu0 %v941
    %2281 = vmatpush.bf16.msra.mxu0 %v937
    %2282 = vmatpush.bf16.msra.mxu0 %v933
    %2283 = vmatmul.bf16.gmra.mxu0 %v2261
    %v2284 = vpop.f32.mrf.mxu0
    %v2285 = vadd.f32 %v2272, %v2284
    %v2286 = vpop.f32.mrf.mxu0
    %2287 = vdwg.mxu0
    %2288 = vmatpush.bf16.msra.mxu0 %v930
    %2289 = vmatpush.bf16.msra.mxu0 %v926
    %2290 = vmatpush.bf16.msra.mxu0 %v922
    %2291 = vmatpush.bf16.msra.mxu0 %v918
    %2292 = vmatpush.bf16.msra.mxu0 %v914
    %2293 = vmatpush.bf16.msra.mxu0 %v910
    %2294 = vmatpush.bf16.msra.mxu0 %v906
    %2295 = vmatpush.bf16.msra.mxu0 %v902
    %2296 = vmatmul.bf16.gmra.mxu0 %v2260
    %v2297 = vpop.f32.mrf.mxu0
    %v2298 = vadd.f32 %v1031, %v2297
    %v2299 = vpop.f32.mrf.mxu0
    %2300 = vdwg.mxu0
    %2301 = vmatpush.bf16.msra.mxu0 %v962
    %2302 = vmatpush.bf16.msra.mxu0 %v958
    %2303 = vmatpush.bf16.msra.mxu0 %v954
    %2304 = vmatpush.bf16.msra.mxu0 %v950
    %2305 = vmatpush.bf16.msra.mxu0 %v946
    %2306 = vmatpush.bf16.msra.mxu0 %v942
    %2307 = vmatpush.bf16.msra.mxu0 %v938
    %2308 = vmatpush.bf16.msra.mxu0 %v934
    %2309 = vmatmul.bf16.gmra.mxu0 %v2261
    %v2310 = vpop.f32.mrf.mxu0
    %v2311 = vadd.f32 %v2298, %v2310
    %v2312 = vpop.f32.mrf.mxu0
    %2313 = vdwg.mxu0
    %2314 = vmatpush.bf16.msra.mxu0 %v931
    %2315 = vmatpush.bf16.msra.mxu0 %v927
    %2316 = vmatpush.bf16.msra.mxu0 %v923
    %2317 = vmatpush.bf16.msra.mxu0 %v919
    %2318 = vmatpush.bf16.msra.mxu0 %v915
    %2319 = vmatpush.bf16.msra.mxu0 %v911
    %2320 = vmatpush.bf16.msra.mxu0 %v907
    %2321 = vmatpush.bf16.msra.mxu0 %v903
    %2322 = vmatmul.bf16.gmra.mxu0 %v2260
    %v2323 = vpop.f32.mrf.mxu0
    %v2324 = vadd.f32 %v1032, %v2323
    %v2325 = vpop.f32.mrf.mxu0
    %2326 = vdwg.mxu0
    %2327 = vmatpush.bf16.msra.mxu0 %v963
    %2328 = vmatpush.bf16.msra.mxu0 %v959
    %2329 = vmatpush.bf16.msra.mxu0 %v955
    %2330 = vmatpush.bf16.msra.mxu0 %v951
    %2331 = vmatpush.bf16.msra.mxu0 %v947
    %2332 = vmatpush.bf16.msra.mxu0 %v943
    %2333 = vmatpush.bf16.msra.mxu0 %v939
    %2334 = vmatpush.bf16.msra.mxu0 %v935
    %2335 = vmatmul.bf16.gmra.mxu0 %v2261
    %v2336 = vpop.f32.mrf.mxu0
    %v2337 = vadd.f32 %v2324, %v2336
    %v2338 = vpop.f32.mrf.mxu0
    %2339 = vdwg.mxu0
    %2340 = vmatpush.bf16.msra.mxu0 %v932
    %2341 = vmatpush.bf16.msra.mxu0 %v928
    %2342 = vmatpush.bf16.msra.mxu0 %v924
    %2343 = vmatpush.bf16.msra.mxu0 %v920
    %2344 = vmatpush.bf16.msra.mxu0 %v916
    %2345 = vmatpush.bf16.msra.mxu0 %v912
    %2346 = vmatpush.bf16.msra.mxu0 %v908
    %2347 = vmatpush.bf16.msra.mxu0 %v904
    %2348 = vmatmul.bf16.gmra.mxu0 %v2260
    %v2349 = vpop.f32.mrf.mxu0
    %v2350 = vadd.f32 %v1033, %v2349
    %v2351 = vpop.f32.mrf.mxu0
    %2352 = vdwg.mxu0
    %2353 = vmatpush.bf16.msra.mxu0 %v964
    %2354 = vmatpush.bf16.msra.mxu0 %v960
    %2355 = vmatpush.bf16.msra.mxu0 %v956
    %2356 = vmatpush.bf16.msra.mxu0 %v952
    %2357 = vmatpush.bf16.msra.mxu0 %v948
    %2358 = vmatpush.bf16.msra.mxu0 %v944
    %2359 = vmatpush.bf16.msra.mxu0 %v940
    %2360 = vmatpush.bf16.msra.mxu0 %v936
    %2361 = vmatmul.bf16.gmra.mxu0 %v2261
    %v2362 = vpop.f32.mrf.mxu0
    %v2363 = vadd.f32 %v2350, %v2362
    %v2364 = vpop.f32.mrf.mxu0
    %2365 = vdwg.mxu0
    %v2366 = vxor.u32 %v2285, 2147483648
    %v2367 = vmul.f32 %v2366, 1.442695
    %v2368 = vpow.pop %v2367
    %v2369 = vadd.f32 %v2368, 1.0
    %v2370 = vrcp.pop %v2369
    %v2371 = vmul.f32 %v2369, %v2370
    %v2372 = vsub.f32 1.0, %v2371
    %v2373 = vmul.f32 %v2370, %v2372
    %v2374 = vadd.f32 %v2370, %v2373
    %vm2375 = vweird.f32 %v2369
    %vm2376 = vweird.f32 %v2370
    %vm2377 = vmor %vm2375, %vm2376
    %v2378 = vsel %vm2377, %v2370, %v2374
    %v2379 = vand.u32 2147483647, %v2369
    %vm2380 = vcmp.eq.f32.partialorder %v2379, 8.507059e+37
    %v2381 = vand.u32 %v2369, 2147483648
    %v2382 = vor.u32 1.1754944e-38, %v2381
    %v2383 = vsel %vm2380, %v2382, %v2378
    %v2384 = vmul.f32 1.0, %v2383
    %v2385 = vxor.u32 %v2311, 2147483648
    %v2386 = vmul.f32 %v2385, 1.442695
    %v2387 = vpow.pop %v2386
    %v2388 = vadd.f32 %v2387, 1.0
    %v2389 = vrcp.pop %v2388
    %v2390 = vmul.f32 %v2388, %v2389
    %v2391 = vsub.f32 1.0, %v2390
    %v2392 = vmul.f32 %v2389, %v2391
    %v2393 = vadd.f32 %v2389, %v2392
    %vm2394 = vweird.f32 %v2388
    %vm2395 = vweird.f32 %v2389
    %vm2396 = vmor %vm2394, %vm2395
    %v2397 = vsel %vm2396, %v2389, %v2393
    %v2398 = vand.u32 2147483647, %v2388
    %vm2399 = vcmp.eq.f32.partialorder %v2398, 8.507059e+37
    %v2400 = vand.u32 %v2388, 2147483648
    %v2401 = vor.u32 1.1754944e-38, %v2400
    %v2402 = vsel %vm2399, %v2401, %v2397
    %v2403 = vmul.f32 1.0, %v2402
    %v2404 = vmul.f32 %v2384, %v2363
    %v2405 = vadd.f32 %v2337, %v2404
    %v2406 = vtanh.pop %v2405
    %v2407 = vsub.f32 1.0, %v2403
    %v2408 = vmul.f32 %v2407, %v2406
    %v2409 = vmul.f32 %v2403, %v2104
    %v2410 = vadd.f32 %v2408, %v2409
    %2411 = vst [vmem:[#allocation12 + $0x4] sm:$0x1] %v2259
    %2412 = vst [vmem:[#allocation2 + $0x3] sm:$0x1] %v2410
    %v2413 = vld [vmem:[#allocation3 + $0x5] sm:$0x1]
    %v2414 = vld [vmem:[#allocation3 + $0x2] sm:$0x1]
    %v2415 = vpack.c.bf16 %v2413, %v2413
    %v2416 = vpack.c.bf16 %v2259, %v2259
    %2417 = vmatpush.bf16.msra.mxu0 %v450
    %2418 = vmatpush.bf16.msra.mxu0 %v446
    %2419 = vmatpush.bf16.msra.mxu0 %v442
    %2420 = vmatpush.bf16.msra.mxu0 %v438
    %2421 = vmatpush.bf16.msra.mxu0 %v434
    %2422 = vmatpush.bf16.msra.mxu0 %v430
    %2423 = vmatpush.bf16.msra.mxu0 %v426
    %2424 = vmatpush.bf16.msra.mxu0 %v422
    %2425 = vmatmul.bf16.gmra.mxu0 %v2415
    %v2426 = vpop.f32.mrf.mxu0
    %v2427 = vadd.f32 %v551, %v2426
    %v2428 = vpop.f32.mrf.mxu0
    %2429 = vdwg.mxu0
    %2430 = vmatpush.bf16.msra.mxu0 %v482
    %2431 = vmatpush.bf16.msra.mxu0 %v478
    %2432 = vmatpush.bf16.msra.mxu0 %v474
    %2433 = vmatpush.bf16.msra.mxu0 %v470
    %2434 = vmatpush.bf16.msra.mxu0 %v466
    %2435 = vmatpush.bf16.msra.mxu0 %v462
    %2436 = vmatpush.bf16.msra.mxu0 %v458
    %2437 = vmatpush.bf16.msra.mxu0 %v454
    %2438 = vmatmul.bf16.gmra.mxu0 %v2416
    %v2439 = vpop.f32.mrf.mxu0
    %v2440 = vadd.f32 %v2427, %v2439
    %v2441 = vpop.f32.mrf.mxu0
    %2442 = vdwg.mxu0
    %2443 = vmatpush.bf16.msra.mxu0 %v451
    %2444 = vmatpush.bf16.msra.mxu0 %v447
    %2445 = vmatpush.bf16.msra.mxu0 %v443
    %2446 = vmatpush.bf16.msra.mxu0 %v439
    %2447 = vmatpush.bf16.msra.mxu0 %v435
    %2448 = vmatpush.bf16.msra.mxu0 %v431
    %2449 = vmatpush.bf16.msra.mxu0 %v427
    %2450 = vmatpush.bf16.msra.mxu0 %v423
    %2451 = vmatmul.bf16.gmra.mxu0 %v2415
    %v2452 = vpop.f32.mrf.mxu0
    %v2453 = vadd.f32 %v552, %v2452
    %v2454 = vpop.f32.mrf.mxu0
    %2455 = vdwg.mxu0
    %2456 = vmatpush.bf16.msra.mxu0 %v483
    %2457 = vmatpush.bf16.msra.mxu0 %v479
    %2458 = vmatpush.bf16.msra.mxu0 %v475
    %2459 = vmatpush.bf16.msra.mxu0 %v471
    %2460 = vmatpush.bf16.msra.mxu0 %v467
    %2461 = vmatpush.bf16.msra.mxu0 %v463
    %2462 = vmatpush.bf16.msra.mxu0 %v459
    %2463 = vmatpush.bf16.msra.mxu0 %v455
    %2464 = vmatmul.bf16.gmra.mxu0 %v2416
    %v2465 = vpop.f32.mrf.mxu0
    %v2466 = vadd.f32 %v2453, %v2465
    %v2467 = vpop.f32.mrf.mxu0
    %2468 = vdwg.mxu0
    %2469 = vmatpush.bf16.msra.mxu0 %v452
    %2470 = vmatpush.bf16.msra.mxu0 %v448
    %2471 = vmatpush.bf16.msra.mxu0 %v444
    %2472 = vmatpush.bf16.msra.mxu0 %v440
    %2473 = vmatpush.bf16.msra.mxu0 %v436
    %2474 = vmatpush.bf16.msra.mxu0 %v432
    %2475 = vmatpush.bf16.msra.mxu0 %v428
    %2476 = vmatpush.bf16.msra.mxu0 %v424
    %2477 = vmatmul.bf16.gmra.mxu0 %v2415
    %v2478 = vpop.f32.mrf.mxu0
    %v2479 = vadd.f32 %v553, %v2478
    %v2480 = vpop.f32.mrf.mxu0
    %2481 = vdwg.mxu0
    %2482 = vmatpush.bf16.msra.mxu0 %v484
    %2483 = vmatpush.bf16.msra.mxu0 %v480
    %2484 = vmatpush.bf16.msra.mxu0 %v476
    %2485 = vmatpush.bf16.msra.mxu0 %v472
    %2486 = vmatpush.bf16.msra.mxu0 %v468
    %2487 = vmatpush.bf16.msra.mxu0 %v464
    %2488 = vmatpush.bf16.msra.mxu0 %v460
    %2489 = vmatpush.bf16.msra.mxu0 %v456
    %2490 = vmatmul.bf16.gmra.mxu0 %v2416
    %v2491 = vpop.f32.mrf.mxu0
    %v2492 = vadd.f32 %v2479, %v2491
    %v2493 = vpop.f32.mrf.mxu0
    %2494 = vdwg.mxu0
    %2495 = vmatpush.bf16.msra.mxu0 %v453
    %2496 = vmatpush.bf16.msra.mxu0 %v449
    %2497 = vmatpush.bf16.msra.mxu0 %v445
    %2498 = vmatpush.bf16.msra.mxu0 %v441
    %2499 = vmatpush.bf16.msra.mxu0 %v437
    %2500 = vmatpush.bf16.msra.mxu0 %v433
    %2501 = vmatpush.bf16.msra.mxu0 %v429
    %2502 = vmatpush.bf16.msra.mxu0 %v425
    %2503 = vmatmul.bf16.gmra.mxu0 %v2415
    %v2504 = vpop.f32.mrf.mxu0
    %v2505 = vadd.f32 %v554, %v2504
    %v2506 = vpop.f32.mrf.mxu0
    %2507 = vdwg.mxu0
    %2508 = vmatpush.bf16.msra.mxu0 %v485
    %2509 = vmatpush.bf16.msra.mxu0 %v481
    %2510 = vmatpush.bf16.msra.mxu0 %v477
    %2511 = vmatpush.bf16.msra.mxu0 %v473
    %2512 = vmatpush.bf16.msra.mxu0 %v469
    %2513 = vmatpush.bf16.msra.mxu0 %v465
    %2514 = vmatpush.bf16.msra.mxu0 %v461
    %2515 = vmatpush.bf16.msra.mxu0 %v457
    %2516 = vmatmul.bf16.gmra.mxu0 %v2416
    %v2517 = vpop.f32.mrf.mxu0
    %v2518 = vadd.f32 %v2505, %v2517
    %v2519 = vpop.f32.mrf.mxu0
    %2520 = vdwg.mxu0
    %v2521 = vxor.u32 %v2440, 2147483648
    %v2522 = vmul.f32 %v2521, 1.442695
    %v2523 = vpow.pop %v2522
    %v2524 = vadd.f32 %v2523, 1.0
    %v2525 = vrcp.pop %v2524
    %v2526 = vmul.f32 %v2524, %v2525
    %v2527 = vsub.f32 1.0, %v2526
    %v2528 = vmul.f32 %v2525, %v2527
    %v2529 = vadd.f32 %v2525, %v2528
    %vm2530 = vweird.f32 %v2524
    %vm2531 = vweird.f32 %v2525
    %vm2532 = vmor %vm2530, %vm2531
    %v2533 = vsel %vm2532, %v2525, %v2529
    %v2534 = vand.u32 2147483647, %v2524
    %vm2535 = vcmp.eq.f32.partialorder %v2534, 8.507059e+37
    %v2536 = vand.u32 %v2524, 2147483648
    %v2537 = vor.u32 1.1754944e-38, %v2536
    %v2538 = vsel %vm2535, %v2537, %v2533
    %v2539 = vmul.f32 1.0, %v2538
    %v2540 = vxor.u32 %v2466, 2147483648
    %v2541 = vmul.f32 %v2540, 1.442695
    %v2542 = vpow.pop %v2541
    %v2543 = vadd.f32 %v2542, 1.0
    %v2544 = vrcp.pop %v2543
    %v2545 = vmul.f32 %v2543, %v2544
    %v2546 = vsub.f32 1.0, %v2545
    %v2547 = vmul.f32 %v2544, %v2546
    %v2548 = vadd.f32 %v2544, %v2547
    %vm2549 = vweird.f32 %v2543
    %vm2550 = vweird.f32 %v2544
    %vm2551 = vmor %vm2549, %vm2550
    %v2552 = vsel %vm2551, %v2544, %v2548
    %v2553 = vand.u32 2147483647, %v2543
    %vm2554 = vcmp.eq.f32.partialorder %v2553, 8.507059e+37
    %v2555 = vand.u32 %v2543, 2147483648
    %v2556 = vor.u32 1.1754944e-38, %v2555
    %v2557 = vsel %vm2554, %v2556, %v2552
    %v2558 = vmul.f32 1.0, %v2557
    %v2559 = vmul.f32 %v2539, %v2518
    %v2560 = vadd.f32 %v2492, %v2559
    %v2561 = vtanh.pop %v2560
    %v2562 = vsub.f32 1.0, %v2558
    %v2563 = vmul.f32 %v2562, %v2561
    %v2564 = vmul.f32 %v2558, %v2259
    %v2565 = vadd.f32 %v2563, %v2564
    %v2566 = vpack.c.bf16 %v2414, %v2414
    %v2567 = vpack.c.bf16 %v2410, %v2410
    %2568 = vmatpush.bf16.msra.mxu0 %v929
    %2569 = vmatpush.bf16.msra.mxu0 %v925
    %2570 = vmatpush.bf16.msra.mxu0 %v921
    %2571 = vmatpush.bf16.msra.mxu0 %v917
    %2572 = vmatpush.bf16.msra.mxu0 %v913
    %2573 = vmatpush.bf16.msra.mxu0 %v909
    %2574 = vmatpush.bf16.msra.mxu0 %v905
    %2575 = vmatpush.bf16.msra.mxu0 %v901
    %2576 = vmatmul.bf16.gmra.mxu0 %v2566
    %v2577 = vpop.f32.mrf.mxu0
    %v2578 = vadd.f32 %v1030, %v2577
    %v2579 = vpop.f32.mrf.mxu0
    %2580 = vdwg.mxu0
    %2581 = vmatpush.bf16.msra.mxu0 %v961
    %2582 = vmatpush.bf16.msra.mxu0 %v957
    %2583 = vmatpush.bf16.msra.mxu0 %v953
    %2584 = vmatpush.bf16.msra.mxu0 %v949
    %2585 = vmatpush.bf16.msra.mxu0 %v945
    %2586 = vmatpush.bf16.msra.mxu0 %v941
    %2587 = vmatpush.bf16.msra.mxu0 %v937
    %2588 = vmatpush.bf16.msra.mxu0 %v933
    %2589 = vmatmul.bf16.gmra.mxu0 %v2567
    %v2590 = vpop.f32.mrf.mxu0
    %v2591 = vadd.f32 %v2578, %v2590
    %v2592 = vpop.f32.mrf.mxu0
    %2593 = vdwg.mxu0
    %2594 = vmatpush.bf16.msra.mxu0 %v930
    %2595 = vmatpush.bf16.msra.mxu0 %v926
    %2596 = vmatpush.bf16.msra.mxu0 %v922
    %2597 = vmatpush.bf16.msra.mxu0 %v918
    %2598 = vmatpush.bf16.msra.mxu0 %v914
    %2599 = vmatpush.bf16.msra.mxu0 %v910
    %2600 = vmatpush.bf16.msra.mxu0 %v906
    %2601 = vmatpush.bf16.msra.mxu0 %v902
    %2602 = vmatmul.bf16.gmra.mxu0 %v2566
    %v2603 = vpop.f32.mrf.mxu0
    %v2604 = vadd.f32 %v1031, %v2603
    %v2605 = vpop.f32.mrf.mxu0
    %2606 = vdwg.mxu0
    %2607 = vmatpush.bf16.msra.mxu0 %v962
    %2608 = vmatpush.bf16.msra.mxu0 %v958
    %2609 = vmatpush.bf16.msra.mxu0 %v954
    %2610 = vmatpush.bf16.msra.mxu0 %v950
    %2611 = vmatpush.bf16.msra.mxu0 %v946
    %2612 = vmatpush.bf16.msra.mxu0 %v942
    %2613 = vmatpush.bf16.msra.mxu0 %v938
    %2614 = vmatpush.bf16.msra.mxu0 %v934
    %2615 = vmatmul.bf16.gmra.mxu0 %v2567
    %v2616 = vpop.f32.mrf.mxu0
    %v2617 = vadd.f32 %v2604, %v2616
    %v2618 = vpop.f32.mrf.mxu0
    %2619 = vdwg.mxu0
    %2620 = vmatpush.bf16.msra.mxu0 %v931
    %2621 = vmatpush.bf16.msra.mxu0 %v927
    %2622 = vmatpush.bf16.msra.mxu0 %v923
    %2623 = vmatpush.bf16.msra.mxu0 %v919
    %2624 = vmatpush.bf16.msra.mxu0 %v915
    %2625 = vmatpush.bf16.msra.mxu0 %v911
    %2626 = vmatpush.bf16.msra.mxu0 %v907
    %2627 = vmatpush.bf16.msra.mxu0 %v903
    %2628 = vmatmul.bf16.gmra.mxu0 %v2566
    %v2629 = vpop.f32.mrf.mxu0
    %v2630 = vadd.f32 %v1032, %v2629
    %v2631 = vpop.f32.mrf.mxu0
    %2632 = vdwg.mxu0
    %2633 = vmatpush.bf16.msra.mxu0 %v963
    %2634 = vmatpush.bf16.msra.mxu0 %v959
    %2635 = vmatpush.bf16.msra.mxu0 %v955
    %2636 = vmatpush.bf16.msra.mxu0 %v951
    %2637 = vmatpush.bf16.msra.mxu0 %v947
    %2638 = vmatpush.bf16.msra.mxu0 %v943
    %2639 = vmatpush.bf16.msra.mxu0 %v939
    %2640 = vmatpush.bf16.msra.mxu0 %v935
    %2641 = vmatmul.bf16.gmra.mxu0 %v2567
    %v2642 = vpop.f32.mrf.mxu0
    %v2643 = vadd.f32 %v2630, %v2642
    %v2644 = vpop.f32.mrf.mxu0
    %2645 = vdwg.mxu0
    %2646 = vmatpush.bf16.msra.mxu0 %v932
    %2647 = vmatpush.bf16.msra.mxu0 %v928
    %2648 = vmatpush.bf16.msra.mxu0 %v924
    %2649 = vmatpush.bf16.msra.mxu0 %v920
    %2650 = vmatpush.bf16.msra.mxu0 %v916
    %2651 = vmatpush.bf16.msra.mxu0 %v912
    %2652 = vmatpush.bf16.msra.mxu0 %v908
    %2653 = vmatpush.bf16.msra.mxu0 %v904
    %2654 = vmatmul.bf16.gmra.mxu0 %v2566
    %v2655 = vpop.f32.mrf.mxu0
    %v2656 = vadd.f32 %v1033, %v2655
    %v2657 = vpop.f32.mrf.mxu0
    %2658 = vdwg.mxu0
    %2659 = vmatpush.bf16.msra.mxu0 %v964
    %2660 = vmatpush.bf16.msra.mxu0 %v960
    %2661 = vmatpush.bf16.msra.mxu0 %v956
    %2662 = vmatpush.bf16.msra.mxu0 %v952
    %2663 = vmatpush.bf16.msra.mxu0 %v948
    %2664 = vmatpush.bf16.msra.mxu0 %v944
    %2665 = vmatpush.bf16.msra.mxu0 %v940
    %2666 = vmatpush.bf16.msra.mxu0 %v936
    %2667 = vmatmul.bf16.gmra.mxu0 %v2567
    %v2668 = vpop.f32.mrf.mxu0
    %v2669 = vadd.f32 %v2656, %v2668
    %v2670 = vpop.f32.mrf.mxu0
    %2671 = vdwg.mxu0
    %v2672 = vxor.u32 %v2591, 2147483648
    %v2673 = vmul.f32 %v2672, 1.442695
    %v2674 = vpow.pop %v2673
    %v2675 = vadd.f32 %v2674, 1.0
    %v2676 = vrcp.pop %v2675
    %v2677 = vmul.f32 %v2675, %v2676
    %v2678 = vsub.f32 1.0, %v2677
    %v2679 = vmul.f32 %v2676, %v2678
    %v2680 = vadd.f32 %v2676, %v2679
    %vm2681 = vweird.f32 %v2675
    %vm2682 = vweird.f32 %v2676
    %vm2683 = vmor %vm2681, %vm2682
    %v2684 = vsel %vm2683, %v2676, %v2680
    %v2685 = vand.u32 2147483647, %v2675
    %vm2686 = vcmp.eq.f32.partialorder %v2685, 8.507059e+37
    %v2687 = vand.u32 %v2675, 2147483648
    %v2688 = vor.u32 1.1754944e-38, %v2687
    %v2689 = vsel %vm2686, %v2688, %v2684
    %v2690 = vmul.f32 1.0, %v2689
    %v2691 = vxor.u32 %v2617, 2147483648
    %v2692 = vmul.f32 %v2691, 1.442695
    %v2693 = vpow.pop %v2692
    %v2694 = vadd.f32 %v2693, 1.0
    %v2695 = vrcp.pop %v2694
    %v2696 = vmul.f32 %v2694, %v2695
    %v2697 = vsub.f32 1.0, %v2696
    %v2698 = vmul.f32 %v2695, %v2697
    %v2699 = vadd.f32 %v2695, %v2698
    %vm2700 = vweird.f32 %v2694
    %vm2701 = vweird.f32 %v2695
    %vm2702 = vmor %vm2700, %vm2701
    %v2703 = vsel %vm2702, %v2695, %v2699
    %v2704 = vand.u32 2147483647, %v2694
    %vm2705 = vcmp.eq.f32.partialorder %v2704, 8.507059e+37
    %v2706 = vand.u32 %v2694, 2147483648
    %v2707 = vor.u32 1.1754944e-38, %v2706
    %v2708 = vsel %vm2705, %v2707, %v2703
    %v2709 = vmul.f32 1.0, %v2708
    %v2710 = vmul.f32 %v2690, %v2669
    %v2711 = vadd.f32 %v2643, %v2710
    %v2712 = vtanh.pop %v2711
    %v2713 = vsub.f32 1.0, %v2709
    %v2714 = vmul.f32 %v2713, %v2712
    %v2715 = vmul.f32 %v2709, %v2410
    %v2716 = vadd.f32 %v2714, %v2715
    %2717 = vst [vmem:[#allocation12 + $0x5] sm:$0x1] %v2565
    %2718 = vst [vmem:[#allocation2 + $0x2] sm:$0x1] %v2716
    %v2719 = vld [vmem:[#allocation3 + $0x6] sm:$0x1]
    %v2720 = vld [vmem:[#allocation3 + $0x1] sm:$0x1]
    %v2721 = vpack.c.bf16 %v2719, %v2719
    %v2722 = vpack.c.bf16 %v2565, %v2565
    %2723 = vmatpush.bf16.msra.mxu0 %v450
    %2724 = vmatpush.bf16.msra.mxu0 %v446
    %2725 = vmatpush.bf16.msra.mxu0 %v442
    %2726 = vmatpush.bf16.msra.mxu0 %v438
    %2727 = vmatpush.bf16.msra.mxu0 %v434
    %2728 = vmatpush.bf16.msra.mxu0 %v430
    %2729 = vmatpush.bf16.msra.mxu0 %v426
    %2730 = vmatpush.bf16.msra.mxu0 %v422
    %2731 = vmatmul.bf16.gmra.mxu0 %v2721
    %v2732 = vpop.f32.mrf.mxu0
    %v2733 = vadd.f32 %v551, %v2732
    %v2734 = vpop.f32.mrf.mxu0
    %2735 = vdwg.mxu0
    %2736 = vmatpush.bf16.msra.mxu0 %v482
    %2737 = vmatpush.bf16.msra.mxu0 %v478
    %2738 = vmatpush.bf16.msra.mxu0 %v474
    %2739 = vmatpush.bf16.msra.mxu0 %v470
    %2740 = vmatpush.bf16.msra.mxu0 %v466
    %2741 = vmatpush.bf16.msra.mxu0 %v462
    %2742 = vmatpush.bf16.msra.mxu0 %v458
    %2743 = vmatpush.bf16.msra.mxu0 %v454
    %2744 = vmatmul.bf16.gmra.mxu0 %v2722
    %v2745 = vpop.f32.mrf.mxu0
    %v2746 = vadd.f32 %v2733, %v2745
    %v2747 = vpop.f32.mrf.mxu0
    %2748 = vdwg.mxu0
    %2749 = vmatpush.bf16.msra.mxu0 %v451
    %2750 = vmatpush.bf16.msra.mxu0 %v447
    %2751 = vmatpush.bf16.msra.mxu0 %v443
    %2752 = vmatpush.bf16.msra.mxu0 %v439
    %2753 = vmatpush.bf16.msra.mxu0 %v435
    %2754 = vmatpush.bf16.msra.mxu0 %v431
    %2755 = vmatpush.bf16.msra.mxu0 %v427
    %2756 = vmatpush.bf16.msra.mxu0 %v423
    %2757 = vmatmul.bf16.gmra.mxu0 %v2721
    %v2758 = vpop.f32.mrf.mxu0
    %v2759 = vadd.f32 %v552, %v2758
    %v2760 = vpop.f32.mrf.mxu0
    %2761 = vdwg.mxu0
    %2762 = vmatpush.bf16.msra.mxu0 %v483
    %2763 = vmatpush.bf16.msra.mxu0 %v479
    %2764 = vmatpush.bf16.msra.mxu0 %v475
    %2765 = vmatpush.bf16.msra.mxu0 %v471
    %2766 = vmatpush.bf16.msra.mxu0 %v467
    %2767 = vmatpush.bf16.msra.mxu0 %v463
    %2768 = vmatpush.bf16.msra.mxu0 %v459
    %2769 = vmatpush.bf16.msra.mxu0 %v455
    %2770 = vmatmul.bf16.gmra.mxu0 %v2722
    %v2771 = vpop.f32.mrf.mxu0
    %v2772 = vadd.f32 %v2759, %v2771
    %v2773 = vpop.f32.mrf.mxu0
    %2774 = vdwg.mxu0
    %2775 = vmatpush.bf16.msra.mxu0 %v452
    %2776 = vmatpush.bf16.msra.mxu0 %v448
    %2777 = vmatpush.bf16.msra.mxu0 %v444
    %2778 = vmatpush.bf16.msra.mxu0 %v440
    %2779 = vmatpush.bf16.msra.mxu0 %v436
    %2780 = vmatpush.bf16.msra.mxu0 %v432
    %2781 = vmatpush.bf16.msra.mxu0 %v428
    %2782 = vmatpush.bf16.msra.mxu0 %v424
    %2783 = vmatmul.bf16.gmra.mxu0 %v2721
    %v2784 = vpop.f32.mrf.mxu0
    %v2785 = vadd.f32 %v553, %v2784
    %v2786 = vpop.f32.mrf.mxu0
    %2787 = vdwg.mxu0
    %2788 = vmatpush.bf16.msra.mxu0 %v484
    %2789 = vmatpush.bf16.msra.mxu0 %v480
    %2790 = vmatpush.bf16.msra.mxu0 %v476
    %2791 = vmatpush.bf16.msra.mxu0 %v472
    %2792 = vmatpush.bf16.msra.mxu0 %v468
    %2793 = vmatpush.bf16.msra.mxu0 %v464
    %2794 = vmatpush.bf16.msra.mxu0 %v460
    %2795 = vmatpush.bf16.msra.mxu0 %v456
    %2796 = vmatmul.bf16.gmra.mxu0 %v2722
    %v2797 = vpop.f32.mrf.mxu0
    %v2798 = vadd.f32 %v2785, %v2797
    %v2799 = vpop.f32.mrf.mxu0
    %2800 = vdwg.mxu0
    %2801 = vmatpush.bf16.msra.mxu0 %v453
    %2802 = vmatpush.bf16.msra.mxu0 %v449
    %2803 = vmatpush.bf16.msra.mxu0 %v445
    %2804 = vmatpush.bf16.msra.mxu0 %v441
    %2805 = vmatpush.bf16.msra.mxu0 %v437
    %2806 = vmatpush.bf16.msra.mxu0 %v433
    %2807 = vmatpush.bf16.msra.mxu0 %v429
    %2808 = vmatpush.bf16.msra.mxu0 %v425
    %2809 = vmatmul.bf16.gmra.mxu0 %v2721
    %v2810 = vpop.f32.mrf.mxu0
    %v2811 = vadd.f32 %v554, %v2810
    %v2812 = vpop.f32.mrf.mxu0
    %2813 = vdwg.mxu0
    %2814 = vmatpush.bf16.msra.mxu0 %v485
    %2815 = vmatpush.bf16.msra.mxu0 %v481
    %2816 = vmatpush.bf16.msra.mxu0 %v477
    %2817 = vmatpush.bf16.msra.mxu0 %v473
    %2818 = vmatpush.bf16.msra.mxu0 %v469
    %2819 = vmatpush.bf16.msra.mxu0 %v465
    %2820 = vmatpush.bf16.msra.mxu0 %v461
    %2821 = vmatpush.bf16.msra.mxu0 %v457
    %2822 = vmatmul.bf16.gmra.mxu0 %v2722
    %v2823 = vpop.f32.mrf.mxu0
    %v2824 = vadd.f32 %v2811, %v2823
    %v2825 = vpop.f32.mrf.mxu0
    %2826 = vdwg.mxu0
    %v2827 = vxor.u32 %v2746, 2147483648
    %v2828 = vmul.f32 %v2827, 1.442695
    %v2829 = vpow.pop %v2828
    %v2830 = vadd.f32 %v2829, 1.0
    %v2831 = vrcp.pop %v2830
    %v2832 = vmul.f32 %v2830, %v2831
    %v2833 = vsub.f32 1.0, %v2832
    %v2834 = vmul.f32 %v2831, %v2833
    %v2835 = vadd.f32 %v2831, %v2834
    %vm2836 = vweird.f32 %v2830
    %vm2837 = vweird.f32 %v2831
    %vm2838 = vmor %vm2836, %vm2837
    %v2839 = vsel %vm2838, %v2831, %v2835
    %v2840 = vand.u32 2147483647, %v2830
    %vm2841 = vcmp.eq.f32.partialorder %v2840, 8.507059e+37
    %v2842 = vand.u32 %v2830, 2147483648
    %v2843 = vor.u32 1.1754944e-38, %v2842
    %v2844 = vsel %vm2841, %v2843, %v2839
    %v2845 = vmul.f32 1.0, %v2844
    %v2846 = vxor.u32 %v2772, 2147483648
    %v2847 = vmul.f32 %v2846, 1.442695
    %v2848 = vpow.pop %v2847
    %v2849 = vadd.f32 %v2848, 1.0
    %v2850 = vrcp.pop %v2849
    %v2851 = vmul.f32 %v2849, %v2850
    %v2852 = vsub.f32 1.0, %v2851
    %v2853 = vmul.f32 %v2850, %v2852
    %v2854 = vadd.f32 %v2850, %v2853
    %vm2855 = vweird.f32 %v2849
    %vm2856 = vweird.f32 %v2850
    %vm2857 = vmor %vm2855, %vm2856
    %v2858 = vsel %vm2857, %v2850, %v2854
    %v2859 = vand.u32 2147483647, %v2849
    %vm2860 = vcmp.eq.f32.partialorder %v2859, 8.507059e+37
    %v2861 = vand.u32 %v2849, 2147483648
    %v2862 = vor.u32 1.1754944e-38, %v2861
    %v2863 = vsel %vm2860, %v2862, %v2858
    %v2864 = vmul.f32 1.0, %v2863
    %v2865 = vmul.f32 %v2845, %v2824
    %v2866 = vadd.f32 %v2798, %v2865
    %v2867 = vtanh.pop %v2866
    %v2868 = vsub.f32 1.0, %v2864
    %v2869 = vmul.f32 %v2868, %v2867
    %v2870 = vmul.f32 %v2864, %v2565
    %v2871 = vadd.f32 %v2869, %v2870
    %v2872 = vpack.c.bf16 %v2720, %v2720
    %v2873 = vpack.c.bf16 %v2716, %v2716
    %2874 = vmatpush.bf16.msra.mxu0 %v929
    %2875 = vmatpush.bf16.msra.mxu0 %v925
    %2876 = vmatpush.bf16.msra.mxu0 %v921
    %2877 = vmatpush.bf16.msra.mxu0 %v917
    %2878 = vmatpush.bf16.msra.mxu0 %v913
    %2879 = vmatpush.bf16.msra.mxu0 %v909
    %2880 = vmatpush.bf16.msra.mxu0 %v905
    %2881 = vmatpush.bf16.msra.mxu0 %v901
    %2882 = vmatmul.bf16.gmra.mxu0 %v2872
    %v2883 = vpop.f32.mrf.mxu0
    %v2884 = vadd.f32 %v1030, %v2883
    %v2885 = vpop.f32.mrf.mxu0
    %2886 = vdwg.mxu0
    %2887 = vmatpush.bf16.msra.mxu0 %v961
    %2888 = vmatpush.bf16.msra.mxu0 %v957
    %2889 = vmatpush.bf16.msra.mxu0 %v953
    %2890 = vmatpush.bf16.msra.mxu0 %v949
    %2891 = vmatpush.bf16.msra.mxu0 %v945
    %2892 = vmatpush.bf16.msra.mxu0 %v941
    %2893 = vmatpush.bf16.msra.mxu0 %v937
    %2894 = vmatpush.bf16.msra.mxu0 %v933
    %2895 = vmatmul.bf16.gmra.mxu0 %v2873
    %v2896 = vpop.f32.mrf.mxu0
    %v2897 = vadd.f32 %v2884, %v2896
    %v2898 = vpop.f32.mrf.mxu0
    %2899 = vdwg.mxu0
    %2900 = vmatpush.bf16.msra.mxu0 %v930
    %2901 = vmatpush.bf16.msra.mxu0 %v926
    %2902 = vmatpush.bf16.msra.mxu0 %v922
    %2903 = vmatpush.bf16.msra.mxu0 %v918
    %2904 = vmatpush.bf16.msra.mxu0 %v914
    %2905 = vmatpush.bf16.msra.mxu0 %v910
    %2906 = vmatpush.bf16.msra.mxu0 %v906
    %2907 = vmatpush.bf16.msra.mxu0 %v902
    %2908 = vmatmul.bf16.gmra.mxu0 %v2872
    %v2909 = vpop.f32.mrf.mxu0
    %v2910 = vadd.f32 %v1031, %v2909
    %v2911 = vpop.f32.mrf.mxu0
    %2912 = vdwg.mxu0
    %2913 = vmatpush.bf16.msra.mxu0 %v962
    %2914 = vmatpush.bf16.msra.mxu0 %v958
    %2915 = vmatpush.bf16.msra.mxu0 %v954
    %2916 = vmatpush.bf16.msra.mxu0 %v950
    %2917 = vmatpush.bf16.msra.mxu0 %v946
    %2918 = vmatpush.bf16.msra.mxu0 %v942
    %2919 = vmatpush.bf16.msra.mxu0 %v938
    %2920 = vmatpush.bf16.msra.mxu0 %v934
    %2921 = vmatmul.bf16.gmra.mxu0 %v2873
    %v2922 = vpop.f32.mrf.mxu0
    %v2923 = vadd.f32 %v2910, %v2922
    %v2924 = vpop.f32.mrf.mxu0
    %2925 = vdwg.mxu0
    %2926 = vmatpush.bf16.msra.mxu0 %v931
    %2927 = vmatpush.bf16.msra.mxu0 %v927
    %2928 = vmatpush.bf16.msra.mxu0 %v923
    %2929 = vmatpush.bf16.msra.mxu0 %v919
    %2930 = vmatpush.bf16.msra.mxu0 %v915
    %2931 = vmatpush.bf16.msra.mxu0 %v911
    %2932 = vmatpush.bf16.msra.mxu0 %v907
    %2933 = vmatpush.bf16.msra.mxu0 %v903
    %2934 = vmatmul.bf16.gmra.mxu0 %v2872
    %v2935 = vpop.f32.mrf.mxu0
    %v2936 = vadd.f32 %v1032, %v2935
    %v2937 = vpop.f32.mrf.mxu0
    %2938 = vdwg.mxu0
    %2939 = vmatpush.bf16.msra.mxu0 %v963
    %2940 = vmatpush.bf16.msra.mxu0 %v959
    %2941 = vmatpush.bf16.msra.mxu0 %v955
    %2942 = vmatpush.bf16.msra.mxu0 %v951
    %2943 = vmatpush.bf16.msra.mxu0 %v947
    %2944 = vmatpush.bf16.msra.mxu0 %v943
    %2945 = vmatpush.bf16.msra.mxu0 %v939
    %2946 = vmatpush.bf16.msra.mxu0 %v935
    %2947 = vmatmul.bf16.gmra.mxu0 %v2873
    %v2948 = vpop.f32.mrf.mxu0
    %v2949 = vadd.f32 %v2936, %v2948
    %v2950 = vpop.f32.mrf.mxu0
    %2951 = vdwg.mxu0
    %2952 = vmatpush.bf16.msra.mxu0 %v932
    %2953 = vmatpush.bf16.msra.mxu0 %v928
    %2954 = vmatpush.bf16.msra.mxu0 %v924
    %2955 = vmatpush.bf16.msra.mxu0 %v920
    %2956 = vmatpush.bf16.msra.mxu0 %v916
    %2957 = vmatpush.bf16.msra.mxu0 %v912
    %2958 = vmatpush.bf16.msra.mxu0 %v908
    %2959 = vmatpush.bf16.msra.mxu0 %v904
    %2960 = vmatmul.bf16.gmra.mxu0 %v2872
    %v2961 = vpop.f32.mrf.mxu0
    %v2962 = vadd.f32 %v1033, %v2961
    %v2963 = vpop.f32.mrf.mxu0
    %2964 = vdwg.mxu0
    %2965 = vmatpush.bf16.msra.mxu0 %v964
    %2966 = vmatpush.bf16.msra.mxu0 %v960
    %2967 = vmatpush.bf16.msra.mxu0 %v956
    %2968 = vmatpush.bf16.msra.mxu0 %v952
    %2969 = vmatpush.bf16.msra.mxu0 %v948
    %2970 = vmatpush.bf16.msra.mxu0 %v944
    %2971 = vmatpush.bf16.msra.mxu0 %v940
    %2972 = vmatpush.bf16.msra.mxu0 %v936
    %2973 = vmatmul.bf16.gmra.mxu0 %v2873
    %v2974 = vpop.f32.mrf.mxu0
    %v2975 = vadd.f32 %v2962, %v2974
    %v2976 = vpop.f32.mrf.mxu0
    %2977 = vdwg.mxu0
    %v2978 = vxor.u32 %v2897, 2147483648
    %v2979 = vmul.f32 %v2978, 1.442695
    %v2980 = vpow.pop %v2979
    %v2981 = vadd.f32 %v2980, 1.0
    %v2982 = vrcp.pop %v2981
    %v2983 = vmul.f32 %v2981, %v2982
    %v2984 = vsub.f32 1.0, %v2983
    %v2985 = vmul.f32 %v2982, %v2984
    %v2986 = vadd.f32 %v2982, %v2985
    %vm2987 = vweird.f32 %v2981
    %vm2988 = vweird.f32 %v2982
    %vm2989 = vmor %vm2987, %vm2988
    %v2990 = vsel %vm2989, %v2982, %v2986
    %v2991 = vand.u32 2147483647, %v2981
    %vm2992 = vcmp.eq.f32.partialorder %v2991, 8.507059e+37
    %v2993 = vand.u32 %v2981, 2147483648
    %v2994 = vor.u32 1.1754944e-38, %v2993
    %v2995 = vsel %vm2992, %v2994, %v2990
    %v2996 = vmul.f32 1.0, %v2995
    %v2997 = vxor.u32 %v2923, 2147483648
    %v2998 = vmul.f32 %v2997, 1.442695
    %v2999 = vpow.pop %v2998
    %v3000 = vadd.f32 %v2999, 1.0
    %v3001 = vrcp.pop %v3000
    %v3002 = vmul.f32 %v3000, %v3001
    %v3003 = vsub.f32 1.0, %v3002
    %v3004 = vmul.f32 %v3001, %v3003
    %v3005 = vadd.f32 %v3001, %v3004
    %vm3006 = vweird.f32 %v3000
    %vm3007 = vweird.f32 %v3001
    %vm3008 = vmor %vm3006, %vm3007
    %v3009 = vsel %vm3008, %v3001, %v3005
    %v3010 = vand.u32 2147483647, %v3000
    %vm3011 = vcmp.eq.f32.partialorder %v3010, 8.507059e+37
    %v3012 = vand.u32 %v3000, 2147483648
    %v3013 = vor.u32 1.1754944e-38, %v3012
    %v3014 = vsel %vm3011, %v3013, %v3009
    %v3015 = vmul.f32 1.0, %v3014
    %v3016 = vmul.f32 %v2996, %v2975
    %v3017 = vadd.f32 %v2949, %v3016
    %v3018 = vtanh.pop %v3017
    %v3019 = vsub.f32 1.0, %v3015
    %v3020 = vmul.f32 %v3019, %v3018
    %v3021 = vmul.f32 %v3015, %v2716
    %v3022 = vadd.f32 %v3020, %v3021
    %3023 = vst [vmem:[#allocation12 + $0x6] sm:$0x1] %v2871
    %3024 = vst [vmem:[#allocation2 + $0x1] sm:$0x1] %v3022
    %v3025 = vld [vmem:[#allocation3 + $0x7] sm:$0x1]
    %v3026 = vld [vmem:[#allocation3] sm:$0x1]
    %v3027 = vpack.c.bf16 %v3025, %v3025
    %v3028 = vpack.c.bf16 %v2871, %v2871
    %3029 = vmatpush.bf16.msra.mxu0 %v450
    %3030 = vmatpush.bf16.msra.mxu0 %v446
    %3031 = vmatpush.bf16.msra.mxu0 %v442
    %3032 = vmatpush.bf16.msra.mxu0 %v438
    %3033 = vmatpush.bf16.msra.mxu0 %v434
    %3034 = vmatpush.bf16.msra.mxu0 %v430
    %3035 = vmatpush.bf16.msra.mxu0 %v426
    %3036 = vmatpush.bf16.msra.mxu0 %v422
    %3037 = vmatmul.bf16.gmra.mxu0 %v3027
    %v3038 = vpop.f32.mrf.mxu0
    %v3039 = vadd.f32 %v551, %v3038
    %v3040 = vpop.f32.mrf.mxu0
    %3041 = vdwg.mxu0
    %3042 = vmatpush.bf16.msra.mxu0 %v482
    %3043 = vmatpush.bf16.msra.mxu0 %v478
    %3044 = vmatpush.bf16.msra.mxu0 %v474
    %3045 = vmatpush.bf16.msra.mxu0 %v470
    %3046 = vmatpush.bf16.msra.mxu0 %v466
    %3047 = vmatpush.bf16.msra.mxu0 %v462
    %3048 = vmatpush.bf16.msra.mxu0 %v458
    %3049 = vmatpush.bf16.msra.mxu0 %v454
    %3050 = vmatmul.bf16.gmra.mxu0 %v3028
    %v3051 = vpop.f32.mrf.mxu0
    %v3052 = vadd.f32 %v3039, %v3051
    %v3053 = vpop.f32.mrf.mxu0
    %3054 = vdwg.mxu0
    %3055 = vmatpush.bf16.msra.mxu0 %v451
    %3056 = vmatpush.bf16.msra.mxu0 %v447
    %3057 = vmatpush.bf16.msra.mxu0 %v443
    %3058 = vmatpush.bf16.msra.mxu0 %v439
    %3059 = vmatpush.bf16.msra.mxu0 %v435
    %3060 = vmatpush.bf16.msra.mxu0 %v431
    %3061 = vmatpush.bf16.msra.mxu0 %v427
    %3062 = vmatpush.bf16.msra.mxu0 %v423
    %3063 = vmatmul.bf16.gmra.mxu0 %v3027
    %v3064 = vpop.f32.mrf.mxu0
    %v3065 = vadd.f32 %v552, %v3064
    %v3066 = vpop.f32.mrf.mxu0
    %3067 = vdwg.mxu0
    %3068 = vmatpush.bf16.msra.mxu0 %v483
    %3069 = vmatpush.bf16.msra.mxu0 %v479
    %3070 = vmatpush.bf16.msra.mxu0 %v475
    %3071 = vmatpush.bf16.msra.mxu0 %v471
    %3072 = vmatpush.bf16.msra.mxu0 %v467
    %3073 = vmatpush.bf16.msra.mxu0 %v463
    %3074 = vmatpush.bf16.msra.mxu0 %v459
    %3075 = vmatpush.bf16.msra.mxu0 %v455
    %3076 = vmatmul.bf16.gmra.mxu0 %v3028
    %v3077 = vpop.f32.mrf.mxu0
    %v3078 = vadd.f32 %v3065, %v3077
    %v3079 = vpop.f32.mrf.mxu0
    %3080 = vdwg.mxu0
    %3081 = vmatpush.bf16.msra.mxu0 %v452
    %3082 = vmatpush.bf16.msra.mxu0 %v448
    %3083 = vmatpush.bf16.msra.mxu0 %v444
    %3084 = vmatpush.bf16.msra.mxu0 %v440
    %3085 = vmatpush.bf16.msra.mxu0 %v436
    %3086 = vmatpush.bf16.msra.mxu0 %v432
    %3087 = vmatpush.bf16.msra.mxu0 %v428
    %3088 = vmatpush.bf16.msra.mxu0 %v424
    %3089 = vmatmul.bf16.gmra.mxu0 %v3027
    %v3090 = vpop.f32.mrf.mxu0
    %v3091 = vadd.f32 %v553, %v3090
    %v3092 = vpop.f32.mrf.mxu0
    %3093 = vdwg.mxu0
    %3094 = vmatpush.bf16.msra.mxu0 %v484
    %3095 = vmatpush.bf16.msra.mxu0 %v480
    %3096 = vmatpush.bf16.msra.mxu0 %v476
    %3097 = vmatpush.bf16.msra.mxu0 %v472
    %3098 = vmatpush.bf16.msra.mxu0 %v468
    %3099 = vmatpush.bf16.msra.mxu0 %v464
    %3100 = vmatpush.bf16.msra.mxu0 %v460
    %3101 = vmatpush.bf16.msra.mxu0 %v456
    %3102 = vmatmul.bf16.gmra.mxu0 %v3028
    %v3103 = vpop.f32.mrf.mxu0
    %v3104 = vadd.f32 %v3091, %v3103
    %v3105 = vpop.f32.mrf.mxu0
    %3106 = vdwg.mxu0
    %3107 = vmatpush.bf16.msra.mxu0 %v453
    %3108 = vmatpush.bf16.msra.mxu0 %v449
    %3109 = vmatpush.bf16.msra.mxu0 %v445
    %3110 = vmatpush.bf16.msra.mxu0 %v441
    %3111 = vmatpush.bf16.msra.mxu0 %v437
    %3112 = vmatpush.bf16.msra.mxu0 %v433
    %3113 = vmatpush.bf16.msra.mxu0 %v429
    %3114 = vmatpush.bf16.msra.mxu0 %v425
    %3115 = vmatmul.bf16.gmra.mxu0 %v3027
    %v3116 = vpop.f32.mrf.mxu0
    %v3117 = vadd.f32 %v554, %v3116
    %v3118 = vpop.f32.mrf.mxu0
    %3119 = vdwg.mxu0
    %3120 = vmatpush.bf16.msra.mxu0 %v485
    %3121 = vmatpush.bf16.msra.mxu0 %v481
    %3122 = vmatpush.bf16.msra.mxu0 %v477
    %3123 = vmatpush.bf16.msra.mxu0 %v473
    %3124 = vmatpush.bf16.msra.mxu0 %v469
    %3125 = vmatpush.bf16.msra.mxu0 %v465
    %3126 = vmatpush.bf16.msra.mxu0 %v461
    %3127 = vmatpush.bf16.msra.mxu0 %v457
    %3128 = vmatmul.bf16.gmra.mxu0 %v3028
    %v3129 = vpop.f32.mrf.mxu0
    %v3130 = vadd.f32 %v3117, %v3129
    %v3131 = vpop.f32.mrf.mxu0
    %3132 = vdwg.mxu0
    %v3133 = vxor.u32 %v3052, 2147483648
    %v3134 = vmul.f32 %v3133, 1.442695
    %v3135 = vpow.pop %v3134
    %v3136 = vadd.f32 %v3135, 1.0
    %v3137 = vrcp.pop %v3136
    %v3138 = vmul.f32 %v3136, %v3137
    %v3139 = vsub.f32 1.0, %v3138
    %v3140 = vmul.f32 %v3137, %v3139
    %v3141 = vadd.f32 %v3137, %v3140
    %vm3142 = vweird.f32 %v3136
    %vm3143 = vweird.f32 %v3137
    %vm3144 = vmor %vm3142, %vm3143
    %v3145 = vsel %vm3144, %v3137, %v3141
    %v3146 = vand.u32 2147483647, %v3136
    %vm3147 = vcmp.eq.f32.partialorder %v3146, 8.507059e+37
    %v3148 = vand.u32 %v3136, 2147483648
    %v3149 = vor.u32 1.1754944e-38, %v3148
    %v3150 = vsel %vm3147, %v3149, %v3145
    %v3151 = vmul.f32 1.0, %v3150
    %v3152 = vxor.u32 %v3078, 2147483648
    %v3153 = vmul.f32 %v3152, 1.442695
    %v3154 = vpow.pop %v3153
    %v3155 = vadd.f32 %v3154, 1.0
    %v3156 = vrcp.pop %v3155
    %v3157 = vmul.f32 %v3155, %v3156
    %v3158 = vsub.f32 1.0, %v3157
    %v3159 = vmul.f32 %v3156, %v3158
    %v3160 = vadd.f32 %v3156, %v3159
    %vm3161 = vweird.f32 %v3155
    %vm3162 = vweird.f32 %v3156
    %vm3163 = vmor %vm3161, %vm3162
    %v3164 = vsel %vm3163, %v3156, %v3160
    %v3165 = vand.u32 2147483647, %v3155
    %vm3166 = vcmp.eq.f32.partialorder %v3165, 8.507059e+37
    %v3167 = vand.u32 %v3155, 2147483648
    %v3168 = vor.u32 1.1754944e-38, %v3167
    %v3169 = vsel %vm3166, %v3168, %v3164
    %v3170 = vmul.f32 1.0, %v3169
    %v3171 = vmul.f32 %v3151, %v3130
    %v3172 = vadd.f32 %v3104, %v3171
    %v3173 = vtanh.pop %v3172
    %v3174 = vsub.f32 1.0, %v3170
    %v3175 = vmul.f32 %v3174, %v3173
    %v3176 = vmul.f32 %v3170, %v2871
    %v3177 = vadd.f32 %v3175, %v3176
    %v3178 = vpack.c.bf16 %v3026, %v3026
    %v3179 = vpack.c.bf16 %v3022, %v3022
    %3180 = vmatpush.bf16.msra.mxu0 %v929
    %3181 = vmatpush.bf16.msra.mxu0 %v925
    %3182 = vmatpush.bf16.msra.mxu0 %v921
    %3183 = vmatpush.bf16.msra.mxu0 %v917
    %3184 = vmatpush.bf16.msra.mxu0 %v913
    %3185 = vmatpush.bf16.msra.mxu0 %v909
    %3186 = vmatpush.bf16.msra.mxu0 %v905
    %3187 = vmatpush.bf16.msra.mxu0 %v901
    %3188 = vmatmul.bf16.gmra.mxu0 %v3178
    %v3189 = vpop.f32.mrf.mxu0
    %v3190 = vadd.f32 %v1030, %v3189
    %v3191 = vpop.f32.mrf.mxu0
    %3192 = vdwg.mxu0
    %3193 = vmatpush.bf16.msra.mxu0 %v961
    %3194 = vmatpush.bf16.msra.mxu0 %v957
    %3195 = vmatpush.bf16.msra.mxu0 %v953
    %3196 = vmatpush.bf16.msra.mxu0 %v949
    %3197 = vmatpush.bf16.msra.mxu0 %v945
    %3198 = vmatpush.bf16.msra.mxu0 %v941
    %3199 = vmatpush.bf16.msra.mxu0 %v937
    %3200 = vmatpush.bf16.msra.mxu0 %v933
    %3201 = vmatmul.bf16.gmra.mxu0 %v3179
    %v3202 = vpop.f32.mrf.mxu0
    %v3203 = vadd.f32 %v3190, %v3202
    %v3204 = vpop.f32.mrf.mxu0
    %3205 = vdwg.mxu0
    %3206 = vmatpush.bf16.msra.mxu0 %v930
    %3207 = vmatpush.bf16.msra.mxu0 %v926
    %3208 = vmatpush.bf16.msra.mxu0 %v922
    %3209 = vmatpush.bf16.msra.mxu0 %v918
    %3210 = vmatpush.bf16.msra.mxu0 %v914
    %3211 = vmatpush.bf16.msra.mxu0 %v910
    %3212 = vmatpush.bf16.msra.mxu0 %v906
    %3213 = vmatpush.bf16.msra.mxu0 %v902
    %3214 = vmatmul.bf16.gmra.mxu0 %v3178
    %v3215 = vpop.f32.mrf.mxu0
    %v3216 = vadd.f32 %v1031, %v3215
    %v3217 = vpop.f32.mrf.mxu0
    %3218 = vdwg.mxu0
    %3219 = vmatpush.bf16.msra.mxu0 %v962
    %3220 = vmatpush.bf16.msra.mxu0 %v958
    %3221 = vmatpush.bf16.msra.mxu0 %v954
    %3222 = vmatpush.bf16.msra.mxu0 %v950
    %3223 = vmatpush.bf16.msra.mxu0 %v946
    %3224 = vmatpush.bf16.msra.mxu0 %v942
    %3225 = vmatpush.bf16.msra.mxu0 %v938
    %3226 = vmatpush.bf16.msra.mxu0 %v934
    %3227 = vmatmul.bf16.gmra.mxu0 %v3179
    %v3228 = vpop.f32.mrf.mxu0
    %v3229 = vadd.f32 %v3216, %v3228
    %v3230 = vpop.f32.mrf.mxu0
    %3231 = vdwg.mxu0
    %3232 = vmatpush.bf16.msra.mxu0 %v931
    %3233 = vmatpush.bf16.msra.mxu0 %v927
    %3234 = vmatpush.bf16.msra.mxu0 %v923
    %3235 = vmatpush.bf16.msra.mxu0 %v919
    %3236 = vmatpush.bf16.msra.mxu0 %v915
    %3237 = vmatpush.bf16.msra.mxu0 %v911
    %3238 = vmatpush.bf16.msra.mxu0 %v907
    %3239 = vmatpush.bf16.msra.mxu0 %v903
    %3240 = vmatmul.bf16.gmra.mxu0 %v3178
    %v3241 = vpop.f32.mrf.mxu0
    %v3242 = vadd.f32 %v1032, %v3241
    %v3243 = vpop.f32.mrf.mxu0
    %3244 = vdwg.mxu0
    %3245 = vmatpush.bf16.msra.mxu0 %v963
    %3246 = vmatpush.bf16.msra.mxu0 %v959
    %3247 = vmatpush.bf16.msra.mxu0 %v955
    %3248 = vmatpush.bf16.msra.mxu0 %v951
    %3249 = vmatpush.bf16.msra.mxu0 %v947
    %3250 = vmatpush.bf16.msra.mxu0 %v943
    %3251 = vmatpush.bf16.msra.mxu0 %v939
    %3252 = vmatpush.bf16.msra.mxu0 %v935
    %3253 = vmatmul.bf16.gmra.mxu0 %v3179
    %v3254 = vpop.f32.mrf.mxu0
    %v3255 = vadd.f32 %v3242, %v3254
    %v3256 = vpop.f32.mrf.mxu0
    %3257 = vdwg.mxu0
    %3258 = vmatpush.bf16.msra.mxu0 %v932
    %3259 = vmatpush.bf16.msra.mxu0 %v928
    %3260 = vmatpush.bf16.msra.mxu0 %v924
    %3261 = vmatpush.bf16.msra.mxu0 %v920
    %3262 = vmatpush.bf16.msra.mxu0 %v916
    %3263 = vmatpush.bf16.msra.mxu0 %v912
    %3264 = vmatpush.bf16.msra.mxu0 %v908
    %3265 = vmatpush.bf16.msra.mxu0 %v904
    %3266 = vmatmul.bf16.gmra.mxu0 %v3178
    %v3267 = vpop.f32.mrf.mxu0
    %v3268 = vadd.f32 %v1033, %v3267
    %v3269 = vpop.f32.mrf.mxu0
    %3270 = vdwg.mxu0
    %3271 = vmatpush.bf16.msra.mxu0 %v964
    %3272 = vmatpush.bf16.msra.mxu0 %v960
    %3273 = vmatpush.bf16.msra.mxu0 %v956
    %3274 = vmatpush.bf16.msra.mxu0 %v952
    %3275 = vmatpush.bf16.msra.mxu0 %v948
    %3276 = vmatpush.bf16.msra.mxu0 %v944
    %3277 = vmatpush.bf16.msra.mxu0 %v940
    %3278 = vmatpush.bf16.msra.mxu0 %v936
    %3279 = vmatmul.bf16.gmra.mxu0 %v3179
    %v3280 = vpop.f32.mrf.mxu0
    %v3281 = vadd.f32 %v3268, %v3280
    %v3282 = vpop.f32.mrf.mxu0
    %3283 = vdwg.mxu0
    %v3284 = vxor.u32 %v3203, 2147483648
    %v3285 = vmul.f32 %v3284, 1.442695
    %v3286 = vpow.pop %v3285
    %v3287 = vadd.f32 %v3286, 1.0
    %v3288 = vrcp.pop %v3287
    %v3289 = vmul.f32 %v3287, %v3288
    %v3290 = vsub.f32 1.0, %v3289
    %v3291 = vmul.f32 %v3288, %v3290
    %v3292 = vadd.f32 %v3288, %v3291
    %vm3293 = vweird.f32 %v3287
    %vm3294 = vweird.f32 %v3288
    %vm3295 = vmor %vm3293, %vm3294
    %v3296 = vsel %vm3295, %v3288, %v3292
    %v3297 = vand.u32 2147483647, %v3287
    %vm3298 = vcmp.eq.f32.partialorder %v3297, 8.507059e+37
    %v3299 = vand.u32 %v3287, 2147483648
    %v3300 = vor.u32 1.1754944e-38, %v3299
    %v3301 = vsel %vm3298, %v3300, %v3296
    %v3302 = vmul.f32 1.0, %v3301
    %v3303 = vxor.u32 %v3229, 2147483648
    %v3304 = vmul.f32 %v3303, 1.442695
    %v3305 = vpow.pop %v3304
    %v3306 = vadd.f32 %v3305, 1.0
    %v3307 = vrcp.pop %v3306
    %v3308 = vmul.f32 %v3306, %v3307
    %v3309 = vsub.f32 1.0, %v3308
    %v3310 = vmul.f32 %v3307, %v3309
    %v3311 = vadd.f32 %v3307, %v3310
    %vm3312 = vweird.f32 %v3306
    %vm3313 = vweird.f32 %v3307
    %vm3314 = vmor %vm3312, %vm3313
    %v3315 = vsel %vm3314, %v3307, %v3311
    %v3316 = vand.u32 2147483647, %v3306
    %vm3317 = vcmp.eq.f32.partialorder %v3316, 8.507059e+37
    %v3318 = vand.u32 %v3306, 2147483648
    %v3319 = vor.u32 1.1754944e-38, %v3318
    %v3320 = vsel %vm3317, %v3319, %v3315
    %v3321 = vmul.f32 1.0, %v3320
    %v3322 = vmul.f32 %v3302, %v3281
    %v3323 = vadd.f32 %v3255, %v3322
    %v3324 = vtanh.pop %v3323
    %v3325 = vsub.f32 1.0, %v3321
    %v3326 = vmul.f32 %v3325, %v3324
    %v3327 = vmul.f32 %v3321, %v3022
    %v3328 = vadd.f32 %v3326, %v3327
    %3329 = vst [vmem:[#allocation12 + $0x7] sm:$0x1] %v3177
    %3330 = vst [vmem:[#allocation2] sm:$0x1] %v3328
    %v3331 = vld [vmem:[#allocation12] sm:$0xff]
    %v3332 = vld [vmem:[#allocation2] sm:$0xff]
    %v3333 = vadd.f32 %v3331, %v3332
    %3334 = vst [vmem:[#allocation12] sm:$0xff] %v3333
    %3335 = vst [vmem:[#allocation13] sm:$0x1] %v3177
    // Predicated region
    $region42: #{tpu_custom_call.1} parent=1 // pred_check
      _
    $region43: #{tpu_custom_call.1} parent=1 // pred_check_branch
      %3337 = sbr.rel (0) target = $region45
    $region44: #{tpu_custom_call.1} parent=1 // pred_region
      %3339 = vsyncadd [#allocation5], 0
      %s3341 = sshll.u32 [#allocation12], 4
      %s3342 = int_to_ptr.vmem [resolvable:$true] %s3341
      %s3343 = sshll.u32 %s5, 4
      %s3344 = int_to_ptr.hbm [resolvable:$true] %s3343
      %3346 = dma.vmem_to_hbm [thread:$0]  %s3342, 128, %s3344, [#allocation5]
    $region45: #{tpu_custom_call.1} parent=1 // pred_fallthru
      _
    // Predicated region
    $region46: #{tpu_custom_call.1} parent=1 // pred_check
      _
    $region47: #{tpu_custom_call.1} parent=1 // pred_check_branch
      %3348 = sbr.rel (0) target = $region49
    $region48: #{tpu_custom_call.1} parent=1 // pred_region
      %3350 = vsyncadd [#allocation14], 0
      %s3352 = sshll.u32 [#allocation13], 4
      %s3353 = int_to_ptr.vmem [resolvable:$true] %s3352
      %s3354 = sshll.u32 %s6, 4
      %s3355 = int_to_ptr.hbm [resolvable:$true] %s3354
      %3357 = dma.vmem_to_hbm [thread:$0]  %s3353, 16, %s3355, [#allocation14]
    $region49: #{tpu_custom_call.1} parent=1 // pred_fallthru
      _
    // Predicated region
    $region50: #{tpu_custom_call.1} parent=1 // pred_check
      _
    $region51: #{tpu_custom_call.1} parent=1 // pred_check_branch
      %3359 = sbr.rel (0) target = $region53
    $region52: #{tpu_custom_call.1} parent=1 // pred_region
      %3361 = dma.done [#allocation5], 128
    $region53: #{tpu_custom_call.1} parent=1 // pred_fallthru
      _
    // Predicated region
    $region54: #{tpu_custom_call.1} parent=1 // pred_check
      _
    $region55: #{tpu_custom_call.1} parent=1 // pred_check_branch
      %3363 = sbr.rel (0) target = $region57
    $region56: #{tpu_custom_call.1} parent=1 // pred_region
      %3365 = dma.done [#allocation14], 16
    $region57: #{tpu_custom_call.1} parent=1 // pred_fallthru
      _
    %3366 = vsyncpa [#allocation4], 1
    %3367 = vsyncpa [#allocation7], 1
    %3368 = vsyncpa [#allocation10], 1
    %3369 = vsyncpa [#allocation5], 1
    %3370 = vsyncpa [#allocation14], 1

</llo_original>
